<compile_context>
chip_gen: v7x
topology: tpu7x:2x2x1
jax: 0.10.0
libtpu: 0.0.40
codegen_flags: <defaults>
</compile_context>

<pallas_src>
import jax
import jax.numpy as jnp
from jax import lax
from jax.experimental import pallas as pl
from jax.experimental.pallas import tpu as pltpu


# Scoped-VMEM limit that is safe on every generation at these sizes.
# TODO(synk): when H/F/V or row tiles scale up, raise per-generation
# (~100 MiB on v5e/v6e, <=48 MiB on v7x) and single-buffer the resident
# weight BlockSpecs (pipeline_mode=pl.Buffered(1)).
_VMEM_LIMIT = 32 * 1024 * 1024


def _row_tile(n):
    """Largest 128-multiple row tile dividing n (capped at 512), preferring
    >= 2 grid steps so the "parallel" row axis has work for both v7x TCs."""
    for t in (512, 384, 256, 128):
        if n % t == 0 and n // t >= 2:
            return t
    for t in (512, 384, 256, 128):
        if n % t == 0:
            return t
    raise ValueError("token count must be a multiple of 128")


# ---------------------------------------------------------------------------
# Pallas kernels
# ---------------------------------------------------------------------------

def _fused_ffn_kernel(x_ref,
                      w1a_ref, b1a_ref, w2a_ref, b2a_ref,
                      w1b_ref, b1b_ref, w2b_ref, b2b_ref,
                      w1c_ref, b1c_ref, w2c_ref, b2c_ref,
                      o_ref):
    """head -> body1 -> body2 FFN experts fused, one row tile per grid step.

    Each expert: (x @ W1 + b1) -> GELU -> (@ W2 + b2).
    Activations travel bf16 between matmuls; the MXU accumulates in f32 and
    the GELU runs on the f32 accumulator output (no bf16 VPU/EUP dependence).
    """
    h = x_ref[...]                                            # [TR, H] bf16
    experts = ((w1a_ref, b1a_ref, w2a_ref, b2a_ref),
               (w1b_ref, b1b_ref, w2b_ref, b2b_ref),
               (w1c_ref, b1c_ref, w2c_ref, b2c_ref))
    for w1_ref, b1_ref, w2_ref, b2_ref in experts:            # unrolled at trace time
        z = jnp.dot(h, w1_ref[...],
                    preferred_element_type=jnp.float32) + b1_ref[...]
        # TODO(synk): PyTorch nn.GELU default is exact erf; tanh approximation
        # (EUP path) used here differs slightly.
        z = jax.nn.gelu(z, approximate=True)                  # f32 elementwise
        h = (jnp.dot(z.astype(jnp.bfloat16), w2_ref[...],
                     preferred_element_type=jnp.float32)
             + b2_ref[...]).astype(jnp.bfloat16)
    o_ref[...] = h                                            # bf16 writeback


def _tail_nll_kernel(h_ref, labels_ref, wv_ref, bv_ref, nll_ref):
    """Tail expert: one-pass softmax cross-entropy per row tile.

    wv/bv are resident (block (0,0)); the full [TR, V] logits tile is computed
    in one MXU shot and per-token NLL is written out (no running max/sum
    machinery, no resident scalar accumulator).
    """
    h = h_ref[...]                                            # [TR, H] bf16
    logits = jnp.dot(h, wv_ref[...],
                     preferred_element_type=jnp.float32) + bv_ref[...]  # [TR, V]

    m = jnp.max(logits, axis=-1, keepdims=True)               # [TR, 1]
    lse = m + jnp.log(jnp.sum(jnp.exp(logits - m), axis=-1, keepdims=True))

    # TODO(synk): labels are assumed in [0, V); out-of-range labels are not
    # masked (matches the synthesized module where labels == input_ids).
    col = lax.broadcasted_iota(jnp.int32, logits.shape, 1)
    labels = labels_ref[...]                                  # [TR, 1] int32
    lbl_logit = jnp.sum(jnp.where(col == labels, logits, 0.0),
                        axis=-1, keepdims=True)               # [TR, 1]

    nll_ref[...] = lse - lbl_logit                            # per-token NLL


# ---------------------------------------------------------------------------
# Wrappers (pallas_call plumbing)
# ---------------------------------------------------------------------------

def fused_experts(x, head, body1, body2):
    """head/body1/body2 FFN experts in one row-tiled pallas_call.

    x: [N, H] bf16 -> [N, H] bf16.  Weights (bf16 matrices, f32 biases) are
    pinned to block (0, 0) so they are DMA'd once and stay resident while
    activations stream.
    """
    n, hdim = x.shape
    tr = _row_tile(n)
    grid = (n // tr,)

    def resident(shape):
        # TODO(synk): add pipeline_mode=pl.Buffered(1) when VMEM gets tight;
        # constant (0,0) index map means double-buffering is pure overhead.
        return pl.BlockSpec(shape, lambda r: (0, 0))

    weight_args, weight_specs = [], []
    for p in (head, body1, body2):
        for name in ("w1", "b1", "w2", "b2"):
            arr = p[name]
            weight_args.append(arr)
            weight_specs.append(resident(arr.shape))

    return pl.pallas_call(
        _fused_ffn_kernel,
        out_shape=jax.ShapeDtypeStruct((n, hdim), jnp.bfloat16),
        grid=grid,
        in_specs=[pl.BlockSpec((tr, hdim), lambda r: (r, 0))] + weight_specs,
        out_specs=pl.BlockSpec((tr, hdim), lambda r: (r, 0)),
        compiler_params=pltpu.CompilerParams(
            dimension_semantics=("parallel",),      # v7x: shard rows over 2 TCs
            vmem_limit_bytes=_VMEM_LIMIT),
    )(x, *weight_args)


def tail_per_token_nll(hidden, labels, tail):
    """Tail expert: per-token NLL, shape (N, 1) f32 (mean taken in wrapper)."""
    n, hdim = hidden.shape
    vdim = tail["wv"].shape[1]
    tr = _row_tile(n)
    grid = (n // tr,)

    # Full-vocab one-pass softmax; wv (H x V bf16) is tiny and stays resident.
    # TODO(synk): reintroduce a vocab-tiled streaming-logsumexp path when
    # H*V*2 bytes no longer fits the per-generation VMEM budget.
    # TODO(synk): labels block is lane-sparse (last dim 1); pack lane-dense if
    # the tail ever becomes step-bound.
    return pl.pallas_call(
        _tail_nll_kernel,
        out_shape=jax.ShapeDtypeStruct((n, 1), jnp.float32),
        grid=grid,
        in_specs=[
            pl.BlockSpec((tr, hdim), lambda r: (r, 0)),    # hidden (bf16)
            pl.BlockSpec((tr, 1), lambda r: (r, 0)),       # labels
            pl.BlockSpec((hdim, vdim), lambda r: (0, 0)),  # wv resident
            pl.BlockSpec((1, vdim), lambda r: (0, 0)),     # bv resident
        ],
        out_specs=pl.BlockSpec((tr, 1), lambda r: (r, 0)),
        compiler_params=pltpu.CompilerParams(
            dimension_semantics=("parallel",),      # v7x: shard rows over 2 TCs
            vmem_limit_bytes=_VMEM_LIMIT),
    )(hidden, labels, tail["wv"], tail["bv"])


# ---------------------------------------------------------------------------
# Parameter construction (deterministic, in-script)
# ---------------------------------------------------------------------------

def make_params(key, vocab, hidden, ffn):
    ks = jax.random.split(key, 16)

    def lin(k, fan_in, shape, dtype=jnp.bfloat16):
        w = jax.random.normal(k, shape, jnp.float32) / jnp.sqrt(fan_in)
        return w.astype(dtype)

    def expert(k0, k1):
        return {
            "w1": lin(k0, hidden, (hidden, ffn)),
            "b1": jnp.zeros((1, ffn), jnp.float32),
            "w2": lin(k1, ffn, (ffn, hidden)),
            "b2": jnp.zeros((1, hidden), jnp.float32),
        }

    return {
        "dummy": jax.random.normal(ks[0], (1, 1), jnp.float32),  # unused in fwd
        "embed": lin(ks[1], hidden, (vocab, hidden), jnp.float32),
        "head": expert(ks[2], ks[3]),
        "body1": expert(ks[4], ks[5]),
        "body2": expert(ks[6], ks[7]),
        "tail": {
            "wv": lin(ks[8], hidden, (hidden, vocab)),
            "bv": jnp.zeros((1, vocab), jnp.float32),
        },
    }


# ---------------------------------------------------------------------------
# TrainerModel.forward equivalent
# ---------------------------------------------------------------------------

def trainer_model_forward(params, input_ids):
    """input_ids: [B, S] int32  ->  (scalar loss, None)."""
    b, s = input_ids.shape
    n = b * s
    flat_ids = input_ids.reshape(n)

    # head expert: token embedding (glue gather), stored bf16 for the FFN chain.
    hidden = jnp.take(params["embed"], flat_ids, axis=0).astype(jnp.bfloat16)

    # head/body1/body2 FFN experts fused into a single row-tiled Pallas call.
    hidden = fused_experts(hidden, params["head"],
                           params["body1"], params["body2"])        # [N, H] bf16

    # tail expert: per-token NLL from the kernel; mean taken here in f32.
    labels = flat_ids.reshape(n, 1).astype(jnp.int32)
    nll = tail_per_token_nll(hidden, labels, params["tail"])        # (N, 1) f32
    loss = jnp.mean(nll)                                            # == .mean()
    return loss, None


# ---------------------------------------------------------------------------

if __name__ == "__main__":
    B, S = 2, 256              # N = B*S = 512 token rows -> row tile 256, 2 steps
    H, F, V = 128, 256, 256    # lane-dense, 128-aligned dims

    key = jax.random.PRNGKey(0)
    k_params, k_ids = jax.random.split(key)

    params = make_params(k_params, vocab=V, hidden=H, ffn=F)
    input_ids = jax.random.randint(k_ids, (B, S), 0, V, dtype=jnp.int32)

    loss, aux = jax.jit(trainer_model_forward)(params, input_ids)
    loss = jax.block_until_ready(loss)

    assert aux is None
    assert loss.shape == () and bool(jnp.isfinite(loss))
    print("KERNEL_OK")
</pallas_src>

<mosaic_0001>
module attributes {stable_mosaic.version = 11 : i64} {
  func.func @_fused_ffn_kernel(%arg0: i32, %arg1: memref<256x128xbf16, #tpu.memory_space<vmem>>, %arg2: memref<128x256xbf16, #tpu.memory_space<vmem>>, %arg3: memref<1x256xf32, #tpu.memory_space<vmem>>, %arg4: memref<256x128xbf16, #tpu.memory_space<vmem>>, %arg5: memref<1x128xf32, #tpu.memory_space<vmem>>, %arg6: memref<128x256xbf16, #tpu.memory_space<vmem>>, %arg7: memref<1x256xf32, #tpu.memory_space<vmem>>, %arg8: memref<256x128xbf16, #tpu.memory_space<vmem>>, %arg9: memref<1x128xf32, #tpu.memory_space<vmem>>, %arg10: memref<128x256xbf16, #tpu.memory_space<vmem>>, %arg11: memref<1x256xf32, #tpu.memory_space<vmem>>, %arg12: memref<256x128xbf16, #tpu.memory_space<vmem>>, %arg13: memref<1x128xf32, #tpu.memory_space<vmem>>, %arg14: memref<256x128xbf16, #tpu.memory_space<vmem>>) attributes {dimension_semantics = [#tpu.dimension_semantics<parallel>], iteration_bounds = array<i64: 2>, scalar_prefetch = 0 : i64, scratch_operands = 0 : i64, tpu.core_type = #tpu.core_type<tc>, window_params = [{transform_indices = @transform_0, window_bounds = array<i64: 256, 128>}, {pipeline_mode = #tpu.pipeline_mode<synchronous>, transform_indices = @transform_1, window_bounds = array<i64: 128, 256>}, {pipeline_mode = #tpu.pipeline_mode<synchronous>, transform_indices = @transform_2, window_bounds = array<i64: 1, 256>}, {pipeline_mode = #tpu.pipeline_mode<synchronous>, transform_indices = @transform_3, window_bounds = array<i64: 256, 128>}, {pipeline_mode = #tpu.pipeline_mode<synchronous>, transform_indices = @transform_4, window_bounds = array<i64: 1, 128>}, {pipeline_mode = #tpu.pipeline_mode<synchronous>, transform_indices = @transform_5, window_bounds = array<i64: 128, 256>}, {pipeline_mode = #tpu.pipeline_mode<synchronous>, transform_indices = @transform_6, window_bounds = array<i64: 1, 256>}, {pipeline_mode = #tpu.pipeline_mode<synchronous>, transform_indices = @transform_7, window_bounds = array<i64: 256, 128>}, {pipeline_mode = #tpu.pipeline_mode<synchronous>, transform_indices = @transform_8, window_bounds = array<i64: 1, 128>}, {pipeline_mode = #tpu.pipeline_mode<synchronous>, transform_indices = @transform_9, window_bounds = array<i64: 128, 256>}, {pipeline_mode = #tpu.pipeline_mode<synchronous>, transform_indices = @transform_10, window_bounds = array<i64: 1, 256>}, {pipeline_mode = #tpu.pipeline_mode<synchronous>, transform_indices = @transform_11, window_bounds = array<i64: 256, 128>}, {pipeline_mode = #tpu.pipeline_mode<synchronous>, transform_indices = @transform_12, window_bounds = array<i64: 1, 128>}, {transform_indices = @transform_13, window_bounds = array<i64: 256, 128>}]} {
    %c0 = arith.constant 0 : index
    %c0_0 = arith.constant 0 : index
    %0 = vector.load %arg1[%c0, %c0_0] : memref<256x128xbf16, #tpu.memory_space<vmem>>, vector<256x128xbf16>
    %c0_1 = arith.constant 0 : index
    %c0_2 = arith.constant 0 : index
    %1 = vector.load %arg2[%c0_1, %c0_2] : memref<128x256xbf16, #tpu.memory_space<vmem>>, vector<128x256xbf16>
    %cst = arith.constant dense<0.000000e+00> : vector<256x256xf32>
    %2 = tpu.matmul %0, %1, %cst {dimension_numbers = #tpu.dot_dimension_numbers<[1], [0], [0], [1], [0, 0, 1, 1], [], []>} : vector<256x128xbf16>, vector<128x256xbf16>, vector<256x256xf32> -> vector<256x256xf32>
    %c0_3 = arith.constant 0 : index
    %c0_4 = arith.constant 0 : index
    %3 = vector.load %arg3[%c0_3, %c0_4] : memref<1x256xf32, #tpu.memory_space<vmem>>, vector<1x256xf32>
    %4 = vector.broadcast %3 : vector<1x256xf32> to vector<256x256xf32>
    %5 = arith.addf %2, %4 : vector<256x256xf32>
    %6 = arith.mulf %5, %5 : vector<256x256xf32>
    %7 = arith.mulf %5, %6 : vector<256x256xf32>
    %cst_5 = arith.constant 4.471500e-02 : f32
    %8 = vector.broadcast %cst_5 : f32 to vector<256x256xf32>
    %9 = arith.mulf %8, %7 : vector<256x256xf32>
    %10 = arith.addf %5, %9 : vector<256x256xf32>
    %cst_6 = arith.constant 0.797884583 : f32
    %11 = vector.broadcast %cst_6 : f32 to vector<256x256xf32>
    %12 = arith.mulf %11, %10 : vector<256x256xf32>
    %13 = math.tanh %12 : vector<256x256xf32>
    %cst_7 = arith.constant 1.000000e+00 : f32
    %14 = vector.broadcast %cst_7 : f32 to vector<256x256xf32>
    %15 = arith.addf %14, %13 : vector<256x256xf32>
    %cst_8 = arith.constant 5.000000e-01 : f32
    %16 = vector.broadcast %cst_8 : f32 to vector<256x256xf32>
    %17 = arith.mulf %16, %15 : vector<256x256xf32>
    %18 = arith.mulf %5, %17 : vector<256x256xf32>
    %19 = arith.truncf %18 : vector<256x256xf32> to vector<256x256xbf16>
    %c0_9 = arith.constant 0 : index
    %c0_10 = arith.constant 0 : index
    %20 = vector.load %arg4[%c0_9, %c0_10] : memref<256x128xbf16, #tpu.memory_space<vmem>>, vector<256x128xbf16>
    %cst_11 = arith.constant dense<0.000000e+00> : vector<256x128xf32>
    %21 = tpu.matmul %19, %20, %cst_11 {dimension_numbers = #tpu.dot_dimension_numbers<[1], [0], [0], [1], [0, 0, 1, 1], [], []>} : vector<256x256xbf16>, vector<256x128xbf16>, vector<256x128xf32> -> vector<256x128xf32>
    %c0_12 = arith.constant 0 : index
    %c0_13 = arith.constant 0 : index
    %22 = vector.load %arg5[%c0_12, %c0_13] : memref<1x128xf32, #tpu.memory_space<vmem>>, vector<1x128xf32>
    %23 = vector.broadcast %22 : vector<1x128xf32> to vector<256x128xf32>
    %24 = arith.addf %21, %23 : vector<256x128xf32>
    %25 = arith.truncf %24 : vector<256x128xf32> to vector<256x128xbf16>
    %c0_14 = arith.constant 0 : index
    %c0_15 = arith.constant 0 : index
    %26 = vector.load %arg6[%c0_14, %c0_15] : memref<128x256xbf16, #tpu.memory_space<vmem>>, vector<128x256xbf16>
    %cst_16 = arith.constant dense<0.000000e+00> : vector<256x256xf32>
    %27 = tpu.matmul %25, %26, %cst_16 {dimension_numbers = #tpu.dot_dimension_numbers<[1], [0], [0], [1], [0, 0, 1, 1], [], []>} : vector<256x128xbf16>, vector<128x256xbf16>, vector<256x256xf32> -> vector<256x256xf32>
    %c0_17 = arith.constant 0 : index
    %c0_18 = arith.constant 0 : index
    %28 = vector.load %arg7[%c0_17, %c0_18] : memref<1x256xf32, #tpu.memory_space<vmem>>, vector<1x256xf32>
    %29 = vector.broadcast %28 : vector<1x256xf32> to vector<256x256xf32>
    %30 = arith.addf %27, %29 : vector<256x256xf32>
    %31 = arith.mulf %30, %30 : vector<256x256xf32>
    %32 = arith.mulf %30, %31 : vector<256x256xf32>
    %cst_19 = arith.constant 4.471500e-02 : f32
    %33 = vector.broadcast %cst_19 : f32 to vector<256x256xf32>
    %34 = arith.mulf %33, %32 : vector<256x256xf32>
    %35 = arith.addf %30, %34 : vector<256x256xf32>
    %cst_20 = arith.constant 0.797884583 : f32
    %36 = vector.broadcast %cst_20 : f32 to vector<256x256xf32>
    %37 = arith.mulf %36, %35 : vector<256x256xf32>
    %38 = math.tanh %37 : vector<256x256xf32>
    %cst_21 = arith.constant 1.000000e+00 : f32
    %39 = vector.broadcast %cst_21 : f32 to vector<256x256xf32>
    %40 = arith.addf %39, %38 : vector<256x256xf32>
    %cst_22 = arith.constant 5.000000e-01 : f32
    %41 = vector.broadcast %cst_22 : f32 to vector<256x256xf32>
    %42 = arith.mulf %41, %40 : vector<256x256xf32>
    %43 = arith.mulf %30, %42 : vector<256x256xf32>
    %44 = arith.truncf %43 : vector<256x256xf32> to vector<256x256xbf16>
    %c0_23 = arith.constant 0 : index
    %c0_24 = arith.constant 0 : index
    %45 = vector.load %arg8[%c0_23, %c0_24] : memref<256x128xbf16, #tpu.memory_space<vmem>>, vector<256x128xbf16>
    %cst_25 = arith.constant dense<0.000000e+00> : vector<256x128xf32>
    %46 = tpu.matmul %44, %45, %cst_25 {dimension_numbers = #tpu.dot_dimension_numbers<[1], [0], [0], [1], [0, 0, 1, 1], [], []>} : vector<256x256xbf16>, vector<256x128xbf16>, vector<256x128xf32> -> vector<256x128xf32>
    %c0_26 = arith.constant 0 : index
    %c0_27 = arith.constant 0 : index
    %47 = vector.load %arg9[%c0_26, %c0_27] : memref<1x128xf32, #tpu.memory_space<vmem>>, vector<1x128xf32>
    %48 = vector.broadcast %47 : vector<1x128xf32> to vector<256x128xf32>
    %49 = arith.addf %46, %48 : vector<256x128xf32>
    %50 = arith.truncf %49 : vector<256x128xf32> to vector<256x128xbf16>
    %c0_28 = arith.constant 0 : index
    %c0_29 = arith.constant 0 : index
    %51 = vector.load %arg10[%c0_28, %c0_29] : memref<128x256xbf16, #tpu.memory_space<vmem>>, vector<128x256xbf16>
    %cst_30 = arith.constant dense<0.000000e+00> : vector<256x256xf32>
    %52 = tpu.matmul %50, %51, %cst_30 {dimension_numbers = #tpu.dot_dimension_numbers<[1], [0], [0], [1], [0, 0, 1, 1], [], []>} : vector<256x128xbf16>, vector<128x256xbf16>, vector<256x256xf32> -> vector<256x256xf32>
    %c0_31 = arith.constant 0 : index
    %c0_32 = arith.constant 0 : index
    %53 = vector.load %arg11[%c0_31, %c0_32] : memref<1x256xf32, #tpu.memory_space<vmem>>, vector<1x256xf32>
    %54 = vector.broadcast %53 : vector<1x256xf32> to vector<256x256xf32>
    %55 = arith.addf %52, %54 : vector<256x256xf32>
    %56 = arith.mulf %55, %55 : vector<256x256xf32>
    %57 = arith.mulf %55, %56 : vector<256x256xf32>
    %cst_33 = arith.constant 4.471500e-02 : f32
    %58 = vector.broadcast %cst_33 : f32 to vector<256x256xf32>
    %59 = arith.mulf %58, %57 : vector<256x256xf32>
    %60 = arith.addf %55, %59 : vector<256x256xf32>
    %cst_34 = arith.constant 0.797884583 : f32
    %61 = vector.broadcast %cst_34 : f32 to vector<256x256xf32>
    %62 = arith.mulf %61, %60 : vector<256x256xf32>
    %63 = math.tanh %62 : vector<256x256xf32>
    %cst_35 = arith.constant 1.000000e+00 : f32
    %64 = vector.broadcast %cst_35 : f32 to vector<256x256xf32>
    %65 = arith.addf %64, %63 : vector<256x256xf32>
    %cst_36 = arith.constant 5.000000e-01 : f32
    %66 = vector.broadcast %cst_36 : f32 to vector<256x256xf32>
    %67 = arith.mulf %66, %65 : vector<256x256xf32>
    %68 = arith.mulf %55, %67 : vector<256x256xf32>
    %69 = arith.truncf %68 : vector<256x256xf32> to vector<256x256xbf16>
    %c0_37 = arith.constant 0 : index
    %c0_38 = arith.constant 0 : index
    %70 = vector.load %arg12[%c0_37, %c0_38] : memref<256x128xbf16, #tpu.memory_space<vmem>>, vector<256x128xbf16>
    %cst_39 = arith.constant dense<0.000000e+00> : vector<256x128xf32>
    %71 = tpu.matmul %69, %70, %cst_39 {dimension_numbers = #tpu.dot_dimension_numbers<[1], [0], [0], [1], [0, 0, 1, 1], [], []>} : vector<256x256xbf16>, vector<256x128xbf16>, vector<256x128xf32> -> vector<256x128xf32>
    %c0_40 = arith.constant 0 : index
    %c0_41 = arith.constant 0 : index
    %72 = vector.load %arg13[%c0_40, %c0_41] : memref<1x128xf32, #tpu.memory_space<vmem>>, vector<1x128xf32>
    %73 = vector.broadcast %72 : vector<1x128xf32> to vector<256x128xf32>
    %74 = arith.addf %71, %73 : vector<256x128xf32>
    %75 = arith.truncf %74 : vector<256x128xf32> to vector<256x128xbf16>
    %c0_42 = arith.constant 0 : index
    %c0_43 = arith.constant 0 : index
    %76 = vector.load %arg14[%c0_42, %c0_43] : memref<256x128xbf16, #tpu.memory_space<vmem>>, vector<256x128xbf16>
    tpu.vector_store %arg14[%c0_42, %c0_43], %75 {strides = array<i32>} : memref<256x128xbf16, #tpu.memory_space<vmem>>, vector<256x128xbf16>,
    return
  }
  func.func @transform_0(%arg0: i32) -> (i32, i32) {
    %c0_i32 = arith.constant 0 : i32
    %c0_i32_0 = arith.constant 0 : i32
    return %arg0, %c0_i32 : i32, i32
  }
  func.func @transform_1(%arg0: i32) -> (i32, i32) {
    %c0_i32 = arith.constant 0 : i32
    %c0_i32_0 = arith.constant 0 : i32
    %c0_i32_1 = arith.constant 0 : i32
    return %c0_i32, %c0_i32_0 : i32, i32
  }
  func.func @transform_2(%arg0: i32) -> (i32, i32) {
    %c0_i32 = arith.constant 0 : i32
    %c0_i32_0 = arith.constant 0 : i32
    %c0_i32_1 = arith.constant 0 : i32
    return %c0_i32, %c0_i32_0 : i32, i32
  }
  func.func @transform_3(%arg0: i32) -> (i32, i32) {
    %c0_i32 = arith.constant 0 : i32
    %c0_i32_0 = arith.constant 0 : i32
    %c0_i32_1 = arith.constant 0 : i32
    return %c0_i32, %c0_i32_0 : i32, i32
  }
  func.func @transform_4(%arg0: i32) -> (i32, i32) {
    %c0_i32 = arith.constant 0 : i32
    %c0_i32_0 = arith.constant 0 : i32
    %c0_i32_1 = arith.constant 0 : i32
    return %c0_i32, %c0_i32_0 : i32, i32
  }
  func.func @transform_5(%arg0: i32) -> (i32, i32) {
    %c0_i32 = arith.constant 0 : i32
    %c0_i32_0 = arith.constant 0 : i32
    %c0_i32_1 = arith.constant 0 : i32
    return %c0_i32, %c0_i32_0 : i32, i32
  }
  func.func @transform_6(%arg0: i32) -> (i32, i32) {
    %c0_i32 = arith.constant 0 : i32
    %c0_i32_0 = arith.constant 0 : i32
    %c0_i32_1 = arith.constant 0 : i32
    return %c0_i32, %c0_i32_0 : i32, i32
  }
  func.func @transform_7(%arg0: i32) -> (i32, i32) {
    %c0_i32 = arith.constant 0 : i32
    %c0_i32_0 = arith.constant 0 : i32
    %c0_i32_1 = arith.constant 0 : i32
    return %c0_i32, %c0_i32_0 : i32, i32
  }
  func.func @transform_8(%arg0: i32) -> (i32, i32) {
    %c0_i32 = arith.constant 0 : i32
    %c0_i32_0 = arith.constant 0 : i32
    %c0_i32_1 = arith.constant 0 : i32
    return %c0_i32, %c0_i32_0 : i32, i32
  }
  func.func @transform_9(%arg0: i32) -> (i32, i32) {
    %c0_i32 = arith.constant 0 : i32
    %c0_i32_0 = arith.constant 0 : i32
    %c0_i32_1 = arith.constant 0 : i32
    return %c0_i32, %c0_i32_0 : i32, i32
  }
  func.func @transform_10(%arg0: i32) -> (i32, i32) {
    %c0_i32 = arith.constant 0 : i32
    %c0_i32_0 = arith.constant 0 : i32
    %c0_i32_1 = arith.constant 0 : i32
    return %c0_i32, %c0_i32_0 : i32, i32
  }
  func.func @transform_11(%arg0: i32) -> (i32, i32) {
    %c0_i32 = arith.constant 0 : i32
    %c0_i32_0 = arith.constant 0 : i32
    %c0_i32_1 = arith.constant 0 : i32
    return %c0_i32, %c0_i32_0 : i32, i32
  }
  func.func @transform_12(%arg0: i32) -> (i32, i32) {
    %c0_i32 = arith.constant 0 : i32
    %c0_i32_0 = arith.constant 0 : i32
    %c0_i32_1 = arith.constant 0 : i32
    return %c0_i32, %c0_i32_0 : i32, i32
  }
  func.func @transform_13(%arg0: i32) -> (i32, i32) {
    %c0_i32 = arith.constant 0 : i32
    %c0_i32_0 = arith.constant 0 : i32
    return %arg0, %c0_i32 : i32, i32
  }
}

module attributes {stable_mosaic.version = 11 : i64} {
  func.func @_tail_nll_kernel(%arg0: i32, %arg1: memref<256x128xbf16, #tpu.memory_space<vmem>>, %arg2: memref<256x1xi32, #tpu.memory_space<vmem>>, %arg3: memref<128x256xbf16, #tpu.memory_space<vmem>>, %arg4: memref<1x256xf32, #tpu.memory_space<vmem>>, %arg5: memref<256x1xf32, #tpu.memory_space<vmem>>) attributes {dimension_semantics = [#tpu.dimension_semantics<parallel>], iteration_bounds = array<i64: 2>, scalar_prefetch = 0 : i64, scratch_operands = 0 : i64, tpu.core_type = #tpu.core_type<tc>, window_params = [{transform_indices = @transform_0, window_bounds = array<i64: 256, 128>}, {transform_indices = @transform_1, window_bounds = array<i64: 256, 1>}, {pipeline_mode = #tpu.pipeline_mode<synchronous>, transform_indices = @transform_2, window_bounds = array<i64: 128, 256>}, {pipeline_mode = #tpu.pipeline_mode<synchronous>, transform_indices = @transform_3, window_bounds = array<i64: 1, 256>}, {transform_indices = @transform_4, window_bounds = array<i64: 256, 1>}]} {
    %c0 = arith.constant 0 : index
    %c0_0 = arith.constant 0 : index
    %0 = vector.load %arg1[%c0, %c0_0] : memref<256x128xbf16, #tpu.memory_space<vmem>>, vector<256x128xbf16>
    %c0_1 = arith.constant 0 : index
    %c0_2 = arith.constant 0 : index
    %1 = vector.load %arg3[%c0_1, %c0_2] : memref<128x256xbf16, #tpu.memory_space<vmem>>, vector<128x256xbf16>
    %cst = arith.constant dense<0.000000e+00> : vector<256x256xf32>
    %2 = tpu.matmul %0, %1, %cst {dimension_numbers = #tpu.dot_dimension_numbers<[1], [0], [0], [1], [0, 0, 1, 1], [], []>} : vector<256x128xbf16>, vector<128x256xbf16>, vector<256x256xf32> -> vector<256x256xf32>
    %c0_3 = arith.constant 0 : index
    %c0_4 = arith.constant 0 : index
    %3 = vector.load %arg4[%c0_3, %c0_4] : memref<1x256xf32, #tpu.memory_space<vmem>>, vector<1x256xf32>
    %4 = vector.broadcast %3 : vector<1x256xf32> to vector<256x256xf32>
    %5 = arith.addf %2, %4 : vector<256x256xf32>
    %cst_5 = arith.constant dense<0xFF800000> : vector<256xf32>
    %6 = vector.multi_reduction <maximumf>, %5, %cst_5 [1] : vector<256x256xf32> to vector<256xf32>
    %7 = vector.shape_cast %6 : vector<256xf32> to vector<256x1xf32>
    %8 = vector.broadcast %7 : vector<256x1xf32> to vector<256x256xf32>
    %9 = arith.subf %5, %8 : vector<256x256xf32>
    %10 = math.exp %9 : vector<256x256xf32>
    %cst_6 = arith.constant dense<0.000000e+00> : vector<256xf32>
    %11 = vector.multi_reduction <add>, %10, %cst_6 [1] : vector<256x256xf32> to vector<256xf32>
    %12 = vector.shape_cast %11 : vector<256xf32> to vector<256x1xf32>
    %13 = math.log %12 : vector<256x1xf32>
    %14 = arith.addf %7, %13 : vector<256x1xf32>
    %15 = tpu.iota {dimensions = array<i32: 1>} : vector<256x256xi32>
    %c0_7 = arith.constant 0 : index
    %c0_8 = arith.constant 0 : index
    %16 = vector.load %arg2[%c0_7, %c0_8] : memref<256x1xi32, #tpu.memory_space<vmem>>, vector<256x1xi32>
    %17 = vector.broadcast %16 : vector<256x1xi32> to vector<256x256xi32>
    %18 = arith.cmpi eq, %15, %17 : vector<256x256xi32>
    %cst_9 = arith.constant 0.000000e+00 : f32
    %19 = vector.broadcast %cst_9 : f32 to vector<256x256xf32>
    %20 = arith.select %18, %5, %19 : vector<256x256xi1>, vector<256x256xf32>
    %cst_10 = arith.constant dense<0.000000e+00> : vector<256xf32>
    %21 = vector.multi_reduction <add>, %20, %cst_10 [1] : vector<256x256xf32> to vector<256xf32>
    %22 = vector.shape_cast %21 : vector<256xf32> to vector<256x1xf32>
    %23 = arith.subf %14, %22 : vector<256x1xf32>
    %c0_11 = arith.constant 0 : index
    %c0_12 = arith.constant 0 : index
    %24 = vector.load %arg5[%c0_11, %c0_12] : memref<256x1xf32, #tpu.memory_space<vmem>>, vector<256x1xf32>
    tpu.vector_store %arg5[%c0_11, %c0_12], %23 {strides = array<i32>} : memref<256x1xf32, #tpu.memory_space<vmem>>, vector<256x1xf32>,
    return
  }
  func.func @transform_0(%arg0: i32) -> (i32, i32) {
    %c0_i32 = arith.constant 0 : i32
    %c0_i32_0 = arith.constant 0 : i32
    return %arg0, %c0_i32 : i32, i32
  }
  func.func @transform_1(%arg0: i32) -> (i32, i32) {
    %c0_i32 = arith.constant 0 : i32
    %c0_i32_0 = arith.constant 0 : i32
    return %arg0, %c0_i32 : i32, i32
  }
  func.func @transform_2(%arg0: i32) -> (i32, i32) {
    %c0_i32 = arith.constant 0 : i32
    %c0_i32_0 = arith.constant 0 : i32
    %c0_i32_1 = arith.constant 0 : i32
    return %c0_i32, %c0_i32_0 : i32, i32
  }
  func.func @transform_3(%arg0: i32) -> (i32, i32) {
    %c0_i32 = arith.constant 0 : i32
    %c0_i32_0 = arith.constant 0 : i32
    %c0_i32_1 = arith.constant 0 : i32
    return %c0_i32, %c0_i32_0 : i32, i32
  }
  func.func @transform_4(%arg0: i32) -> (i32, i32) {
    %c0_i32 = arith.constant 0 : i32
    %c0_i32_0 = arith.constant 0 : i32
    return %arg0, %c0_i32 : i32, i32
  }
}

</mosaic_0001>

<llo_original>
// kernel: trainer_model_forward.3
$region0: #{trainer_model_forward.3}
  #allocation0 [shape = 'u32[]', space=smem, size = 0x4, offset = 0x4, fixed_abs, tag = 'smem constant byte address 0x4 - core index']
  #allocation1 [shape = 'u32[144,128]{1,0:T(1,128)}', space=vmem, size = 0x12000, scoped, tag = 'internal scratch']
  %s0 = inlined_call_operand.vmem [shape: bf16[512,128], index: 0, kind: input, shape index: {}]
  %s1 = inlined_call_operand.vmem [shape: s32[512,1], index: 1, kind: input, shape index: {}]
  %s2 = inlined_call_operand.vmem [shape: bf16[128,256], index: 2, kind: input, shape index: {}]
  %s3 = inlined_call_operand.vmem [shape: f32[1,256], index: 3, kind: input, shape index: {}]
  %s4 = inlined_call_operand.vmem [shape: f32[512,1], index: 4, kind: output, shape index: {}]
  %s5 = sld [smem:[#allocation0]]
  $region49: #{trainer_model_forward.3} parent=0
    _
  %s7 = ssub.s32 1, %s5
  %s8 = scalar_select 0, %s7, %s5
  loop: start=0, step=1, limit=4
  $region2: #{trainer_model_forward.3} parent=0 // loop_pre_header
    _
  $region3: #{trainer_model_forward.3} parent=0 // loop_header
    %s10 = sphi 0, %s14
    %p11 = scmp.ge.s32.totalorder %s10, 4
    %s20 = sphi 0, %s22
    %s23 = sphi 0, %s20
    %s24 = sphi 0, %s23
    %s40 = sphi 0, %s24
    %s46 = sphi 0, %s48
    %s49 = sphi 0, %s46
    %s50 = sphi 0, %s49
    %s66 = sphi 0, %s50
    %s70 = sphi 0, %s70
    %s72 = sphi 0, %s70
    %s73 = sphi 0, %s72
    %s87 = sphi 0, %s73
    %s91 = sphi 0, %s91
    %s93 = sphi 0, %s91
    %s94 = sphi 0, %s93
    %s108 = sphi 0, %s94
    %s114 = sphi 0, %s116
    %s117 = sphi 0, %s114
    %s118 = sphi 0, %s117
    %s134 = sphi 0, %s118
  $region4: #{trainer_model_forward.3} parent=0 // loop_header_branch
    %13 = sbr.rel (%p11) target = $region8
  $region5: #{trainer_model_forward.3} parent=0 // loop_body
    %s15 = ssub.s32 %s10, 1
    %s16 = ssub.s32 %s10, 2
    %s17 = sadd.s32 %s10, 1
    %s18 = ssub.s32 %s10, %s17
    %p19 = scmp.eq.s32.totalorder %s18, 0
    %s21 = sadd.s32 %s20, 1
    %s22 = scalar_select %p19, %s20, %s21
    %p25 = pneg %p19
    %p26 = scmp.eq.s32.totalorder %s10, 1
    %p27 = por %p25, %p26
    %p28 = scmp.ne.s32.totalorder %s20, %s23
    %p29 = scmp.eq.s32.totalorder %s10, 0
    %p30 = por %p28, %p29
    %p31 = scmp.ne.s32.totalorder %s20, %s23
    %p32 = scmp.eq.s32.totalorder %s15, 1
    %p33 = por %p31, %p32
    %p34 = scmp.ne.s32.totalorder %s23, %s24
    %p35 = scmp.eq.s32.totalorder %s15, 0
    %p36 = por %p34, %p35
    %p37 = scmp.ne.s32.totalorder %s23, %s24
    %p38 = scmp.eq.s32.totalorder %s16, 1
    %p39 = por %p37, %p38
    %p41 = scmp.ne.s32.totalorder %s24, %s40
    %p42 = scmp.eq.s32.totalorder %s16, 0
    %p43 = por %p41, %p42
    %s44 = ssub.s32 %s10, %s17
    %p45 = scmp.eq.s32.totalorder %s44, 0
    %s47 = sadd.s32 %s46, 1
    %s48 = scalar_select %p45, %s46, %s47
    %p51 = pneg %p45
    %p52 = scmp.eq.s32.totalorder %s10, 1
    %p53 = por %p51, %p52
    %p54 = scmp.ne.s32.totalorder %s46, %s49
    %p55 = scmp.eq.s32.totalorder %s10, 0
    %p56 = por %p54, %p55
    %p57 = scmp.ne.s32.totalorder %s46, %s49
    %p58 = scmp.eq.s32.totalorder %s15, 1
    %p59 = por %p57, %p58
    %p60 = scmp.ne.s32.totalorder %s49, %s50
    %p61 = scmp.eq.s32.totalorder %s15, 0
    %p62 = por %p60, %p61
    %p63 = scmp.ne.s32.totalorder %s49, %s50
    %p64 = scmp.eq.s32.totalorder %s16, 1
    %p65 = por %p63, %p64
    %p67 = scmp.ne.s32.totalorder %s50, %s66
    %p68 = scmp.eq.s32.totalorder %s16, 0
    %p69 = por %p67, %p68
    %s71 = sadd.s32 %s70, 1
    %p74 = scmp.eq.s32.totalorder %s10, 1
    %p75 = scmp.ne.s32.totalorder %s70, %s72
    %p76 = scmp.eq.s32.totalorder %s10, 0
    %p77 = por %p75, %p76
    %p78 = scmp.ne.s32.totalorder %s70, %s72
    %p79 = scmp.eq.s32.totalorder %s15, 1
    %p80 = por %p78, %p79
    %p81 = scmp.ne.s32.totalorder %s72, %s73
    %p82 = scmp.eq.s32.totalorder %s15, 0
    %p83 = por %p81, %p82
    %p84 = scmp.ne.s32.totalorder %s72, %s73
    %p85 = scmp.eq.s32.totalorder %s16, 1
    %p86 = por %p84, %p85
    %p88 = scmp.ne.s32.totalorder %s73, %s87
    %p89 = scmp.eq.s32.totalorder %s16, 0
    %p90 = por %p88, %p89
    %s92 = sadd.s32 %s91, 1
    %p95 = scmp.eq.s32.totalorder %s10, 1
    %p96 = scmp.ne.s32.totalorder %s91, %s93
    %p97 = scmp.eq.s32.totalorder %s10, 0
    %p98 = por %p96, %p97
    %p99 = scmp.ne.s32.totalorder %s91, %s93
    %p100 = scmp.eq.s32.totalorder %s15, 1
    %p101 = por %p99, %p100
    %p102 = scmp.ne.s32.totalorder %s93, %s94
    %p103 = scmp.eq.s32.totalorder %s15, 0
    %p104 = por %p102, %p103
    %p105 = scmp.ne.s32.totalorder %s93, %s94
    %p106 = scmp.eq.s32.totalorder %s16, 1
    %p107 = por %p105, %p106
    %p109 = scmp.ne.s32.totalorder %s94, %s108
    %p110 = scmp.eq.s32.totalorder %s16, 0
    %p111 = por %p109, %p110
    %s112 = ssub.s32 %s10, %s17
    %p113 = scmp.eq.s32.totalorder %s112, 0
    %s115 = sadd.s32 %s114, 1
    %s116 = scalar_select %p113, %s114, %s115
    %p119 = pneg %p113
    %p120 = scmp.eq.s32.totalorder %s10, 1
    %p121 = por %p119, %p120
    %p122 = scmp.ne.s32.totalorder %s114, %s117
    %p123 = scmp.eq.s32.totalorder %s10, 0
    %p124 = por %p122, %p123
    %p125 = scmp.ne.s32.totalorder %s114, %s117
    %p126 = scmp.eq.s32.totalorder %s15, 1
    %p127 = por %p125, %p126
    %p128 = scmp.ne.s32.totalorder %s117, %s118
    %p129 = scmp.eq.s32.totalorder %s15, 0
    %p130 = por %p128, %p129
    %p131 = scmp.ne.s32.totalorder %s117, %s118
    %p132 = scmp.eq.s32.totalorder %s16, 1
    %p133 = por %p131, %p132
    %p135 = scmp.ne.s32.totalorder %s118, %s134
    %p136 = scmp.eq.s32.totalorder %s16, 0
    %p137 = por %p135, %p136
    %p138 = scmp.le.s32.totalorder 1, %s10
    %p139 = scmp.lt.s32.totalorder %s10, 3
    %p140 = pnand %p138, %p139
    %p141 = pneg %p140
    // Predicated region
    $region9: #{trainer_model_forward.3} parent=5 // pred_check
      _
    $region10: #{trainer_model_forward.3} parent=5 // pred_check_branch
      %143 = sbr.rel (%p140) target = $region12
    $region11: #{trainer_model_forward.3} parent=5 // pred_region
      %s144 = ssub.s32 %s10, 1
      // Predicated region
      $region13: #{trainer_model_forward.3} parent=11 // pred_check
        %p145 = pneg %p83
      $region14: #{trainer_model_forward.3} parent=11 // pred_check_branch
        %147 = sbr.rel (%p145) target = $region16
      $region15: #{trainer_model_forward.3} parent=11 // pred_region
        _
      $region16: #{trainer_model_forward.3} parent=11 // pred_fallthru
        _
      // Predicated region
      $region17: #{trainer_model_forward.3} parent=11 // pred_check
        %p148 = pneg %p104
      $region18: #{trainer_model_forward.3} parent=11 // pred_check_branch
        %150 = sbr.rel (%p148) target = $region20
      $region19: #{trainer_model_forward.3} parent=11 // pred_region
        _
      $region20: #{trainer_model_forward.3} parent=11 // pred_fallthru
        _
    $region12: #{trainer_model_forward.3} parent=5 // pred_fallthru
      _
    %p151 = scmp.lt.s32.totalorder %s10, 2
    // Predicated region
    $region21: #{trainer_model_forward.3} parent=5 // pred_check
      %p152 = pneg %p151
    $region22: #{trainer_model_forward.3} parent=5 // pred_check_branch
      %154 = sbr.rel (%p152) target = $region24
    $region23: #{trainer_model_forward.3} parent=5 // pred_region
      // Predicated region
      $region25: #{trainer_model_forward.3} parent=23 // pred_check
        %p155 = pneg %p30
      $region26: #{trainer_model_forward.3} parent=23 // pred_check_branch
        %157 = sbr.rel (%p155) target = $region28
      $region27: #{trainer_model_forward.3} parent=23 // pred_region
        %s158 = smul.u32 32, %s10
        %p159 = scmp.lt.s32.totalorder %s158, 63
        %s160 = scalar_select %p159, %s158, 63
        %s161 = smul.addr %s160, 4
        %s162 = scalar_lea.vmem %s0, %s161
        %s163 = smul.u32 32, %s10
      $region28: #{trainer_model_forward.3} parent=23 // pred_fallthru
        _
      // Predicated region
      $region29: #{trainer_model_forward.3} parent=23 // pred_check
        %p164 = pneg %p56
      $region30: #{trainer_model_forward.3} parent=23 // pred_check_branch
        %166 = sbr.rel (%p164) target = $region32
      $region31: #{trainer_model_forward.3} parent=23 // pred_region
        %s167 = smul.u32 32, %s10
        %p168 = scmp.lt.s32.totalorder %s167, 63
        %s169 = scalar_select %p168, %s167, 63
        %s170 = smul.addr %s169, 8
        %s171 = scalar_lea.vmem %s1, %s170
        %s172 = smul.u32 32, %s10
      $region32: #{trainer_model_forward.3} parent=23 // pred_fallthru
        _
    $region24: #{trainer_model_forward.3} parent=5 // pred_fallthru
      _
    %p173 = scmp.le.s32.totalorder 1, %s10
    %p174 = scmp.lt.s32.totalorder %s10, 3
    %p175 = pnand %p173, %p174
    %p176 = pneg %p175
    // Predicated region
    $region33: #{trainer_model_forward.3} parent=5 // pred_check
      _
    $region34: #{trainer_model_forward.3} parent=5 // pred_check_branch
      %178 = sbr.rel (%p175) target = $region36
    $region35: #{trainer_model_forward.3} parent=5 // pred_region
      %s179 = ssub.s32 %s10, 1
      %s180 = smul.u32 32, %s15
      %p181 = scmp.lt.s32.totalorder %s180, 63
      %s182 = scalar_select %p181, %s180, 63
      %s183 = smul.addr %s182, 4
      %s184 = scalar_lea.vmem %s0, %s183
      %p185 = pneg %p36
      %p186 = pneg %p33
      %s187 = smul.u32 32, %s15
      %p188 = scmp.lt.s32.totalorder %s187, 63
      %s189 = scalar_select %p188, %s187, 63
      %s190 = smul.addr %s189, 8
      %s191 = scalar_lea.vmem %s1, %s190
      %p192 = pneg %p62
      %p193 = pneg %p59
      %p194 = pneg %p83
      %p195 = pneg %p80
      %p196 = pneg %p104
      %p197 = pneg %p101
      %p198 = pneg %p130
      %p199 = pneg %p127
      %s200 = smul.u32 32, %s15
      %p201 = scmp.lt.s32.totalorder %s200, 63
      %s202 = scalar_select %p201, %s200, 63
      %s203 = smul.addr %s202, 8
      %s204 = scalar_lea.vmem %s4, %s203
      %s205 = smul.u32 32, %s15
      %p206 = scmp.lt.s32.totalorder %s205, 63
      %s207 = scalar_select %p206, %s205, 63
      %s208 = smul.addr %s207, 4
      %s209 = scalar_lea.vmem %s0, %s208
      %s210 = smul.u32 32, %s15
      %s211 = smul.u32 32, %s15
      %p212 = scmp.lt.s32.totalorder %s211, 63
      %s213 = scalar_select %p212, %s211, 63
      %s214 = smul.addr %s213, 8
      %s215 = scalar_lea.vmem %s1, %s214
      %s216 = smul.u32 32, %s15
      %s217 = smul.u32 32, %s15
      %p218 = scmp.lt.s32.totalorder %s217, 63
      %s219 = scalar_select %p218, %s217, 63
      %s220 = smul.addr %s219, 8
      %s221 = scalar_lea.vmem %s4, %s220
      %s222 = smul.u32 32, %s15
      %v224 = vld [vmem:[%s209] sm:$0xf]
      %v225 = vld [vmem:[%s209 + $0x4] sm:$0xf]
      %v226 = vld [vmem:[%s209 + $0x8] sm:$0xf]
      %v227 = vld [vmem:[%s209 + $0xc] sm:$0xf]
      %v228 = vld [vmem:[%s209 + $0x10] sm:$0xf]
      %v229 = vld [vmem:[%s209 + $0x14] sm:$0xf]
      %v230 = vld [vmem:[%s209 + $0x18] sm:$0xf]
      %v231 = vld [vmem:[%s209 + $0x1c] sm:$0xf]
      %v232 = vld [vmem:[%s209 + $0x20] sm:$0xf]
      %v233 = vld [vmem:[%s209 + $0x24] sm:$0xf]
      %v234 = vld [vmem:[%s209 + $0x28] sm:$0xf]
      %v235 = vld [vmem:[%s209 + $0x2c] sm:$0xf]
      %v236 = vld [vmem:[%s209 + $0x30] sm:$0xf]
      %v237 = vld [vmem:[%s209 + $0x34] sm:$0xf]
      %v238 = vld [vmem:[%s209 + $0x38] sm:$0xf]
      %v239 = vld [vmem:[%s209 + $0x3c] sm:$0xf]
      %v240 = vld [vmem:[%s209 + $0x40] sm:$0xf]
      %v241 = vld [vmem:[%s209 + $0x44] sm:$0xf]
      %v242 = vld [vmem:[%s209 + $0x48] sm:$0xf]
      %v243 = vld [vmem:[%s209 + $0x4c] sm:$0xf]
      %v244 = vld [vmem:[%s209 + $0x50] sm:$0xf]
      %v245 = vld [vmem:[%s209 + $0x54] sm:$0xf]
      %v246 = vld [vmem:[%s209 + $0x58] sm:$0xf]
      %v247 = vld [vmem:[%s209 + $0x5c] sm:$0xf]
      %v248 = vld [vmem:[%s209 + $0x60] sm:$0xf]
      %v249 = vld [vmem:[%s209 + $0x64] sm:$0xf]
      %v250 = vld [vmem:[%s209 + $0x68] sm:$0xf]
      %v251 = vld [vmem:[%s209 + $0x6c] sm:$0xf]
      %v252 = vld [vmem:[%s209 + $0x70] sm:$0xf]
      %v253 = vld [vmem:[%s209 + $0x74] sm:$0xf]
      %v254 = vld [vmem:[%s209 + $0x78] sm:$0xf]
      %v255 = vld [vmem:[%s209 + $0x7c] sm:$0xf]
      %v256 = vld [vmem:[%s2] sm:$0xff]
      %v257 = vld [vmem:[%s2 + $0x8] sm:$0xff]
      %v258 = vld [vmem:[%s2 + $0x10] sm:$0xff]
      %v259 = vld [vmem:[%s2 + $0x18] sm:$0xff]
      %v260 = vld [vmem:[%s2 + $0x20] sm:$0xff]
      %v261 = vld [vmem:[%s2 + $0x28] sm:$0xff]
      %v262 = vld [vmem:[%s2 + $0x30] sm:$0xff]
      %v263 = vld [vmem:[%s2 + $0x38] sm:$0xff]
      %v264 = vld [vmem:[%s2 + $0x40] sm:$0xff]
      %v265 = vld [vmem:[%s2 + $0x48] sm:$0xff]
      %v266 = vld [vmem:[%s2 + $0x50] sm:$0xff]
      %v267 = vld [vmem:[%s2 + $0x58] sm:$0xff]
      %v268 = vld [vmem:[%s2 + $0x60] sm:$0xff]
      %v269 = vld [vmem:[%s2 + $0x68] sm:$0xff]
      %v270 = vld [vmem:[%s2 + $0x70] sm:$0xff]
      %v271 = vld [vmem:[%s2 + $0x78] sm:$0xff]
      %v272 = vld [vmem:[%s3] sm:$0x3]
      %v274 = vlaneseq
      %v275 = vshrl.u32 %v274, 7
      %v276 = vsub.s32 0, %v275
      %v277 = vrot.slane %v272, %v276
      %v278 = vlaneseq
      %v279 = vshrl.u32 %v278, 7
      %v280 = vsub.s32 1, %v279
      %v281 = vrot.slane %v272, %v280
      %v316 = vunpack.c.l.b16 %v224
      %v317 = vunpack.c.l.b16 %v225
      %v318 = vunpack.c.l.b16 %v226
      %v319 = vunpack.c.l.b16 %v227
      %v320 = vunpack.c.l.b16 %v228
      %v321 = vunpack.c.l.b16 %v229
      %v322 = vunpack.c.l.b16 %v230
      %v323 = vunpack.c.l.b16 %v231
      %v324 = vunpack.c.l.b16 %v232
      %v325 = vunpack.c.l.b16 %v233
      %v326 = vunpack.c.l.b16 %v234
      %v327 = vunpack.c.l.b16 %v235
      %v328 = vunpack.c.l.b16 %v236
      %v329 = vunpack.c.l.b16 %v237
      %v330 = vunpack.c.l.b16 %v238
      %v331 = vunpack.c.l.b16 %v239
      %v332 = vunpack.c.l.b16 %v240
      %v333 = vunpack.c.l.b16 %v241
      %v334 = vunpack.c.l.b16 %v242
      %v335 = vunpack.c.l.b16 %v243
      %v336 = vunpack.c.l.b16 %v244
      %v337 = vunpack.c.l.b16 %v245
      %v338 = vunpack.c.l.b16 %v246
      %v339 = vunpack.c.l.b16 %v247
      %v340 = vunpack.c.l.b16 %v248
      %v341 = vunpack.c.l.b16 %v249
      %v342 = vunpack.c.l.b16 %v250
      %v343 = vunpack.c.l.b16 %v251
      %v344 = vunpack.c.l.b16 %v252
      %v345 = vunpack.c.l.b16 %v253
      %v346 = vunpack.c.l.b16 %v254
      %v347 = vunpack.c.l.b16 %v255
      %v348 = vpack.c.b16 %v317, %v316
      %v349 = vpack.c.b16 %v319, %v318
      %v350 = vpack.c.b16 %v321, %v320
      %v351 = vpack.c.b16 %v323, %v322
      %v352 = vpack.c.b16 %v325, %v324
      %v353 = vpack.c.b16 %v327, %v326
      %v354 = vpack.c.b16 %v329, %v328
      %v355 = vpack.c.b16 %v331, %v330
      %v356 = vpack.c.b16 %v333, %v332
      %v357 = vpack.c.b16 %v335, %v334
      %v358 = vpack.c.b16 %v337, %v336
      %v359 = vpack.c.b16 %v339, %v338
      %v360 = vpack.c.b16 %v341, %v340
      %v361 = vpack.c.b16 %v343, %v342
      %v362 = vpack.c.b16 %v345, %v344
      %v363 = vpack.c.b16 %v347, %v346
      %v396 = vunpack.c.l.b16 %v256
      %v397 = vunpack.c.h.b16 %v256
      %v398 = vunpack.c.l.b16 %v257
      %v399 = vunpack.c.h.b16 %v257
      %v400 = vunpack.c.l.b16 %v258
      %v401 = vunpack.c.h.b16 %v258
      %v402 = vunpack.c.l.b16 %v259
      %v403 = vunpack.c.h.b16 %v259
      %v404 = vunpack.c.l.b16 %v260
      %v405 = vunpack.c.h.b16 %v260
      %v406 = vunpack.c.l.b16 %v261
      %v407 = vunpack.c.h.b16 %v261
      %v408 = vunpack.c.l.b16 %v262
      %v409 = vunpack.c.h.b16 %v262
      %v410 = vunpack.c.l.b16 %v263
      %v411 = vunpack.c.h.b16 %v263
      %v412 = vunpack.c.l.b16 %v264
      %v413 = vunpack.c.h.b16 %v264
      %v414 = vunpack.c.l.b16 %v265
      %v415 = vunpack.c.h.b16 %v265
      %v416 = vunpack.c.l.b16 %v266
      %v417 = vunpack.c.h.b16 %v266
      %v418 = vunpack.c.l.b16 %v267
      %v419 = vunpack.c.h.b16 %v267
      %v420 = vunpack.c.l.b16 %v268
      %v421 = vunpack.c.h.b16 %v268
      %v422 = vunpack.c.l.b16 %v269
      %v423 = vunpack.c.h.b16 %v269
      %v424 = vunpack.c.l.b16 %v270
      %v425 = vunpack.c.h.b16 %v270
      %v426 = vunpack.c.l.b16 %v271
      %v427 = vunpack.c.h.b16 %v271
      %v428 = vpack.c.b16 %v398, %v396
      %v429 = vpack.c.b16 %v399, %v397
      %v430 = vpack.c.b16 %v402, %v400
      %v431 = vpack.c.b16 %v403, %v401
      %v432 = vpack.c.b16 %v406, %v404
      %v433 = vpack.c.b16 %v407, %v405
      %v434 = vpack.c.b16 %v410, %v408
      %v435 = vpack.c.b16 %v411, %v409
      %v436 = vpack.c.b16 %v414, %v412
      %v437 = vpack.c.b16 %v415, %v413
      %v438 = vpack.c.b16 %v418, %v416
      %v439 = vpack.c.b16 %v419, %v417
      %v440 = vpack.c.b16 %v422, %v420
      %v441 = vpack.c.b16 %v423, %v421
      %v442 = vpack.c.b16 %v426, %v424
      %v443 = vpack.c.b16 %v427, %v425
      %460 = vmatprep.subr.bf16.mxu0 %v429
      %461 = vmatpush1.bf16.msra.mxu0 %v428
      %462 = vmatprep.subr.bf16.mxu0 %v431
      %463 = vmatpush1.bf16.msra.mxu0 %v430
      %464 = vmatprep.subr.bf16.mxu0 %v433
      %465 = vmatpush1.bf16.msra.mxu0 %v432
      %466 = vmatprep.subr.bf16.mxu0 %v435
      %467 = vmatpush1.bf16.msra.mxu0 %v434
      %468 = vmatprep.subr.bf16.mxu0 %v437
      %469 = vmatpush1.bf16.msra.mxu0 %v436
      %470 = vmatprep.subr.bf16.mxu0 %v439
      %471 = vmatpush1.bf16.msra.mxu0 %v438
      %472 = vmatprep.subr.bf16.mxu0 %v441
      %473 = vmatpush1.bf16.msra.mxu0 %v440
      %474 = vmatprep.subr.bf16.mxu0 %v443
      %475 = vmatpush1.bf16.msra.mxu0 %v442
      %476 = vmatprep.subr.bf16.mxu0 0
      %477 = vmatpush1.bf16.msra.mxu0 0
      %478 = vmatprep.subr.bf16.mxu0 0
      %479 = vmatpush1.bf16.msra.mxu0 0
      %480 = vmatprep.subr.bf16.mxu0 0
      %481 = vmatpush1.bf16.msra.mxu0 0
      %482 = vmatprep.subr.bf16.mxu0 0
      %483 = vmatpush1.bf16.msra.mxu0 0
      %484 = vmatprep.subr.bf16.mxu0 0
      %485 = vmatpush1.bf16.msra.mxu0 0
      %486 = vmatprep.subr.bf16.mxu0 0
      %487 = vmatpush1.bf16.msra.mxu0 0
      %488 = vmatprep.subr.bf16.mxu0 0
      %489 = vmatpush1.bf16.msra.mxu0 0
      %490 = vmatprep.subr.bf16.mxu0 0
      %491 = vmatpush1.bf16.msra.mxu0 0
      %492 = vmatprep.mubr.bf16.mxu0 0
      %493 = vmatmul.mubr.bf16.gmra.mrb[0].mxu0 %v348
      %v494 = vpop.f32.mrb[0].mxu0
      %v495 = vadd.f32 %v277, %v494
      %v496 = vpop.f32.mrb[0].mxu0
      %v497 = vadd.f32 %v281, %v496
      %v498 = vpop.f32.mrb[0].mxu0
      %v499 = vadd.f32 %v277, %v498
      %v500 = vpop.f32.mrb[0].mxu0
      %v501 = vadd.f32 %v281, %v500
      %502 = vmatprep.mubr.bf16.mxu0 0
      %503 = vmatmul.mubr.bf16.gmra.mrb[0].mxu0 %v349
      %v504 = vpop.f32.mrb[0].mxu0
      %v505 = vadd.f32 %v277, %v504
      %v506 = vpop.f32.mrb[0].mxu0
      %v507 = vadd.f32 %v281, %v506
      %v508 = vpop.f32.mrb[0].mxu0
      %v509 = vadd.f32 %v277, %v508
      %v510 = vpop.f32.mrb[0].mxu0
      %v511 = vadd.f32 %v281, %v510
      %512 = vmatprep.mubr.bf16.mxu0 0
      %513 = vmatmul.mubr.bf16.gmra.mrb[0].mxu0 %v350
      %v514 = vpop.f32.mrb[0].mxu0
      %v515 = vadd.f32 %v277, %v514
      %v516 = vpop.f32.mrb[0].mxu0
      %v517 = vadd.f32 %v281, %v516
      %v518 = vpop.f32.mrb[0].mxu0
      %v519 = vadd.f32 %v277, %v518
      %v520 = vpop.f32.mrb[0].mxu0
      %v521 = vadd.f32 %v281, %v520
      %522 = vmatprep.mubr.bf16.mxu0 0
      %523 = vmatmul.mubr.bf16.gmra.mrb[0].mxu0 %v351
      %v524 = vpop.f32.mrb[0].mxu0
      %v525 = vadd.f32 %v277, %v524
      %v526 = vpop.f32.mrb[0].mxu0
      %v527 = vadd.f32 %v281, %v526
      %v528 = vpop.f32.mrb[0].mxu0
      %v529 = vadd.f32 %v277, %v528
      %v530 = vpop.f32.mrb[0].mxu0
      %v531 = vadd.f32 %v281, %v530
      %532 = vmatprep.mubr.bf16.mxu0 0
      %533 = vmatmul.mubr.bf16.gmra.mrb[0].mxu0 %v352
      %v534 = vpop.f32.mrb[0].mxu0
      %v535 = vadd.f32 %v277, %v534
      %v536 = vpop.f32.mrb[0].mxu0
      %v537 = vadd.f32 %v281, %v536
      %v538 = vpop.f32.mrb[0].mxu0
      %v539 = vadd.f32 %v277, %v538
      %v540 = vpop.f32.mrb[0].mxu0
      %v541 = vadd.f32 %v281, %v540
      %542 = vmatprep.mubr.bf16.mxu0 0
      %543 = vmatmul.mubr.bf16.gmra.mrb[0].mxu0 %v353
      %v544 = vpop.f32.mrb[0].mxu0
      %v545 = vadd.f32 %v277, %v544
      %v546 = vpop.f32.mrb[0].mxu0
      %v547 = vadd.f32 %v281, %v546
      %v548 = vpop.f32.mrb[0].mxu0
      %v549 = vadd.f32 %v277, %v548
      %v550 = vpop.f32.mrb[0].mxu0
      %v551 = vadd.f32 %v281, %v550
      %552 = vmatprep.mubr.bf16.mxu0 0
      %553 = vmatmul.mubr.bf16.gmra.mrb[0].mxu0 %v354
      %v554 = vpop.f32.mrb[0].mxu0
      %v555 = vadd.f32 %v277, %v554
      %v556 = vpop.f32.mrb[0].mxu0
      %v557 = vadd.f32 %v281, %v556
      %v558 = vpop.f32.mrb[0].mxu0
      %v559 = vadd.f32 %v277, %v558
      %v560 = vpop.f32.mrb[0].mxu0
      %v561 = vadd.f32 %v281, %v560
      %562 = vmatprep.mubr.bf16.mxu0 0
      %563 = vmatmul.mubr.bf16.gmra.mrb[0].mxu0 %v355
      %v564 = vpop.f32.mrb[0].mxu0
      %v565 = vadd.f32 %v277, %v564
      %v566 = vpop.f32.mrb[0].mxu0
      %v567 = vadd.f32 %v281, %v566
      %v568 = vpop.f32.mrb[0].mxu0
      %v569 = vadd.f32 %v277, %v568
      %v570 = vpop.f32.mrb[0].mxu0
      %v571 = vadd.f32 %v281, %v570
      %572 = vmatprep.mubr.bf16.mxu0 0
      %573 = vmatmul.mubr.bf16.gmra.mrb[0].mxu0 %v356
      %v574 = vpop.f32.mrb[0].mxu0
      %v575 = vadd.f32 %v277, %v574
      %v576 = vpop.f32.mrb[0].mxu0
      %v577 = vadd.f32 %v281, %v576
      %v578 = vpop.f32.mrb[0].mxu0
      %v579 = vadd.f32 %v277, %v578
      %v580 = vpop.f32.mrb[0].mxu0
      %v581 = vadd.f32 %v281, %v580
      %582 = vmatprep.mubr.bf16.mxu0 0
      %583 = vmatmul.mubr.bf16.gmra.mrb[0].mxu0 %v357
      %v584 = vpop.f32.mrb[0].mxu0
      %v585 = vadd.f32 %v277, %v584
      %v586 = vpop.f32.mrb[0].mxu0
      %v587 = vadd.f32 %v281, %v586
      %v588 = vpop.f32.mrb[0].mxu0
      %v589 = vadd.f32 %v277, %v588
      %v590 = vpop.f32.mrb[0].mxu0
      %v591 = vadd.f32 %v281, %v590
      %592 = vmatprep.mubr.bf16.mxu0 0
      %593 = vmatmul.mubr.bf16.gmra.mrb[0].mxu0 %v358
      %v594 = vpop.f32.mrb[0].mxu0
      %v595 = vadd.f32 %v277, %v594
      %v596 = vpop.f32.mrb[0].mxu0
      %v597 = vadd.f32 %v281, %v596
      %v598 = vpop.f32.mrb[0].mxu0
      %v599 = vadd.f32 %v277, %v598
      %v600 = vpop.f32.mrb[0].mxu0
      %v601 = vadd.f32 %v281, %v600
      %602 = vmatprep.mubr.bf16.mxu0 0
      %603 = vmatmul.mubr.bf16.gmra.mrb[0].mxu0 %v359
      %v604 = vpop.f32.mrb[0].mxu0
      %v605 = vadd.f32 %v277, %v604
      %v606 = vpop.f32.mrb[0].mxu0
      %v607 = vadd.f32 %v281, %v606
      %v608 = vpop.f32.mrb[0].mxu0
      %v609 = vadd.f32 %v277, %v608
      %v610 = vpop.f32.mrb[0].mxu0
      %v611 = vadd.f32 %v281, %v610
      %612 = vmatprep.mubr.bf16.mxu0 0
      %613 = vmatmul.mubr.bf16.gmra.mrb[0].mxu0 %v360
      %v614 = vpop.f32.mrb[0].mxu0
      %v615 = vadd.f32 %v277, %v614
      %v616 = vpop.f32.mrb[0].mxu0
      %v617 = vadd.f32 %v281, %v616
      %v618 = vpop.f32.mrb[0].mxu0
      %v619 = vadd.f32 %v277, %v618
      %v620 = vpop.f32.mrb[0].mxu0
      %v621 = vadd.f32 %v281, %v620
      %622 = vmatprep.mubr.bf16.mxu0 0
      %623 = vmatmul.mubr.bf16.gmra.mrb[0].mxu0 %v361
      %v624 = vpop.f32.mrb[0].mxu0
      %v625 = vadd.f32 %v277, %v624
      %v626 = vpop.f32.mrb[0].mxu0
      %v627 = vadd.f32 %v281, %v626
      %v628 = vpop.f32.mrb[0].mxu0
      %v629 = vadd.f32 %v277, %v628
      %v630 = vpop.f32.mrb[0].mxu0
      %v631 = vadd.f32 %v281, %v630
      %632 = vmatprep.mubr.bf16.mxu0 0
      %633 = vmatmul.mubr.bf16.gmra.mrb[0].mxu0 %v362
      %v634 = vpop.f32.mrb[0].mxu0
      %v635 = vadd.f32 %v277, %v634
      %v636 = vpop.f32.mrb[0].mxu0
      %v637 = vadd.f32 %v281, %v636
      %v638 = vpop.f32.mrb[0].mxu0
      %v639 = vadd.f32 %v277, %v638
      %v640 = vpop.f32.mrb[0].mxu0
      %v641 = vadd.f32 %v281, %v640
      %642 = vmatprep.mubr.bf16.mxu0 0
      %643 = vmatmul.mubr.bf16.gmra.mrb[0].mxu0 %v363
      %v644 = vpop.f32.mrb[0].mxu0
      %v645 = vadd.f32 %v277, %v644
      %v646 = vpop.f32.mrb[0].mxu0
      %v647 = vadd.f32 %v281, %v646
      %v648 = vpop.f32.mrb[0].mxu0
      %v649 = vadd.f32 %v277, %v648
      %v650 = vpop.f32.mrb[0].mxu0
      %v651 = vadd.f32 %v281, %v650
      %652 = vdwg.mxu0
      %v653 = vmax.f32 %v495, %v497
      %654 = vmax.xlane.f32.xlu0 %v653
      %v655 = vpop.xlane.xlu0 %654
      %v656 = vmax.f32 %v499, %v501
      %657 = vmax.xlane.f32.xlu0 %v656
      %v658 = vpop.xlane.xlu0 %657
      %v659 = vmax.f32 %v505, %v507
      %660 = vmax.xlane.f32.xlu0 %v659
      %v661 = vpop.xlane.xlu0 %660
      %v662 = vmax.f32 %v509, %v511
      %663 = vmax.xlane.f32.xlu0 %v662
      %v664 = vpop.xlane.xlu0 %663
      %v665 = vmax.f32 %v515, %v517
      %666 = vmax.xlane.f32.xlu0 %v665
      %v667 = vpop.xlane.xlu0 %666
      %v668 = vmax.f32 %v519, %v521
      %669 = vmax.xlane.f32.xlu0 %v668
      %v670 = vpop.xlane.xlu0 %669
      %v671 = vmax.f32 %v525, %v527
      %672 = vmax.xlane.f32.xlu0 %v671
      %v673 = vpop.xlane.xlu0 %672
      %v674 = vmax.f32 %v529, %v531
      %675 = vmax.xlane.f32.xlu0 %v674
      %v676 = vpop.xlane.xlu0 %675
      %v677 = vmax.f32 %v535, %v537
      %678 = vmax.xlane.f32.xlu0 %v677
      %v679 = vpop.xlane.xlu0 %678
      %v680 = vmax.f32 %v539, %v541
      %681 = vmax.xlane.f32.xlu0 %v680
      %v682 = vpop.xlane.xlu0 %681
      %v683 = vmax.f32 %v545, %v547
      %684 = vmax.xlane.f32.xlu0 %v683
      %v685 = vpop.xlane.xlu0 %684
      %v686 = vmax.f32 %v549, %v551
      %687 = vmax.xlane.f32.xlu0 %v686
      %v688 = vpop.xlane.xlu0 %687
      %v689 = vmax.f32 %v555, %v557
      %690 = vmax.xlane.f32.xlu0 %v689
      %v691 = vpop.xlane.xlu0 %690
      %v692 = vmax.f32 %v559, %v561
      %693 = vmax.xlane.f32.xlu0 %v692
      %v694 = vpop.xlane.xlu0 %693
      %v695 = vmax.f32 %v565, %v567
      %696 = vmax.xlane.f32.xlu0 %v695
      %v697 = vpop.xlane.xlu0 %696
      %v698 = vmax.f32 %v569, %v571
      %699 = vmax.xlane.f32.xlu0 %v698
      %v700 = vpop.xlane.xlu0 %699
      %v701 = vmax.f32 %v575, %v577
      %702 = vmax.xlane.f32.xlu0 %v701
      %v703 = vpop.xlane.xlu0 %702
      %v704 = vmax.f32 %v579, %v581
      %705 = vmax.xlane.f32.xlu0 %v704
      %v706 = vpop.xlane.xlu0 %705
      %v707 = vmax.f32 %v585, %v587
      %708 = vmax.xlane.f32.xlu0 %v707
      %v709 = vpop.xlane.xlu0 %708
      %v710 = vmax.f32 %v589, %v591
      %711 = vmax.xlane.f32.xlu0 %v710
      %v712 = vpop.xlane.xlu0 %711
      %v713 = vmax.f32 %v595, %v597
      %714 = vmax.xlane.f32.xlu0 %v713
      %v715 = vpop.xlane.xlu0 %714
      %v716 = vmax.f32 %v599, %v601
      %717 = vmax.xlane.f32.xlu0 %v716
      %v718 = vpop.xlane.xlu0 %717
      %v719 = vmax.f32 %v605, %v607
      %720 = vmax.xlane.f32.xlu0 %v719
      %v721 = vpop.xlane.xlu0 %720
      %v722 = vmax.f32 %v609, %v611
      %723 = vmax.xlane.f32.xlu0 %v722
      %v724 = vpop.xlane.xlu0 %723
      %v725 = vmax.f32 %v615, %v617
      %726 = vmax.xlane.f32.xlu0 %v725
      %v727 = vpop.xlane.xlu0 %726
      %v728 = vmax.f32 %v619, %v621
      %729 = vmax.xlane.f32.xlu0 %v728
      %v730 = vpop.xlane.xlu0 %729
      %v731 = vmax.f32 %v625, %v627
      %732 = vmax.xlane.f32.xlu0 %v731
      %v733 = vpop.xlane.xlu0 %732
      %v734 = vmax.f32 %v629, %v631
      %735 = vmax.xlane.f32.xlu0 %v734
      %v736 = vpop.xlane.xlu0 %735
      %v737 = vmax.f32 %v635, %v637
      %738 = vmax.xlane.f32.xlu0 %v737
      %v739 = vpop.xlane.xlu0 %738
      %v740 = vmax.f32 %v639, %v641
      %741 = vmax.xlane.f32.xlu0 %v740
      %v742 = vpop.xlane.xlu0 %741
      %v743 = vmax.f32 %v645, %v647
      %744 = vmax.xlane.f32.xlu0 %v743
      %v745 = vpop.xlane.xlu0 %744
      %v746 = vmax.f32 %v649, %v651
      %747 = vmax.xlane.f32.xlu0 %v746
      %v748 = vpop.xlane.xlu0 %747
      %v749 = vsub.f32 %v495, %v655
      %v750 = vsub.f32 %v497, %v655
      %v751 = vsub.f32 %v499, %v658
      %v752 = vsub.f32 %v501, %v658
      %v753 = vsub.f32 %v505, %v661
      %v754 = vsub.f32 %v507, %v661
      %v755 = vsub.f32 %v509, %v664
      %v756 = vsub.f32 %v511, %v664
      %v757 = vsub.f32 %v515, %v667
      %v758 = vsub.f32 %v517, %v667
      %v759 = vsub.f32 %v519, %v670
      %v760 = vsub.f32 %v521, %v670
      %v761 = vsub.f32 %v525, %v673
      %v762 = vsub.f32 %v527, %v673
      %v763 = vsub.f32 %v529, %v676
      %v764 = vsub.f32 %v531, %v676
      %v765 = vsub.f32 %v535, %v679
      %v766 = vsub.f32 %v537, %v679
      %v767 = vsub.f32 %v539, %v682
      %v768 = vsub.f32 %v541, %v682
      %v769 = vsub.f32 %v545, %v685
      %v770 = vsub.f32 %v547, %v685
      %v771 = vsub.f32 %v549, %v688
      %v772 = vsub.f32 %v551, %v688
      %v773 = vsub.f32 %v555, %v691
      %v774 = vsub.f32 %v557, %v691
      %v775 = vsub.f32 %v559, %v694
      %v776 = vsub.f32 %v561, %v694
      %v777 = vsub.f32 %v565, %v697
      %v778 = vsub.f32 %v567, %v697
      %v779 = vsub.f32 %v569, %v700
      %v780 = vsub.f32 %v571, %v700
      %v781 = vsub.f32 %v575, %v703
      %v782 = vsub.f32 %v577, %v703
      %v783 = vsub.f32 %v579, %v706
      %v784 = vsub.f32 %v581, %v706
      %v785 = vsub.f32 %v585, %v709
      %v786 = vsub.f32 %v587, %v709
      %v787 = vsub.f32 %v589, %v712
      %v788 = vsub.f32 %v591, %v712
      %v789 = vsub.f32 %v595, %v715
      %v790 = vsub.f32 %v597, %v715
      %v791 = vsub.f32 %v599, %v718
      %v792 = vsub.f32 %v601, %v718
      %v793 = vsub.f32 %v605, %v721
      %v794 = vsub.f32 %v607, %v721
      %v795 = vsub.f32 %v609, %v724
      %v796 = vsub.f32 %v611, %v724
      %v797 = vsub.f32 %v615, %v727
      %v798 = vsub.f32 %v617, %v727
      %v799 = vsub.f32 %v619, %v730
      %v800 = vsub.f32 %v621, %v730
      %v801 = vsub.f32 %v625, %v733
      %v802 = vsub.f32 %v627, %v733
      %v803 = vsub.f32 %v629, %v736
      %v804 = vsub.f32 %v631, %v736
      %v805 = vsub.f32 %v635, %v739
      %v806 = vsub.f32 %v637, %v739
      %v807 = vsub.f32 %v639, %v742
      %v808 = vsub.f32 %v641, %v742
      %v809 = vsub.f32 %v645, %v745
      %v810 = vsub.f32 %v647, %v745
      %v811 = vsub.f32 %v649, %v748
      %v812 = vsub.f32 %v651, %v748
      %v813 = vmul.f32 %v749, 1.442695
      %v814 = vpow.pop %v813
      %v815 = vmul.f32 %v750, 1.442695
      %v816 = vpow.pop %v815
      %v817 = vmul.f32 %v751, 1.442695
      %v818 = vpow.pop %v817
      %v819 = vmul.f32 %v752, 1.442695
      %v820 = vpow.pop %v819
      %v821 = vmul.f32 %v753, 1.442695
      %v822 = vpow.pop %v821
      %v823 = vmul.f32 %v754, 1.442695
      %v824 = vpow.pop %v823
      %v825 = vmul.f32 %v755, 1.442695
      %v826 = vpow.pop %v825
      %v827 = vmul.f32 %v756, 1.442695
      %v828 = vpow.pop %v827
      %v829 = vmul.f32 %v757, 1.442695
      %v830 = vpow.pop %v829
      %v831 = vmul.f32 %v758, 1.442695
      %v832 = vpow.pop %v831
      %v833 = vmul.f32 %v759, 1.442695
      %v834 = vpow.pop %v833
      %v835 = vmul.f32 %v760, 1.442695
      %v836 = vpow.pop %v835
      %v837 = vmul.f32 %v761, 1.442695
      %v838 = vpow.pop %v837
      %v839 = vmul.f32 %v762, 1.442695
      %v840 = vpow.pop %v839
      %v841 = vmul.f32 %v763, 1.442695
      %v842 = vpow.pop %v841
      %v843 = vmul.f32 %v764, 1.442695
      %v844 = vpow.pop %v843
      %v845 = vmul.f32 %v765, 1.442695
      %v846 = vpow.pop %v845
      %v847 = vmul.f32 %v766, 1.442695
      %v848 = vpow.pop %v847
      %v849 = vmul.f32 %v767, 1.442695
      %v850 = vpow.pop %v849
      %v851 = vmul.f32 %v768, 1.442695
      %v852 = vpow.pop %v851
      %v853 = vmul.f32 %v769, 1.442695
      %v854 = vpow.pop %v853
      %v855 = vmul.f32 %v770, 1.442695
      %v856 = vpow.pop %v855
      %v857 = vmul.f32 %v771, 1.442695
      %v858 = vpow.pop %v857
      %v859 = vmul.f32 %v772, 1.442695
      %v860 = vpow.pop %v859
      %v861 = vmul.f32 %v773, 1.442695
      %v862 = vpow.pop %v861
      %v863 = vmul.f32 %v774, 1.442695
      %v864 = vpow.pop %v863
      %v865 = vmul.f32 %v775, 1.442695
      %v866 = vpow.pop %v865
      %v867 = vmul.f32 %v776, 1.442695
      %v868 = vpow.pop %v867
      %v869 = vmul.f32 %v777, 1.442695
      %v870 = vpow.pop %v869
      %v871 = vmul.f32 %v778, 1.442695
      %v872 = vpow.pop %v871
      %v873 = vmul.f32 %v779, 1.442695
      %v874 = vpow.pop %v873
      %v875 = vmul.f32 %v780, 1.442695
      %v876 = vpow.pop %v875
      %v877 = vmul.f32 %v781, 1.442695
      %v878 = vpow.pop %v877
      %v879 = vmul.f32 %v782, 1.442695
      %v880 = vpow.pop %v879
      %v881 = vmul.f32 %v783, 1.442695
      %v882 = vpow.pop %v881
      %v883 = vmul.f32 %v784, 1.442695
      %v884 = vpow.pop %v883
      %v885 = vmul.f32 %v785, 1.442695
      %v886 = vpow.pop %v885
      %v887 = vmul.f32 %v786, 1.442695
      %v888 = vpow.pop %v887
      %v889 = vmul.f32 %v787, 1.442695
      %v890 = vpow.pop %v889
      %v891 = vmul.f32 %v788, 1.442695
      %v892 = vpow.pop %v891
      %v893 = vmul.f32 %v789, 1.442695
      %v894 = vpow.pop %v893
      %v895 = vmul.f32 %v790, 1.442695
      %v896 = vpow.pop %v895
      %v897 = vmul.f32 %v791, 1.442695
      %v898 = vpow.pop %v897
      %v899 = vmul.f32 %v792, 1.442695
      %v900 = vpow.pop %v899
      %v901 = vmul.f32 %v793, 1.442695
      %v902 = vpow.pop %v901
      %v903 = vmul.f32 %v794, 1.442695
      %v904 = vpow.pop %v903
      %v905 = vmul.f32 %v795, 1.442695
      %v906 = vpow.pop %v905
      %v907 = vmul.f32 %v796, 1.442695
      %v908 = vpow.pop %v907
      %v909 = vmul.f32 %v797, 1.442695
      %v910 = vpow.pop %v909
      %v911 = vmul.f32 %v798, 1.442695
      %v912 = vpow.pop %v911
      %v913 = vmul.f32 %v799, 1.442695
      %v914 = vpow.pop %v913
      %v915 = vmul.f32 %v800, 1.442695
      %v916 = vpow.pop %v915
      %v917 = vmul.f32 %v801, 1.442695
      %v918 = vpow.pop %v917
      %v919 = vmul.f32 %v802, 1.442695
      %v920 = vpow.pop %v919
      %v921 = vmul.f32 %v803, 1.442695
      %v922 = vpow.pop %v921
      %v923 = vmul.f32 %v804, 1.442695
      %v924 = vpow.pop %v923
      %v925 = vmul.f32 %v805, 1.442695
      %v926 = vpow.pop %v925
      %v927 = vmul.f32 %v806, 1.442695
      %v928 = vpow.pop %v927
      %v929 = vmul.f32 %v807, 1.442695
      %v930 = vpow.pop %v929
      %v931 = vmul.f32 %v808, 1.442695
      %v932 = vpow.pop %v931
      %v933 = vmul.f32 %v809, 1.442695
      %v934 = vpow.pop %v933
      %v935 = vmul.f32 %v810, 1.442695
      %v936 = vpow.pop %v935
      %v937 = vmul.f32 %v811, 1.442695
      %v938 = vpow.pop %v937
      %v939 = vmul.f32 %v812, 1.442695
      %v940 = vpow.pop %v939
      %v941 = vadd.f32 %v814, %v816
      %942 = vadd.xlane.f32.xlu0 %v941
      %v943 = vpop.xlane.xlu0 %942
      %v944 = vadd.f32 %v818, %v820
      %945 = vadd.xlane.f32.xlu0 %v944
      %v946 = vpop.xlane.xlu0 %945
      %v947 = vadd.f32 %v822, %v824
      %948 = vadd.xlane.f32.xlu0 %v947
      %v949 = vpop.xlane.xlu0 %948
      %v950 = vadd.f32 %v826, %v828
      %951 = vadd.xlane.f32.xlu0 %v950
      %v952 = vpop.xlane.xlu0 %951
      %v953 = vadd.f32 %v830, %v832
      %954 = vadd.xlane.f32.xlu0 %v953
      %v955 = vpop.xlane.xlu0 %954
      %v956 = vadd.f32 %v834, %v836
      %957 = vadd.xlane.f32.xlu0 %v956
      %v958 = vpop.xlane.xlu0 %957
      %v959 = vadd.f32 %v838, %v840
      %960 = vadd.xlane.f32.xlu0 %v959
      %v961 = vpop.xlane.xlu0 %960
      %v962 = vadd.f32 %v842, %v844
      %963 = vadd.xlane.f32.xlu0 %v962
      %v964 = vpop.xlane.xlu0 %963
      %v965 = vadd.f32 %v846, %v848
      %966 = vadd.xlane.f32.xlu0 %v965
      %v967 = vpop.xlane.xlu0 %966
      %v968 = vadd.f32 %v850, %v852
      %969 = vadd.xlane.f32.xlu0 %v968
      %v970 = vpop.xlane.xlu0 %969
      %v971 = vadd.f32 %v854, %v856
      %972 = vadd.xlane.f32.xlu0 %v971
      %v973 = vpop.xlane.xlu0 %972
      %v974 = vadd.f32 %v858, %v860
      %975 = vadd.xlane.f32.xlu0 %v974
      %v976 = vpop.xlane.xlu0 %975
      %v977 = vadd.f32 %v862, %v864
      %978 = vadd.xlane.f32.xlu0 %v977
      %v979 = vpop.xlane.xlu0 %978
      %v980 = vadd.f32 %v866, %v868
      %981 = vadd.xlane.f32.xlu0 %v980
      %v982 = vpop.xlane.xlu0 %981
      %v983 = vadd.f32 %v870, %v872
      %984 = vadd.xlane.f32.xlu0 %v983
      %v985 = vpop.xlane.xlu0 %984
      %v986 = vadd.f32 %v874, %v876
      %987 = vadd.xlane.f32.xlu0 %v986
      %v988 = vpop.xlane.xlu0 %987
      %v989 = vadd.f32 %v878, %v880
      %990 = vadd.xlane.f32.xlu0 %v989
      %v991 = vpop.xlane.xlu0 %990
      %v992 = vadd.f32 %v882, %v884
      %993 = vadd.xlane.f32.xlu0 %v992
      %v994 = vpop.xlane.xlu0 %993
      %v995 = vadd.f32 %v886, %v888
      %996 = vadd.xlane.f32.xlu0 %v995
      %v997 = vpop.xlane.xlu0 %996
      %v998 = vadd.f32 %v890, %v892
      %999 = vadd.xlane.f32.xlu0 %v998
      %v1000 = vpop.xlane.xlu0 %999
      %v1001 = vadd.f32 %v894, %v896
      %1002 = vadd.xlane.f32.xlu0 %v1001
      %v1003 = vpop.xlane.xlu0 %1002
      %v1004 = vadd.f32 %v898, %v900
      %1005 = vadd.xlane.f32.xlu0 %v1004
      %v1006 = vpop.xlane.xlu0 %1005
      %v1007 = vadd.f32 %v902, %v904
      %1008 = vadd.xlane.f32.xlu0 %v1007
      %v1009 = vpop.xlane.xlu0 %1008
      %v1010 = vadd.f32 %v906, %v908
      %1011 = vadd.xlane.f32.xlu0 %v1010
      %v1012 = vpop.xlane.xlu0 %1011
      %v1013 = vadd.f32 %v910, %v912
      %1014 = vadd.xlane.f32.xlu0 %v1013
      %v1015 = vpop.xlane.xlu0 %1014
      %v1016 = vadd.f32 %v914, %v916
      %1017 = vadd.xlane.f32.xlu0 %v1016
      %v1018 = vpop.xlane.xlu0 %1017
      %v1019 = vadd.f32 %v918, %v920
      %1020 = vadd.xlane.f32.xlu0 %v1019
      %v1021 = vpop.xlane.xlu0 %1020
      %v1022 = vadd.f32 %v922, %v924
      %1023 = vadd.xlane.f32.xlu0 %v1022
      %v1024 = vpop.xlane.xlu0 %1023
      %v1025 = vadd.f32 %v926, %v928
      %1026 = vadd.xlane.f32.xlu0 %v1025
      %v1027 = vpop.xlane.xlu0 %1026
      %v1028 = vadd.f32 %v930, %v932
      %1029 = vadd.xlane.f32.xlu0 %v1028
      %v1030 = vpop.xlane.xlu0 %1029
      %v1031 = vadd.f32 %v934, %v936
      %1032 = vadd.xlane.f32.xlu0 %v1031
      %v1033 = vpop.xlane.xlu0 %1032
      %v1034 = vadd.f32 %v938, %v940
      %1035 = vadd.xlane.f32.xlu0 %v1034
      %v1036 = vpop.xlane.xlu0 %1035
      %v1037 = vlog2.pop %v943
      %v1038 = vmul.f32 %v1037, 0.6931472
      %v1039 = vlog2.pop %v946
      %v1040 = vmul.f32 %v1039, 0.6931472
      %v1041 = vlog2.pop %v949
      %v1042 = vmul.f32 %v1041, 0.6931472
      %v1043 = vlog2.pop %v952
      %v1044 = vmul.f32 %v1043, 0.6931472
      %v1045 = vlog2.pop %v955
      %v1046 = vmul.f32 %v1045, 0.6931472
      %v1047 = vlog2.pop %v958
      %v1048 = vmul.f32 %v1047, 0.6931472
      %v1049 = vlog2.pop %v961
      %v1050 = vmul.f32 %v1049, 0.6931472
      %v1051 = vlog2.pop %v964
      %v1052 = vmul.f32 %v1051, 0.6931472
      %v1053 = vlog2.pop %v967
      %v1054 = vmul.f32 %v1053, 0.6931472
      %v1055 = vlog2.pop %v970
      %v1056 = vmul.f32 %v1055, 0.6931472
      %v1057 = vlog2.pop %v973
      %v1058 = vmul.f32 %v1057, 0.6931472
      %v1059 = vlog2.pop %v976
      %v1060 = vmul.f32 %v1059, 0.6931472
      %v1061 = vlog2.pop %v979
      %v1062 = vmul.f32 %v1061, 0.6931472
      %v1063 = vlog2.pop %v982
      %v1064 = vmul.f32 %v1063, 0.6931472
      %v1065 = vlog2.pop %v985
      %v1066 = vmul.f32 %v1065, 0.6931472
      %v1067 = vlog2.pop %v988
      %v1068 = vmul.f32 %v1067, 0.6931472
      %v1069 = vlog2.pop %v991
      %v1070 = vmul.f32 %v1069, 0.6931472
      %v1071 = vlog2.pop %v994
      %v1072 = vmul.f32 %v1071, 0.6931472
      %v1073 = vlog2.pop %v997
      %v1074 = vmul.f32 %v1073, 0.6931472
      %v1075 = vlog2.pop %v1000
      %v1076 = vmul.f32 %v1075, 0.6931472
      %v1077 = vlog2.pop %v1003
      %v1078 = vmul.f32 %v1077, 0.6931472
      %v1079 = vlog2.pop %v1006
      %v1080 = vmul.f32 %v1079, 0.6931472
      %v1081 = vlog2.pop %v1009
      %v1082 = vmul.f32 %v1081, 0.6931472
      %v1083 = vlog2.pop %v1012
      %v1084 = vmul.f32 %v1083, 0.6931472
      %v1085 = vlog2.pop %v1015
      %v1086 = vmul.f32 %v1085, 0.6931472
      %v1087 = vlog2.pop %v1018
      %v1088 = vmul.f32 %v1087, 0.6931472
      %v1089 = vlog2.pop %v1021
      %v1090 = vmul.f32 %v1089, 0.6931472
      %v1091 = vlog2.pop %v1024
      %v1092 = vmul.f32 %v1091, 0.6931472
      %v1093 = vlog2.pop %v1027
      %v1094 = vmul.f32 %v1093, 0.6931472
      %v1095 = vlog2.pop %v1030
      %v1096 = vmul.f32 %v1095, 0.6931472
      %v1097 = vlog2.pop %v1033
      %v1098 = vmul.f32 %v1097, 0.6931472
      %v1099 = vlog2.pop %v1036
      %v1100 = vmul.f32 %v1099, 0.6931472
      %v1101 = vadd.f32 %v655, %v1038
      %v1102 = vadd.f32 %v658, %v1040
      %v1103 = vadd.f32 %v661, %v1042
      %v1104 = vadd.f32 %v664, %v1044
      %v1105 = vadd.f32 %v667, %v1046
      %v1106 = vadd.f32 %v670, %v1048
      %v1107 = vadd.f32 %v673, %v1050
      %v1108 = vadd.f32 %v676, %v1052
      %v1109 = vadd.f32 %v679, %v1054
      %v1110 = vadd.f32 %v682, %v1056
      %v1111 = vadd.f32 %v685, %v1058
      %v1112 = vadd.f32 %v688, %v1060
      %v1113 = vadd.f32 %v691, %v1062
      %v1114 = vadd.f32 %v694, %v1064
      %v1115 = vadd.f32 %v697, %v1066
      %v1116 = vadd.f32 %v700, %v1068
      %v1117 = vadd.f32 %v703, %v1070
      %v1118 = vadd.f32 %v706, %v1072
      %v1119 = vadd.f32 %v709, %v1074
      %v1120 = vadd.f32 %v712, %v1076
      %v1121 = vadd.f32 %v715, %v1078
      %v1122 = vadd.f32 %v718, %v1080
      %v1123 = vadd.f32 %v721, %v1082
      %v1124 = vadd.f32 %v724, %v1084
      %v1125 = vadd.f32 %v727, %v1086
      %v1126 = vadd.f32 %v730, %v1088
      %v1127 = vadd.f32 %v733, %v1090
      %v1128 = vadd.f32 %v736, %v1092
      %v1129 = vadd.f32 %v739, %v1094
      %v1130 = vadd.f32 %v742, %v1096
      %v1131 = vadd.f32 %v745, %v1098
      %v1132 = vadd.f32 %v748, %v1100
      %v1133 = vlaneseq
      %v1134 = vand.u32 %v1133, 127
      %v1135 = vadd.s32 %v1134, 128
      %v1136 = vld [vmem:[%s215] sm:$0xff]
      %v1137 = vld [vmem:[%s215 + $0x8] sm:$0xff]
      %v1138 = vld [vmem:[%s215 + $0x10] sm:$0xff]
      %v1139 = vld [vmem:[%s215 + $0x18] sm:$0xff]
      %v1140 = vld [vmem:[%s215 + $0x20] sm:$0xff]
      %v1141 = vld [vmem:[%s215 + $0x28] sm:$0xff]
      %v1142 = vld [vmem:[%s215 + $0x30] sm:$0xff]
      %v1143 = vld [vmem:[%s215 + $0x38] sm:$0xff]
      %v1144 = vld [vmem:[%s215 + $0x40] sm:$0xff]
      %v1145 = vld [vmem:[%s215 + $0x48] sm:$0xff]
      %v1146 = vld [vmem:[%s215 + $0x50] sm:$0xff]
      %v1147 = vld [vmem:[%s215 + $0x58] sm:$0xff]
      %v1148 = vld [vmem:[%s215 + $0x60] sm:$0xff]
      %v1149 = vld [vmem:[%s215 + $0x68] sm:$0xff]
      %v1150 = vld [vmem:[%s215 + $0x70] sm:$0xff]
      %v1151 = vld [vmem:[%s215 + $0x78] sm:$0xff]
      %v1152 = vld [vmem:[%s215 + $0x80] sm:$0xff]
      %v1153 = vld [vmem:[%s215 + $0x88] sm:$0xff]
      %v1154 = vld [vmem:[%s215 + $0x90] sm:$0xff]
      %v1155 = vld [vmem:[%s215 + $0x98] sm:$0xff]
      %v1156 = vld [vmem:[%s215 + $0xa0] sm:$0xff]
      %v1157 = vld [vmem:[%s215 + $0xa8] sm:$0xff]
      %v1158 = vld [vmem:[%s215 + $0xb0] sm:$0xff]
      %v1159 = vld [vmem:[%s215 + $0xb8] sm:$0xff]
      %v1160 = vld [vmem:[%s215 + $0xc0] sm:$0xff]
      %v1161 = vld [vmem:[%s215 + $0xc8] sm:$0xff]
      %v1162 = vld [vmem:[%s215 + $0xd0] sm:$0xff]
      %v1163 = vld [vmem:[%s215 + $0xd8] sm:$0xff]
      %v1164 = vld [vmem:[%s215 + $0xe0] sm:$0xff]
      %v1165 = vld [vmem:[%s215 + $0xe8] sm:$0xff]
      %v1166 = vld [vmem:[%s215 + $0xf0] sm:$0xff]
      %v1167 = vld [vmem:[%s215 + $0xf8] sm:$0xff]
      %1168 = vset.pattern.permute.xlu0 0
      %1169 = vperm.xlu0 %1168, %v1136
      %v1170 = vpop.permute.xlu0 %1169
      %1171 = vset.pattern.permute.xlu0 0
      %1172 = vperm.xlu0 %1171, %v1137
      %v1173 = vpop.permute.xlu0 %1172
      %1174 = vset.pattern.permute.xlu0 0
      %1175 = vperm.xlu0 %1174, %v1138
      %v1176 = vpop.permute.xlu0 %1175
      %1177 = vset.pattern.permute.xlu0 0
      %1178 = vperm.xlu0 %1177, %v1139
      %v1179 = vpop.permute.xlu0 %1178
      %1180 = vset.pattern.permute.xlu0 0
      %1181 = vperm.xlu0 %1180, %v1140
      %v1182 = vpop.permute.xlu0 %1181
      %1183 = vset.pattern.permute.xlu0 0
      %1184 = vperm.xlu0 %1183, %v1141
      %v1185 = vpop.permute.xlu0 %1184
      %1186 = vset.pattern.permute.xlu0 0
      %1187 = vperm.xlu0 %1186, %v1142
      %v1188 = vpop.permute.xlu0 %1187
      %1189 = vset.pattern.permute.xlu0 0
      %1190 = vperm.xlu0 %1189, %v1143
      %v1191 = vpop.permute.xlu0 %1190
      %1192 = vset.pattern.permute.xlu0 0
      %1193 = vperm.xlu0 %1192, %v1144
      %v1194 = vpop.permute.xlu0 %1193
      %1195 = vset.pattern.permute.xlu0 0
      %1196 = vperm.xlu0 %1195, %v1145
      %v1197 = vpop.permute.xlu0 %1196
      %1198 = vset.pattern.permute.xlu0 0
      %1199 = vperm.xlu0 %1198, %v1146
      %v1200 = vpop.permute.xlu0 %1199
      %1201 = vset.pattern.permute.xlu0 0
      %1202 = vperm.xlu0 %1201, %v1147
      %v1203 = vpop.permute.xlu0 %1202
      %1204 = vset.pattern.permute.xlu0 0
      %1205 = vperm.xlu0 %1204, %v1148
      %v1206 = vpop.permute.xlu0 %1205
      %1207 = vset.pattern.permute.xlu0 0
      %1208 = vperm.xlu0 %1207, %v1149
      %v1209 = vpop.permute.xlu0 %1208
      %1210 = vset.pattern.permute.xlu0 0
      %1211 = vperm.xlu0 %1210, %v1150
      %v1212 = vpop.permute.xlu0 %1211
      %1213 = vset.pattern.permute.xlu0 0
      %1214 = vperm.xlu0 %1213, %v1151
      %v1215 = vpop.permute.xlu0 %1214
      %1216 = vset.pattern.permute.xlu0 0
      %1217 = vperm.xlu0 %1216, %v1152
      %v1218 = vpop.permute.xlu0 %1217
      %1219 = vset.pattern.permute.xlu0 0
      %1220 = vperm.xlu0 %1219, %v1153
      %v1221 = vpop.permute.xlu0 %1220
      %1222 = vset.pattern.permute.xlu0 0
      %1223 = vperm.xlu0 %1222, %v1154
      %v1224 = vpop.permute.xlu0 %1223
      %1225 = vset.pattern.permute.xlu0 0
      %1226 = vperm.xlu0 %1225, %v1155
      %v1227 = vpop.permute.xlu0 %1226
      %1228 = vset.pattern.permute.xlu0 0
      %1229 = vperm.xlu0 %1228, %v1156
      %v1230 = vpop.permute.xlu0 %1229
      %1231 = vset.pattern.permute.xlu0 0
      %1232 = vperm.xlu0 %1231, %v1157
      %v1233 = vpop.permute.xlu0 %1232
      %1234 = vset.pattern.permute.xlu0 0
      %1235 = vperm.xlu0 %1234, %v1158
      %v1236 = vpop.permute.xlu0 %1235
      %1237 = vset.pattern.permute.xlu0 0
      %1238 = vperm.xlu0 %1237, %v1159
      %v1239 = vpop.permute.xlu0 %1238
      %1240 = vset.pattern.permute.xlu0 0
      %1241 = vperm.xlu0 %1240, %v1160
      %v1242 = vpop.permute.xlu0 %1241
      %1243 = vset.pattern.permute.xlu0 0
      %1244 = vperm.xlu0 %1243, %v1161
      %v1245 = vpop.permute.xlu0 %1244
      %1246 = vset.pattern.permute.xlu0 0
      %1247 = vperm.xlu0 %1246, %v1162
      %v1248 = vpop.permute.xlu0 %1247
      %1249 = vset.pattern.permute.xlu0 0
      %1250 = vperm.xlu0 %1249, %v1163
      %v1251 = vpop.permute.xlu0 %1250
      %1252 = vset.pattern.permute.xlu0 0
      %1253 = vperm.xlu0 %1252, %v1164
      %v1254 = vpop.permute.xlu0 %1253
      %1255 = vset.pattern.permute.xlu0 0
      %1256 = vperm.xlu0 %1255, %v1165
      %v1257 = vpop.permute.xlu0 %1256
      %1258 = vset.pattern.permute.xlu0 0
      %1259 = vperm.xlu0 %1258, %v1166
      %v1260 = vpop.permute.xlu0 %1259
      %1261 = vset.pattern.permute.xlu0 0
      %1262 = vperm.xlu0 %1261, %v1167
      %v1263 = vpop.permute.xlu0 %1262
      %vm1264 = vcmp.eq.s32.totalorder %v1134, %v1170
      %vm1265 = vcmp.eq.s32.totalorder %v1135, %v1170
      %vm1266 = vcmp.eq.s32.totalorder %v1134, %v1173
      %vm1267 = vcmp.eq.s32.totalorder %v1135, %v1173
      %vm1268 = vcmp.eq.s32.totalorder %v1134, %v1176
      %vm1269 = vcmp.eq.s32.totalorder %v1135, %v1176
      %vm1270 = vcmp.eq.s32.totalorder %v1134, %v1179
      %vm1271 = vcmp.eq.s32.totalorder %v1135, %v1179
      %vm1272 = vcmp.eq.s32.totalorder %v1134, %v1182
      %vm1273 = vcmp.eq.s32.totalorder %v1135, %v1182
      %vm1274 = vcmp.eq.s32.totalorder %v1134, %v1185
      %vm1275 = vcmp.eq.s32.totalorder %v1135, %v1185
      %vm1276 = vcmp.eq.s32.totalorder %v1134, %v1188
      %vm1277 = vcmp.eq.s32.totalorder %v1135, %v1188
      %vm1278 = vcmp.eq.s32.totalorder %v1134, %v1191
      %vm1279 = vcmp.eq.s32.totalorder %v1135, %v1191
      %vm1280 = vcmp.eq.s32.totalorder %v1134, %v1194
      %vm1281 = vcmp.eq.s32.totalorder %v1135, %v1194
      %vm1282 = vcmp.eq.s32.totalorder %v1134, %v1197
      %vm1283 = vcmp.eq.s32.totalorder %v1135, %v1197
      %vm1284 = vcmp.eq.s32.totalorder %v1134, %v1200
      %vm1285 = vcmp.eq.s32.totalorder %v1135, %v1200
      %vm1286 = vcmp.eq.s32.totalorder %v1134, %v1203
      %vm1287 = vcmp.eq.s32.totalorder %v1135, %v1203
      %vm1288 = vcmp.eq.s32.totalorder %v1134, %v1206
      %vm1289 = vcmp.eq.s32.totalorder %v1135, %v1206
      %vm1290 = vcmp.eq.s32.totalorder %v1134, %v1209
      %vm1291 = vcmp.eq.s32.totalorder %v1135, %v1209
      %vm1292 = vcmp.eq.s32.totalorder %v1134, %v1212
      %vm1293 = vcmp.eq.s32.totalorder %v1135, %v1212
      %vm1294 = vcmp.eq.s32.totalorder %v1134, %v1215
      %vm1295 = vcmp.eq.s32.totalorder %v1135, %v1215
      %vm1296 = vcmp.eq.s32.totalorder %v1134, %v1218
      %vm1297 = vcmp.eq.s32.totalorder %v1135, %v1218
      %vm1298 = vcmp.eq.s32.totalorder %v1134, %v1221
      %vm1299 = vcmp.eq.s32.totalorder %v1135, %v1221
      %vm1300 = vcmp.eq.s32.totalorder %v1134, %v1224
      %vm1301 = vcmp.eq.s32.totalorder %v1135, %v1224
      %vm1302 = vcmp.eq.s32.totalorder %v1134, %v1227
      %vm1303 = vcmp.eq.s32.totalorder %v1135, %v1227
      %vm1304 = vcmp.eq.s32.totalorder %v1134, %v1230
      %vm1305 = vcmp.eq.s32.totalorder %v1135, %v1230
      %vm1306 = vcmp.eq.s32.totalorder %v1134, %v1233
      %vm1307 = vcmp.eq.s32.totalorder %v1135, %v1233
      %vm1308 = vcmp.eq.s32.totalorder %v1134, %v1236
      %vm1309 = vcmp.eq.s32.totalorder %v1135, %v1236
      %vm1310 = vcmp.eq.s32.totalorder %v1134, %v1239
      %vm1311 = vcmp.eq.s32.totalorder %v1135, %v1239
      %vm1312 = vcmp.eq.s32.totalorder %v1134, %v1242
      %vm1313 = vcmp.eq.s32.totalorder %v1135, %v1242
      %vm1314 = vcmp.eq.s32.totalorder %v1134, %v1245
      %vm1315 = vcmp.eq.s32.totalorder %v1135, %v1245
      %vm1316 = vcmp.eq.s32.totalorder %v1134, %v1248
      %vm1317 = vcmp.eq.s32.totalorder %v1135, %v1248
      %vm1318 = vcmp.eq.s32.totalorder %v1134, %v1251
      %vm1319 = vcmp.eq.s32.totalorder %v1135, %v1251
      %vm1320 = vcmp.eq.s32.totalorder %v1134, %v1254
      %vm1321 = vcmp.eq.s32.totalorder %v1135, %v1254
      %vm1322 = vcmp.eq.s32.totalorder %v1134, %v1257
      %vm1323 = vcmp.eq.s32.totalorder %v1135, %v1257
      %vm1324 = vcmp.eq.s32.totalorder %v1134, %v1260
      %vm1325 = vcmp.eq.s32.totalorder %v1135, %v1260
      %vm1326 = vcmp.eq.s32.totalorder %v1134, %v1263
      %vm1327 = vcmp.eq.s32.totalorder %v1135, %v1263
      %v1328 = vsel %vm1264, %v495, 0.0
      %v1329 = vsel %vm1265, %v497, 0.0
      %v1330 = vsel %vm1266, %v499, 0.0
      %v1331 = vsel %vm1267, %v501, 0.0
      %v1332 = vsel %vm1268, %v505, 0.0
      %v1333 = vsel %vm1269, %v507, 0.0
      %v1334 = vsel %vm1270, %v509, 0.0
      %v1335 = vsel %vm1271, %v511, 0.0
      %v1336 = vsel %vm1272, %v515, 0.0
      %v1337 = vsel %vm1273, %v517, 0.0
      %v1338 = vsel %vm1274, %v519, 0.0
      %v1339 = vsel %vm1275, %v521, 0.0
      %v1340 = vsel %vm1276, %v525, 0.0
      %v1341 = vsel %vm1277, %v527, 0.0
      %v1342 = vsel %vm1278, %v529, 0.0
      %v1343 = vsel %vm1279, %v531, 0.0
      %v1344 = vsel %vm1280, %v535, 0.0
      %v1345 = vsel %vm1281, %v537, 0.0
      %v1346 = vsel %vm1282, %v539, 0.0
      %v1347 = vsel %vm1283, %v541, 0.0
      %v1348 = vsel %vm1284, %v545, 0.0
      %v1349 = vsel %vm1285, %v547, 0.0
      %v1350 = vsel %vm1286, %v549, 0.0
      %v1351 = vsel %vm1287, %v551, 0.0
      %v1352 = vsel %vm1288, %v555, 0.0
      %v1353 = vsel %vm1289, %v557, 0.0
      %v1354 = vsel %vm1290, %v559, 0.0
      %v1355 = vsel %vm1291, %v561, 0.0
      %v1356 = vsel %vm1292, %v565, 0.0
      %v1357 = vsel %vm1293, %v567, 0.0
      %v1358 = vsel %vm1294, %v569, 0.0
      %v1359 = vsel %vm1295, %v571, 0.0
      %v1360 = vsel %vm1296, %v575, 0.0
      %v1361 = vsel %vm1297, %v577, 0.0
      %v1362 = vsel %vm1298, %v579, 0.0
      %v1363 = vsel %vm1299, %v581, 0.0
      %v1364 = vsel %vm1300, %v585, 0.0
      %v1365 = vsel %vm1301, %v587, 0.0
      %v1366 = vsel %vm1302, %v589, 0.0
      %v1367 = vsel %vm1303, %v591, 0.0
      %v1368 = vsel %vm1304, %v595, 0.0
      %v1369 = vsel %vm1305, %v597, 0.0
      %v1370 = vsel %vm1306, %v599, 0.0
      %v1371 = vsel %vm1307, %v601, 0.0
      %v1372 = vsel %vm1308, %v605, 0.0
      %v1373 = vsel %vm1309, %v607, 0.0
      %v1374 = vsel %vm1310, %v609, 0.0
      %v1375 = vsel %vm1311, %v611, 0.0
      %v1376 = vsel %vm1312, %v615, 0.0
      %v1377 = vsel %vm1313, %v617, 0.0
      %v1378 = vsel %vm1314, %v619, 0.0
      %v1379 = vsel %vm1315, %v621, 0.0
      %v1380 = vsel %vm1316, %v625, 0.0
      %v1381 = vsel %vm1317, %v627, 0.0
      %v1382 = vsel %vm1318, %v629, 0.0
      %v1383 = vsel %vm1319, %v631, 0.0
      %v1384 = vsel %vm1320, %v635, 0.0
      %v1385 = vsel %vm1321, %v637, 0.0
      %v1386 = vsel %vm1322, %v639, 0.0
      %v1387 = vsel %vm1323, %v641, 0.0
      %v1388 = vsel %vm1324, %v645, 0.0
      %v1389 = vsel %vm1325, %v647, 0.0
      %v1390 = vsel %vm1326, %v649, 0.0
      %v1391 = vsel %vm1327, %v651, 0.0
      %v1392 = vadd.f32 %v1328, %v1329
      %1393 = vadd.xlane.f32.xlu0 %v1392
      %v1394 = vpop.xlane.xlu0 %1393
      %v1395 = vadd.f32 %v1330, %v1331
      %1396 = vadd.xlane.f32.xlu0 %v1395
      %v1397 = vpop.xlane.xlu0 %1396
      %v1398 = vadd.f32 %v1332, %v1333
      %1399 = vadd.xlane.f32.xlu0 %v1398
      %v1400 = vpop.xlane.xlu0 %1399
      %v1401 = vadd.f32 %v1334, %v1335
      %1402 = vadd.xlane.f32.xlu0 %v1401
      %v1403 = vpop.xlane.xlu0 %1402
      %v1404 = vadd.f32 %v1336, %v1337
      %1405 = vadd.xlane.f32.xlu0 %v1404
      %v1406 = vpop.xlane.xlu0 %1405
      %v1407 = vadd.f32 %v1338, %v1339
      %1408 = vadd.xlane.f32.xlu0 %v1407
      %v1409 = vpop.xlane.xlu0 %1408
      %v1410 = vadd.f32 %v1340, %v1341
      %1411 = vadd.xlane.f32.xlu0 %v1410
      %v1412 = vpop.xlane.xlu0 %1411
      %v1413 = vadd.f32 %v1342, %v1343
      %1414 = vadd.xlane.f32.xlu0 %v1413
      %v1415 = vpop.xlane.xlu0 %1414
      %v1416 = vadd.f32 %v1344, %v1345
      %1417 = vadd.xlane.f32.xlu0 %v1416
      %v1418 = vpop.xlane.xlu0 %1417
      %v1419 = vadd.f32 %v1346, %v1347
      %1420 = vadd.xlane.f32.xlu0 %v1419
      %v1421 = vpop.xlane.xlu0 %1420
      %v1422 = vadd.f32 %v1348, %v1349
      %1423 = vadd.xlane.f32.xlu0 %v1422
      %v1424 = vpop.xlane.xlu0 %1423
      %v1425 = vadd.f32 %v1350, %v1351
      %1426 = vadd.xlane.f32.xlu0 %v1425
      %v1427 = vpop.xlane.xlu0 %1426
      %v1428 = vadd.f32 %v1352, %v1353
      %1429 = vadd.xlane.f32.xlu0 %v1428
      %v1430 = vpop.xlane.xlu0 %1429
      %v1431 = vadd.f32 %v1354, %v1355
      %1432 = vadd.xlane.f32.xlu0 %v1431
      %v1433 = vpop.xlane.xlu0 %1432
      %v1434 = vadd.f32 %v1356, %v1357
      %1435 = vadd.xlane.f32.xlu0 %v1434
      %v1436 = vpop.xlane.xlu0 %1435
      %v1437 = vadd.f32 %v1358, %v1359
      %1438 = vadd.xlane.f32.xlu0 %v1437
      %v1439 = vpop.xlane.xlu0 %1438
      %v1440 = vadd.f32 %v1360, %v1361
      %1441 = vadd.xlane.f32.xlu0 %v1440
      %v1442 = vpop.xlane.xlu0 %1441
      %v1443 = vadd.f32 %v1362, %v1363
      %1444 = vadd.xlane.f32.xlu0 %v1443
      %v1445 = vpop.xlane.xlu0 %1444
      %v1446 = vadd.f32 %v1364, %v1365
      %1447 = vadd.xlane.f32.xlu0 %v1446
      %v1448 = vpop.xlane.xlu0 %1447
      %v1449 = vadd.f32 %v1366, %v1367
      %1450 = vadd.xlane.f32.xlu0 %v1449
      %v1451 = vpop.xlane.xlu0 %1450
      %v1452 = vadd.f32 %v1368, %v1369
      %1453 = vadd.xlane.f32.xlu0 %v1452
      %v1454 = vpop.xlane.xlu0 %1453
      %v1455 = vadd.f32 %v1370, %v1371
      %1456 = vadd.xlane.f32.xlu0 %v1455
      %v1457 = vpop.xlane.xlu0 %1456
      %v1458 = vadd.f32 %v1372, %v1373
      %1459 = vadd.xlane.f32.xlu0 %v1458
      %v1460 = vpop.xlane.xlu0 %1459
      %v1461 = vadd.f32 %v1374, %v1375
      %1462 = vadd.xlane.f32.xlu0 %v1461
      %v1463 = vpop.xlane.xlu0 %1462
      %v1464 = vadd.f32 %v1376, %v1377
      %1465 = vadd.xlane.f32.xlu0 %v1464
      %v1466 = vpop.xlane.xlu0 %1465
      %v1467 = vadd.f32 %v1378, %v1379
      %1468 = vadd.xlane.f32.xlu0 %v1467
      %v1469 = vpop.xlane.xlu0 %1468
      %v1470 = vadd.f32 %v1380, %v1381
      %1471 = vadd.xlane.f32.xlu0 %v1470
      %v1472 = vpop.xlane.xlu0 %1471
      %v1473 = vadd.f32 %v1382, %v1383
      %1474 = vadd.xlane.f32.xlu0 %v1473
      %v1475 = vpop.xlane.xlu0 %1474
      %v1476 = vadd.f32 %v1384, %v1385
      %1477 = vadd.xlane.f32.xlu0 %v1476
      %v1478 = vpop.xlane.xlu0 %1477
      %v1479 = vadd.f32 %v1386, %v1387
      %1480 = vadd.xlane.f32.xlu0 %v1479
      %v1481 = vpop.xlane.xlu0 %1480
      %v1482 = vadd.f32 %v1388, %v1389
      %1483 = vadd.xlane.f32.xlu0 %v1482
      %v1484 = vpop.xlane.xlu0 %1483
      %v1485 = vadd.f32 %v1390, %v1391
      %1486 = vadd.xlane.f32.xlu0 %v1485
      %v1487 = vpop.xlane.xlu0 %1486
      %v1488 = vsub.f32 %v1101, %v1394
      %v1489 = vsub.f32 %v1102, %v1397
      %v1490 = vsub.f32 %v1103, %v1400
      %v1491 = vsub.f32 %v1104, %v1403
      %v1492 = vsub.f32 %v1105, %v1406
      %v1493 = vsub.f32 %v1106, %v1409
      %v1494 = vsub.f32 %v1107, %v1412
      %v1495 = vsub.f32 %v1108, %v1415
      %v1496 = vsub.f32 %v1109, %v1418
      %v1497 = vsub.f32 %v1110, %v1421
      %v1498 = vsub.f32 %v1111, %v1424
      %v1499 = vsub.f32 %v1112, %v1427
      %v1500 = vsub.f32 %v1113, %v1430
      %v1501 = vsub.f32 %v1114, %v1433
      %v1502 = vsub.f32 %v1115, %v1436
      %v1503 = vsub.f32 %v1116, %v1439
      %v1504 = vsub.f32 %v1117, %v1442
      %v1505 = vsub.f32 %v1118, %v1445
      %v1506 = vsub.f32 %v1119, %v1448
      %v1507 = vsub.f32 %v1120, %v1451
      %v1508 = vsub.f32 %v1121, %v1454
      %v1509 = vsub.f32 %v1122, %v1457
      %v1510 = vsub.f32 %v1123, %v1460
      %v1511 = vsub.f32 %v1124, %v1463
      %v1512 = vsub.f32 %v1125, %v1466
      %v1513 = vsub.f32 %v1126, %v1469
      %v1514 = vsub.f32 %v1127, %v1472
      %v1515 = vsub.f32 %v1128, %v1475
      %v1516 = vsub.f32 %v1129, %v1478
      %v1517 = vsub.f32 %v1130, %v1481
      %v1518 = vsub.f32 %v1131, %v1484
      %v1519 = vsub.f32 %v1132, %v1487
      %vm1520 = vcmask 7168
      %1521 = vst.msk [vmem:[%s221] sm:$0xff] %vm1520, %v1488
      %1522 = vst.msk [vmem:[%s221 + $0x8] sm:$0xff] %vm1520, %v1489
      %1523 = vst.msk [vmem:[%s221 + $0x10] sm:$0xff] %vm1520, %v1490
      %1524 = vst.msk [vmem:[%s221 + $0x18] sm:$0xff] %vm1520, %v1491
      %1525 = vst.msk [vmem:[%s221 + $0x20] sm:$0xff] %vm1520, %v1492
      %1526 = vst.msk [vmem:[%s221 + $0x28] sm:$0xff] %vm1520, %v1493
      %1527 = vst.msk [vmem:[%s221 + $0x30] sm:$0xff] %vm1520, %v1494
      %1528 = vst.msk [vmem:[%s221 + $0x38] sm:$0xff] %vm1520, %v1495
      %1529 = vst.msk [vmem:[%s221 + $0x40] sm:$0xff] %vm1520, %v1496
      %1530 = vst.msk [vmem:[%s221 + $0x48] sm:$0xff] %vm1520, %v1497
      %1531 = vst.msk [vmem:[%s221 + $0x50] sm:$0xff] %vm1520, %v1498
      %1532 = vst.msk [vmem:[%s221 + $0x58] sm:$0xff] %vm1520, %v1499
      %1533 = vst.msk [vmem:[%s221 + $0x60] sm:$0xff] %vm1520, %v1500
      %1534 = vst.msk [vmem:[%s221 + $0x68] sm:$0xff] %vm1520, %v1501
      %1535 = vst.msk [vmem:[%s221 + $0x70] sm:$0xff] %vm1520, %v1502
      %1536 = vst.msk [vmem:[%s221 + $0x78] sm:$0xff] %vm1520, %v1503
      %1537 = vst.msk [vmem:[%s221 + $0x80] sm:$0xff] %vm1520, %v1504
      %1538 = vst.msk [vmem:[%s221 + $0x88] sm:$0xff] %vm1520, %v1505
      %1539 = vst.msk [vmem:[%s221 + $0x90] sm:$0xff] %vm1520, %v1506
      %1540 = vst.msk [vmem:[%s221 + $0x98] sm:$0xff] %vm1520, %v1507
      %1541 = vst.msk [vmem:[%s221 + $0xa0] sm:$0xff] %vm1520, %v1508
      %1542 = vst.msk [vmem:[%s221 + $0xa8] sm:$0xff] %vm1520, %v1509
      %1543 = vst.msk [vmem:[%s221 + $0xb0] sm:$0xff] %vm1520, %v1510
      %1544 = vst.msk [vmem:[%s221 + $0xb8] sm:$0xff] %vm1520, %v1511
      %1545 = vst.msk [vmem:[%s221 + $0xc0] sm:$0xff] %vm1520, %v1512
      %1546 = vst.msk [vmem:[%s221 + $0xc8] sm:$0xff] %vm1520, %v1513
      %1547 = vst.msk [vmem:[%s221 + $0xd0] sm:$0xff] %vm1520, %v1514
      %1548 = vst.msk [vmem:[%s221 + $0xd8] sm:$0xff] %vm1520, %v1515
      %1549 = vst.msk [vmem:[%s221 + $0xe0] sm:$0xff] %vm1520, %v1516
      %1550 = vst.msk [vmem:[%s221 + $0xe8] sm:$0xff] %vm1520, %v1517
      %1551 = vst.msk [vmem:[%s221 + $0xf0] sm:$0xff] %vm1520, %v1518
      %1552 = vst.msk [vmem:[%s221 + $0xf8] sm:$0xff] %vm1520, %v1519
      %s1553 = smul.u32 32, %s15
      %p1554 = scmp.lt.s32.totalorder %s1553, 63
      %s1555 = scalar_select %p1554, %s1553, 63
      %s1556 = smul.addr %s1555, 8
      %s1557 = scalar_lea.vmem %s4, %s1556
      // Predicated region
      $region37: #{trainer_model_forward.3} parent=35 // pred_check
        %p1558 = pneg %p127
      $region38: #{trainer_model_forward.3} parent=35 // pred_check_branch
        %1560 = sbr.rel (%p1558) target = $region40
      $region39: #{trainer_model_forward.3} parent=35 // pred_region
        %s1561 = smul.u32 32, %s15
      $region40: #{trainer_model_forward.3} parent=35 // pred_fallthru
        _
    $region36: #{trainer_model_forward.3} parent=5 // pred_fallthru
      _
    %p1562 = scmp.le.s32.totalorder 2, %s10
    // Predicated region
    $region41: #{trainer_model_forward.3} parent=5 // pred_check
      %p1563 = pneg %p1562
    $region42: #{trainer_model_forward.3} parent=5 // pred_check_branch
      %1565 = sbr.rel (%p1563) target = $region44
    $region43: #{trainer_model_forward.3} parent=5 // pred_region
      %s1566 = ssub.s32 %s10, 2
      // Predicated region
      $region45: #{trainer_model_forward.3} parent=43 // pred_check
        %p1567 = pneg %p133
      $region46: #{trainer_model_forward.3} parent=43 // pred_check_branch
        %1569 = sbr.rel (%p1567) target = $region48
      $region47: #{trainer_model_forward.3} parent=43 // pred_region
        %s1570 = smul.u32 32, %s16
        %p1571 = scmp.lt.s32.totalorder %s1570, 63
        %s1572 = scalar_select %p1571, %s1570, 63
        %s1573 = smul.addr %s1572, 8
        %s1574 = scalar_lea.vmem %s4, %s1573
      $region48: #{trainer_model_forward.3} parent=43 // pred_fallthru
        _
    $region44: #{trainer_model_forward.3} parent=5 // pred_fallthru
      _
  $region6: #{trainer_model_forward.3} parent=0 // loop_footer
    %s14 = sadd.s32 1, %s10
  $region7: #{trainer_model_forward.3} parent=0 // loop_footer_branch
    %9 = sbr.rel target = $region3
  $region8: #{trainer_model_forward.3} parent=0 // loop_exit
    _

// kernel: trainer_model_forward.2
$region0: #{trainer_model_forward.2}
  #allocation0 [shape = 'u32[]', space=smem, size = 0x4, offset = 0x4, fixed_abs, tag = 'smem constant byte address 0x4 - core index']
  #allocation1 [shape = 'u32[144,128]{1,0:T(1,128)}', space=vmem, size = 0x12000, scoped, tag = 'internal scratch']
  %s0 = inlined_call_operand.vmem [shape: bf16[512,128], index: 0, kind: input, shape index: {}]
  %s1 = inlined_call_operand.vmem [shape: bf16[128,256], index: 1, kind: input, shape index: {}]
  %s2 = inlined_call_operand.vmem [shape: f32[1,256], index: 2, kind: input, shape index: {}]
  %s3 = inlined_call_operand.vmem [shape: bf16[256,128], index: 3, kind: input, shape index: {}]
  %s4 = inlined_call_operand.vmem [shape: f32[1,128], index: 4, kind: input, shape index: {}]
  %s5 = inlined_call_operand.vmem [shape: bf16[128,256], index: 5, kind: input, shape index: {}]
  %s6 = inlined_call_operand.vmem [shape: f32[1,256], index: 6, kind: input, shape index: {}]
  %s7 = inlined_call_operand.vmem [shape: bf16[256,128], index: 7, kind: input, shape index: {}]
  %s8 = inlined_call_operand.vmem [shape: f32[1,128], index: 8, kind: input, shape index: {}]
  %s9 = inlined_call_operand.vmem [shape: bf16[128,256], index: 9, kind: input, shape index: {}]
  %s10 = inlined_call_operand.vmem [shape: f32[1,256], index: 10, kind: input, shape index: {}]
  %s11 = inlined_call_operand.vmem [shape: bf16[256,128], index: 11, kind: input, shape index: {}]
  %s12 = inlined_call_operand.vmem [shape: f32[1,128], index: 12, kind: input, shape index: {}]
  %s13 = inlined_call_operand.vmem [shape: bf16[512,128], index: 13, kind: output, shape index: {}]
  %s14 = sld [smem:[#allocation0]]
  $region85: #{trainer_model_forward.2} parent=0
    _
  %s16 = ssub.s32 1, %s14
  %s17 = scalar_select 0, %s16, %s14
  loop: start=0, step=1, limit=4
  $region2: #{trainer_model_forward.2} parent=0 // loop_pre_header
    _
  $region3: #{trainer_model_forward.2} parent=0 // loop_header
    %s19 = sphi 0, %s23
    %p20 = scmp.ge.s32.totalorder %s19, 4
    %s29 = sphi 0, %s31
    %s32 = sphi 0, %s29
    %s33 = sphi 0, %s32
    %s49 = sphi 0, %s33
    %s53 = sphi 0, %s53
    %s55 = sphi 0, %s53
    %s56 = sphi 0, %s55
    %s70 = sphi 0, %s56
    %s74 = sphi 0, %s74
    %s76 = sphi 0, %s74
    %s77 = sphi 0, %s76
    %s91 = sphi 0, %s77
    %s95 = sphi 0, %s95
    %s97 = sphi 0, %s95
    %s98 = sphi 0, %s97
    %s112 = sphi 0, %s98
    %s116 = sphi 0, %s116
    %s118 = sphi 0, %s116
    %s119 = sphi 0, %s118
    %s133 = sphi 0, %s119
    %s137 = sphi 0, %s137
    %s139 = sphi 0, %s137
    %s140 = sphi 0, %s139
    %s154 = sphi 0, %s140
    %s158 = sphi 0, %s158
    %s160 = sphi 0, %s158
    %s161 = sphi 0, %s160
    %s175 = sphi 0, %s161
    %s179 = sphi 0, %s179
    %s181 = sphi 0, %s179
    %s182 = sphi 0, %s181
    %s196 = sphi 0, %s182
    %s200 = sphi 0, %s200
    %s202 = sphi 0, %s200
    %s203 = sphi 0, %s202
    %s217 = sphi 0, %s203
    %s221 = sphi 0, %s221
    %s223 = sphi 0, %s221
    %s224 = sphi 0, %s223
    %s238 = sphi 0, %s224
    %s242 = sphi 0, %s242
    %s244 = sphi 0, %s242
    %s245 = sphi 0, %s244
    %s259 = sphi 0, %s245
    %s263 = sphi 0, %s263
    %s265 = sphi 0, %s263
    %s266 = sphi 0, %s265
    %s280 = sphi 0, %s266
    %s284 = sphi 0, %s284
    %s286 = sphi 0, %s284
    %s287 = sphi 0, %s286
    %s301 = sphi 0, %s287
    %s307 = sphi 0, %s309
    %s310 = sphi 0, %s307
    %s311 = sphi 0, %s310
    %s327 = sphi 0, %s311
  $region4: #{trainer_model_forward.2} parent=0 // loop_header_branch
    %22 = sbr.rel (%p20) target = $region8
  $region5: #{trainer_model_forward.2} parent=0 // loop_body
    %s24 = ssub.s32 %s19, 1
    %s25 = ssub.s32 %s19, 2
    %s26 = sadd.s32 %s19, 1
    %s27 = ssub.s32 %s19, %s26
    %p28 = scmp.eq.s32.totalorder %s27, 0
    %s30 = sadd.s32 %s29, 1
    %s31 = scalar_select %p28, %s29, %s30
    %p34 = pneg %p28
    %p35 = scmp.eq.s32.totalorder %s19, 1
    %p36 = por %p34, %p35
    %p37 = scmp.ne.s32.totalorder %s29, %s32
    %p38 = scmp.eq.s32.totalorder %s19, 0
    %p39 = por %p37, %p38
    %p40 = scmp.ne.s32.totalorder %s29, %s32
    %p41 = scmp.eq.s32.totalorder %s24, 1
    %p42 = por %p40, %p41
    %p43 = scmp.ne.s32.totalorder %s32, %s33
    %p44 = scmp.eq.s32.totalorder %s24, 0
    %p45 = por %p43, %p44
    %p46 = scmp.ne.s32.totalorder %s32, %s33
    %p47 = scmp.eq.s32.totalorder %s25, 1
    %p48 = por %p46, %p47
    %p50 = scmp.ne.s32.totalorder %s33, %s49
    %p51 = scmp.eq.s32.totalorder %s25, 0
    %p52 = por %p50, %p51
    %s54 = sadd.s32 %s53, 1
    %p57 = scmp.eq.s32.totalorder %s19, 1
    %p58 = scmp.ne.s32.totalorder %s53, %s55
    %p59 = scmp.eq.s32.totalorder %s19, 0
    %p60 = por %p58, %p59
    %p61 = scmp.ne.s32.totalorder %s53, %s55
    %p62 = scmp.eq.s32.totalorder %s24, 1
    %p63 = por %p61, %p62
    %p64 = scmp.ne.s32.totalorder %s55, %s56
    %p65 = scmp.eq.s32.totalorder %s24, 0
    %p66 = por %p64, %p65
    %p67 = scmp.ne.s32.totalorder %s55, %s56
    %p68 = scmp.eq.s32.totalorder %s25, 1
    %p69 = por %p67, %p68
    %p71 = scmp.ne.s32.totalorder %s56, %s70
    %p72 = scmp.eq.s32.totalorder %s25, 0
    %p73 = por %p71, %p72
    %s75 = sadd.s32 %s74, 1
    %p78 = scmp.eq.s32.totalorder %s19, 1
    %p79 = scmp.ne.s32.totalorder %s74, %s76
    %p80 = scmp.eq.s32.totalorder %s19, 0
    %p81 = por %p79, %p80
    %p82 = scmp.ne.s32.totalorder %s74, %s76
    %p83 = scmp.eq.s32.totalorder %s24, 1
    %p84 = por %p82, %p83
    %p85 = scmp.ne.s32.totalorder %s76, %s77
    %p86 = scmp.eq.s32.totalorder %s24, 0
    %p87 = por %p85, %p86
    %p88 = scmp.ne.s32.totalorder %s76, %s77
    %p89 = scmp.eq.s32.totalorder %s25, 1
    %p90 = por %p88, %p89
    %p92 = scmp.ne.s32.totalorder %s77, %s91
    %p93 = scmp.eq.s32.totalorder %s25, 0
    %p94 = por %p92, %p93
    %s96 = sadd.s32 %s95, 1
    %p99 = scmp.eq.s32.totalorder %s19, 1
    %p100 = scmp.ne.s32.totalorder %s95, %s97
    %p101 = scmp.eq.s32.totalorder %s19, 0
    %p102 = por %p100, %p101
    %p103 = scmp.ne.s32.totalorder %s95, %s97
    %p104 = scmp.eq.s32.totalorder %s24, 1
    %p105 = por %p103, %p104
    %p106 = scmp.ne.s32.totalorder %s97, %s98
    %p107 = scmp.eq.s32.totalorder %s24, 0
    %p108 = por %p106, %p107
    %p109 = scmp.ne.s32.totalorder %s97, %s98
    %p110 = scmp.eq.s32.totalorder %s25, 1
    %p111 = por %p109, %p110
    %p113 = scmp.ne.s32.totalorder %s98, %s112
    %p114 = scmp.eq.s32.totalorder %s25, 0
    %p115 = por %p113, %p114
    %s117 = sadd.s32 %s116, 1
    %p120 = scmp.eq.s32.totalorder %s19, 1
    %p121 = scmp.ne.s32.totalorder %s116, %s118
    %p122 = scmp.eq.s32.totalorder %s19, 0
    %p123 = por %p121, %p122
    %p124 = scmp.ne.s32.totalorder %s116, %s118
    %p125 = scmp.eq.s32.totalorder %s24, 1
    %p126 = por %p124, %p125
    %p127 = scmp.ne.s32.totalorder %s118, %s119
    %p128 = scmp.eq.s32.totalorder %s24, 0
    %p129 = por %p127, %p128
    %p130 = scmp.ne.s32.totalorder %s118, %s119
    %p131 = scmp.eq.s32.totalorder %s25, 1
    %p132 = por %p130, %p131
    %p134 = scmp.ne.s32.totalorder %s119, %s133
    %p135 = scmp.eq.s32.totalorder %s25, 0
    %p136 = por %p134, %p135
    %s138 = sadd.s32 %s137, 1
    %p141 = scmp.eq.s32.totalorder %s19, 1
    %p142 = scmp.ne.s32.totalorder %s137, %s139
    %p143 = scmp.eq.s32.totalorder %s19, 0
    %p144 = por %p142, %p143
    %p145 = scmp.ne.s32.totalorder %s137, %s139
    %p146 = scmp.eq.s32.totalorder %s24, 1
    %p147 = por %p145, %p146
    %p148 = scmp.ne.s32.totalorder %s139, %s140
    %p149 = scmp.eq.s32.totalorder %s24, 0
    %p150 = por %p148, %p149
    %p151 = scmp.ne.s32.totalorder %s139, %s140
    %p152 = scmp.eq.s32.totalorder %s25, 1
    %p153 = por %p151, %p152
    %p155 = scmp.ne.s32.totalorder %s140, %s154
    %p156 = scmp.eq.s32.totalorder %s25, 0
    %p157 = por %p155, %p156
    %s159 = sadd.s32 %s158, 1
    %p162 = scmp.eq.s32.totalorder %s19, 1
    %p163 = scmp.ne.s32.totalorder %s158, %s160
    %p164 = scmp.eq.s32.totalorder %s19, 0
    %p165 = por %p163, %p164
    %p166 = scmp.ne.s32.totalorder %s158, %s160
    %p167 = scmp.eq.s32.totalorder %s24, 1
    %p168 = por %p166, %p167
    %p169 = scmp.ne.s32.totalorder %s160, %s161
    %p170 = scmp.eq.s32.totalorder %s24, 0
    %p171 = por %p169, %p170
    %p172 = scmp.ne.s32.totalorder %s160, %s161
    %p173 = scmp.eq.s32.totalorder %s25, 1
    %p174 = por %p172, %p173
    %p176 = scmp.ne.s32.totalorder %s161, %s175
    %p177 = scmp.eq.s32.totalorder %s25, 0
    %p178 = por %p176, %p177
    %s180 = sadd.s32 %s179, 1
    %p183 = scmp.eq.s32.totalorder %s19, 1
    %p184 = scmp.ne.s32.totalorder %s179, %s181
    %p185 = scmp.eq.s32.totalorder %s19, 0
    %p186 = por %p184, %p185
    %p187 = scmp.ne.s32.totalorder %s179, %s181
    %p188 = scmp.eq.s32.totalorder %s24, 1
    %p189 = por %p187, %p188
    %p190 = scmp.ne.s32.totalorder %s181, %s182
    %p191 = scmp.eq.s32.totalorder %s24, 0
    %p192 = por %p190, %p191
    %p193 = scmp.ne.s32.totalorder %s181, %s182
    %p194 = scmp.eq.s32.totalorder %s25, 1
    %p195 = por %p193, %p194
    %p197 = scmp.ne.s32.totalorder %s182, %s196
    %p198 = scmp.eq.s32.totalorder %s25, 0
    %p199 = por %p197, %p198
    %s201 = sadd.s32 %s200, 1
    %p204 = scmp.eq.s32.totalorder %s19, 1
    %p205 = scmp.ne.s32.totalorder %s200, %s202
    %p206 = scmp.eq.s32.totalorder %s19, 0
    %p207 = por %p205, %p206
    %p208 = scmp.ne.s32.totalorder %s200, %s202
    %p209 = scmp.eq.s32.totalorder %s24, 1
    %p210 = por %p208, %p209
    %p211 = scmp.ne.s32.totalorder %s202, %s203
    %p212 = scmp.eq.s32.totalorder %s24, 0
    %p213 = por %p211, %p212
    %p214 = scmp.ne.s32.totalorder %s202, %s203
    %p215 = scmp.eq.s32.totalorder %s25, 1
    %p216 = por %p214, %p215
    %p218 = scmp.ne.s32.totalorder %s203, %s217
    %p219 = scmp.eq.s32.totalorder %s25, 0
    %p220 = por %p218, %p219
    %s222 = sadd.s32 %s221, 1
    %p225 = scmp.eq.s32.totalorder %s19, 1
    %p226 = scmp.ne.s32.totalorder %s221, %s223
    %p227 = scmp.eq.s32.totalorder %s19, 0
    %p228 = por %p226, %p227
    %p229 = scmp.ne.s32.totalorder %s221, %s223
    %p230 = scmp.eq.s32.totalorder %s24, 1
    %p231 = por %p229, %p230
    %p232 = scmp.ne.s32.totalorder %s223, %s224
    %p233 = scmp.eq.s32.totalorder %s24, 0
    %p234 = por %p232, %p233
    %p235 = scmp.ne.s32.totalorder %s223, %s224
    %p236 = scmp.eq.s32.totalorder %s25, 1
    %p237 = por %p235, %p236
    %p239 = scmp.ne.s32.totalorder %s224, %s238
    %p240 = scmp.eq.s32.totalorder %s25, 0
    %p241 = por %p239, %p240
    %s243 = sadd.s32 %s242, 1
    %p246 = scmp.eq.s32.totalorder %s19, 1
    %p247 = scmp.ne.s32.totalorder %s242, %s244
    %p248 = scmp.eq.s32.totalorder %s19, 0
    %p249 = por %p247, %p248
    %p250 = scmp.ne.s32.totalorder %s242, %s244
    %p251 = scmp.eq.s32.totalorder %s24, 1
    %p252 = por %p250, %p251
    %p253 = scmp.ne.s32.totalorder %s244, %s245
    %p254 = scmp.eq.s32.totalorder %s24, 0
    %p255 = por %p253, %p254
    %p256 = scmp.ne.s32.totalorder %s244, %s245
    %p257 = scmp.eq.s32.totalorder %s25, 1
    %p258 = por %p256, %p257
    %p260 = scmp.ne.s32.totalorder %s245, %s259
    %p261 = scmp.eq.s32.totalorder %s25, 0
    %p262 = por %p260, %p261
    %s264 = sadd.s32 %s263, 1
    %p267 = scmp.eq.s32.totalorder %s19, 1
    %p268 = scmp.ne.s32.totalorder %s263, %s265
    %p269 = scmp.eq.s32.totalorder %s19, 0
    %p270 = por %p268, %p269
    %p271 = scmp.ne.s32.totalorder %s263, %s265
    %p272 = scmp.eq.s32.totalorder %s24, 1
    %p273 = por %p271, %p272
    %p274 = scmp.ne.s32.totalorder %s265, %s266
    %p275 = scmp.eq.s32.totalorder %s24, 0
    %p276 = por %p274, %p275
    %p277 = scmp.ne.s32.totalorder %s265, %s266
    %p278 = scmp.eq.s32.totalorder %s25, 1
    %p279 = por %p277, %p278
    %p281 = scmp.ne.s32.totalorder %s266, %s280
    %p282 = scmp.eq.s32.totalorder %s25, 0
    %p283 = por %p281, %p282
    %s285 = sadd.s32 %s284, 1
    %p288 = scmp.eq.s32.totalorder %s19, 1
    %p289 = scmp.ne.s32.totalorder %s284, %s286
    %p290 = scmp.eq.s32.totalorder %s19, 0
    %p291 = por %p289, %p290
    %p292 = scmp.ne.s32.totalorder %s284, %s286
    %p293 = scmp.eq.s32.totalorder %s24, 1
    %p294 = por %p292, %p293
    %p295 = scmp.ne.s32.totalorder %s286, %s287
    %p296 = scmp.eq.s32.totalorder %s24, 0
    %p297 = por %p295, %p296
    %p298 = scmp.ne.s32.totalorder %s286, %s287
    %p299 = scmp.eq.s32.totalorder %s25, 1
    %p300 = por %p298, %p299
    %p302 = scmp.ne.s32.totalorder %s287, %s301
    %p303 = scmp.eq.s32.totalorder %s25, 0
    %p304 = por %p302, %p303
    %s305 = ssub.s32 %s19, %s26
    %p306 = scmp.eq.s32.totalorder %s305, 0
    %s308 = sadd.s32 %s307, 1
    %s309 = scalar_select %p306, %s307, %s308
    %p312 = pneg %p306
    %p313 = scmp.eq.s32.totalorder %s19, 1
    %p314 = por %p312, %p313
    %p315 = scmp.ne.s32.totalorder %s307, %s310
    %p316 = scmp.eq.s32.totalorder %s19, 0
    %p317 = por %p315, %p316
    %p318 = scmp.ne.s32.totalorder %s307, %s310
    %p319 = scmp.eq.s32.totalorder %s24, 1
    %p320 = por %p318, %p319
    %p321 = scmp.ne.s32.totalorder %s310, %s311
    %p322 = scmp.eq.s32.totalorder %s24, 0
    %p323 = por %p321, %p322
    %p324 = scmp.ne.s32.totalorder %s310, %s311
    %p325 = scmp.eq.s32.totalorder %s25, 1
    %p326 = por %p324, %p325
    %p328 = scmp.ne.s32.totalorder %s311, %s327
    %p329 = scmp.eq.s32.totalorder %s25, 0
    %p330 = por %p328, %p329
    %p331 = scmp.le.s32.totalorder 1, %s19
    %p332 = scmp.lt.s32.totalorder %s19, 3
    %p333 = pnand %p331, %p332
    %p334 = pneg %p333
    // Predicated region
    $region9: #{trainer_model_forward.2} parent=5 // pred_check
      _
    $region10: #{trainer_model_forward.2} parent=5 // pred_check_branch
      %336 = sbr.rel (%p333) target = $region12
    $region11: #{trainer_model_forward.2} parent=5 // pred_region
      %s337 = ssub.s32 %s19, 1
      // Predicated region
      $region13: #{trainer_model_forward.2} parent=11 // pred_check
        %p338 = pneg %p66
      $region14: #{trainer_model_forward.2} parent=11 // pred_check_branch
        %340 = sbr.rel (%p338) target = $region16
      $region15: #{trainer_model_forward.2} parent=11 // pred_region
        _
      $region16: #{trainer_model_forward.2} parent=11 // pred_fallthru
        _
      // Predicated region
      $region17: #{trainer_model_forward.2} parent=11 // pred_check
        %p341 = pneg %p87
      $region18: #{trainer_model_forward.2} parent=11 // pred_check_branch
        %343 = sbr.rel (%p341) target = $region20
      $region19: #{trainer_model_forward.2} parent=11 // pred_region
        _
      $region20: #{trainer_model_forward.2} parent=11 // pred_fallthru
        _
      // Predicated region
      $region21: #{trainer_model_forward.2} parent=11 // pred_check
        %p344 = pneg %p108
      $region22: #{trainer_model_forward.2} parent=11 // pred_check_branch
        %346 = sbr.rel (%p344) target = $region24
      $region23: #{trainer_model_forward.2} parent=11 // pred_region
        _
      $region24: #{trainer_model_forward.2} parent=11 // pred_fallthru
        _
      // Predicated region
      $region25: #{trainer_model_forward.2} parent=11 // pred_check
        %p347 = pneg %p129
      $region26: #{trainer_model_forward.2} parent=11 // pred_check_branch
        %349 = sbr.rel (%p347) target = $region28
      $region27: #{trainer_model_forward.2} parent=11 // pred_region
        _
      $region28: #{trainer_model_forward.2} parent=11 // pred_fallthru
        _
      // Predicated region
      $region29: #{trainer_model_forward.2} parent=11 // pred_check
        %p350 = pneg %p150
      $region30: #{trainer_model_forward.2} parent=11 // pred_check_branch
        %352 = sbr.rel (%p350) target = $region32
      $region31: #{trainer_model_forward.2} parent=11 // pred_region
        _
      $region32: #{trainer_model_forward.2} parent=11 // pred_fallthru
        _
      // Predicated region
      $region33: #{trainer_model_forward.2} parent=11 // pred_check
        %p353 = pneg %p171
      $region34: #{trainer_model_forward.2} parent=11 // pred_check_branch
        %355 = sbr.rel (%p353) target = $region36
      $region35: #{trainer_model_forward.2} parent=11 // pred_region
        _
      $region36: #{trainer_model_forward.2} parent=11 // pred_fallthru
        _
      // Predicated region
      $region37: #{trainer_model_forward.2} parent=11 // pred_check
        %p356 = pneg %p192
      $region38: #{trainer_model_forward.2} parent=11 // pred_check_branch
        %358 = sbr.rel (%p356) target = $region40
      $region39: #{trainer_model_forward.2} parent=11 // pred_region
        _
      $region40: #{trainer_model_forward.2} parent=11 // pred_fallthru
        _
      // Predicated region
      $region41: #{trainer_model_forward.2} parent=11 // pred_check
        %p359 = pneg %p213
      $region42: #{trainer_model_forward.2} parent=11 // pred_check_branch
        %361 = sbr.rel (%p359) target = $region44
      $region43: #{trainer_model_forward.2} parent=11 // pred_region
        _
      $region44: #{trainer_model_forward.2} parent=11 // pred_fallthru
        _
      // Predicated region
      $region45: #{trainer_model_forward.2} parent=11 // pred_check
        %p362 = pneg %p234
      $region46: #{trainer_model_forward.2} parent=11 // pred_check_branch
        %364 = sbr.rel (%p362) target = $region48
      $region47: #{trainer_model_forward.2} parent=11 // pred_region
        _
      $region48: #{trainer_model_forward.2} parent=11 // pred_fallthru
        _
      // Predicated region
      $region49: #{trainer_model_forward.2} parent=11 // pred_check
        %p365 = pneg %p255
      $region50: #{trainer_model_forward.2} parent=11 // pred_check_branch
        %367 = sbr.rel (%p365) target = $region52
      $region51: #{trainer_model_forward.2} parent=11 // pred_region
        _
      $region52: #{trainer_model_forward.2} parent=11 // pred_fallthru
        _
      // Predicated region
      $region53: #{trainer_model_forward.2} parent=11 // pred_check
        %p368 = pneg %p276
      $region54: #{trainer_model_forward.2} parent=11 // pred_check_branch
        %370 = sbr.rel (%p368) target = $region56
      $region55: #{trainer_model_forward.2} parent=11 // pred_region
        _
      $region56: #{trainer_model_forward.2} parent=11 // pred_fallthru
        _
      // Predicated region
      $region57: #{trainer_model_forward.2} parent=11 // pred_check
        %p371 = pneg %p297
      $region58: #{trainer_model_forward.2} parent=11 // pred_check_branch
        %373 = sbr.rel (%p371) target = $region60
      $region59: #{trainer_model_forward.2} parent=11 // pred_region
        _
      $region60: #{trainer_model_forward.2} parent=11 // pred_fallthru
        _
    $region12: #{trainer_model_forward.2} parent=5 // pred_fallthru
      _
    %p374 = scmp.lt.s32.totalorder %s19, 2
    // Predicated region
    $region61: #{trainer_model_forward.2} parent=5 // pred_check
      %p375 = pneg %p374
    $region62: #{trainer_model_forward.2} parent=5 // pred_check_branch
      %377 = sbr.rel (%p375) target = $region64
    $region63: #{trainer_model_forward.2} parent=5 // pred_region
      // Predicated region
      $region65: #{trainer_model_forward.2} parent=63 // pred_check
        %p378 = pneg %p39
      $region66: #{trainer_model_forward.2} parent=63 // pred_check_branch
        %380 = sbr.rel (%p378) target = $region68
      $region67: #{trainer_model_forward.2} parent=63 // pred_region
        %s381 = smul.u32 32, %s19
        %p382 = scmp.lt.s32.totalorder %s381, 63
        %s383 = scalar_select %p382, %s381, 63
        %s384 = smul.addr %s383, 4
        %s385 = scalar_lea.vmem %s0, %s384
        %s386 = smul.u32 32, %s19
      $region68: #{trainer_model_forward.2} parent=63 // pred_fallthru
        _
    $region64: #{trainer_model_forward.2} parent=5 // pred_fallthru
      _
    %p387 = scmp.le.s32.totalorder 1, %s19
    %p388 = scmp.lt.s32.totalorder %s19, 3
    %p389 = pnand %p387, %p388
    %p390 = pneg %p389
    // Predicated region
    $region69: #{trainer_model_forward.2} parent=5 // pred_check
      _
    $region70: #{trainer_model_forward.2} parent=5 // pred_check_branch
      %392 = sbr.rel (%p389) target = $region72
    $region71: #{trainer_model_forward.2} parent=5 // pred_region
      %s393 = ssub.s32 %s19, 1
      %s394 = smul.u32 32, %s24
      %p395 = scmp.lt.s32.totalorder %s394, 63
      %s396 = scalar_select %p395, %s394, 63
      %s397 = smul.addr %s396, 4
      %s398 = scalar_lea.vmem %s0, %s397
      %p399 = pneg %p45
      %p400 = pneg %p42
      %p401 = pneg %p66
      %p402 = pneg %p63
      %p403 = pneg %p87
      %p404 = pneg %p84
      %p405 = pneg %p108
      %p406 = pneg %p105
      %p407 = pneg %p129
      %p408 = pneg %p126
      %p409 = pneg %p150
      %p410 = pneg %p147
      %p411 = pneg %p171
      %p412 = pneg %p168
      %p413 = pneg %p192
      %p414 = pneg %p189
      %p415 = pneg %p213
      %p416 = pneg %p210
      %p417 = pneg %p234
      %p418 = pneg %p231
      %p419 = pneg %p255
      %p420 = pneg %p252
      %p421 = pneg %p276
      %p422 = pneg %p273
      %p423 = pneg %p297
      %p424 = pneg %p294
      %p425 = pneg %p323
      %p426 = pneg %p320
      %s427 = smul.u32 32, %s24
      %p428 = scmp.lt.s32.totalorder %s427, 63
      %s429 = scalar_select %p428, %s427, 63
      %s430 = smul.addr %s429, 4
      %s431 = scalar_lea.vmem %s13, %s430
      %s432 = smul.u32 32, %s24
      %p433 = scmp.lt.s32.totalorder %s432, 63
      %s434 = scalar_select %p433, %s432, 63
      %s435 = smul.addr %s434, 4
      %s436 = scalar_lea.vmem %s0, %s435
      %s437 = smul.u32 32, %s24
      %s438 = smul.u32 32, %s24
      %p439 = scmp.lt.s32.totalorder %s438, 63
      %s440 = scalar_select %p439, %s438, 63
      %s441 = smul.addr %s440, 4
      %s442 = scalar_lea.vmem %s13, %s441
      %s443 = smul.u32 32, %s24
      %v445 = vld [vmem:[%s436] sm:$0xf]
      %v446 = vld [vmem:[%s436 + $0x4] sm:$0xf]
      %v447 = vld [vmem:[%s436 + $0x8] sm:$0xf]
      %v448 = vld [vmem:[%s436 + $0xc] sm:$0xf]
      %v449 = vld [vmem:[%s436 + $0x10] sm:$0xf]
      %v450 = vld [vmem:[%s436 + $0x14] sm:$0xf]
      %v451 = vld [vmem:[%s436 + $0x18] sm:$0xf]
      %v452 = vld [vmem:[%s436 + $0x1c] sm:$0xf]
      %v453 = vld [vmem:[%s436 + $0x20] sm:$0xf]
      %v454 = vld [vmem:[%s436 + $0x24] sm:$0xf]
      %v455 = vld [vmem:[%s436 + $0x28] sm:$0xf]
      %v456 = vld [vmem:[%s436 + $0x2c] sm:$0xf]
      %v457 = vld [vmem:[%s436 + $0x30] sm:$0xf]
      %v458 = vld [vmem:[%s436 + $0x34] sm:$0xf]
      %v459 = vld [vmem:[%s436 + $0x38] sm:$0xf]
      %v460 = vld [vmem:[%s436 + $0x3c] sm:$0xf]
      %v461 = vld [vmem:[%s436 + $0x40] sm:$0xf]
      %v462 = vld [vmem:[%s436 + $0x44] sm:$0xf]
      %v463 = vld [vmem:[%s436 + $0x48] sm:$0xf]
      %v464 = vld [vmem:[%s436 + $0x4c] sm:$0xf]
      %v465 = vld [vmem:[%s436 + $0x50] sm:$0xf]
      %v466 = vld [vmem:[%s436 + $0x54] sm:$0xf]
      %v467 = vld [vmem:[%s436 + $0x58] sm:$0xf]
      %v468 = vld [vmem:[%s436 + $0x5c] sm:$0xf]
      %v469 = vld [vmem:[%s436 + $0x60] sm:$0xf]
      %v470 = vld [vmem:[%s436 + $0x64] sm:$0xf]
      %v471 = vld [vmem:[%s436 + $0x68] sm:$0xf]
      %v472 = vld [vmem:[%s436 + $0x6c] sm:$0xf]
      %v473 = vld [vmem:[%s436 + $0x70] sm:$0xf]
      %v474 = vld [vmem:[%s436 + $0x74] sm:$0xf]
      %v475 = vld [vmem:[%s436 + $0x78] sm:$0xf]
      %v476 = vld [vmem:[%s436 + $0x7c] sm:$0xf]
      %v477 = vld [vmem:[%s1] sm:$0xff]
      %v478 = vld [vmem:[%s1 + $0x8] sm:$0xff]
      %v479 = vld [vmem:[%s1 + $0x10] sm:$0xff]
      %v480 = vld [vmem:[%s1 + $0x18] sm:$0xff]
      %v481 = vld [vmem:[%s1 + $0x20] sm:$0xff]
      %v482 = vld [vmem:[%s1 + $0x28] sm:$0xff]
      %v483 = vld [vmem:[%s1 + $0x30] sm:$0xff]
      %v484 = vld [vmem:[%s1 + $0x38] sm:$0xff]
      %v485 = vld [vmem:[%s1 + $0x40] sm:$0xff]
      %v486 = vld [vmem:[%s1 + $0x48] sm:$0xff]
      %v487 = vld [vmem:[%s1 + $0x50] sm:$0xff]
      %v488 = vld [vmem:[%s1 + $0x58] sm:$0xff]
      %v489 = vld [vmem:[%s1 + $0x60] sm:$0xff]
      %v490 = vld [vmem:[%s1 + $0x68] sm:$0xff]
      %v491 = vld [vmem:[%s1 + $0x70] sm:$0xff]
      %v492 = vld [vmem:[%s1 + $0x78] sm:$0xff]
      %v493 = vld [vmem:[%s2] sm:$0x3]
      %v495 = vlaneseq
      %v496 = vshrl.u32 %v495, 7
      %v497 = vsub.s32 0, %v496
      %v498 = vrot.slane %v493, %v497
      %v499 = vlaneseq
      %v500 = vshrl.u32 %v499, 7
      %v501 = vsub.s32 1, %v500
      %v502 = vrot.slane %v493, %v501
      %v537 = vunpack.c.l.b16 %v445
      %v538 = vunpack.c.l.b16 %v446
      %v539 = vunpack.c.l.b16 %v447
      %v540 = vunpack.c.l.b16 %v448
      %v541 = vunpack.c.l.b16 %v449
      %v542 = vunpack.c.l.b16 %v450
      %v543 = vunpack.c.l.b16 %v451
      %v544 = vunpack.c.l.b16 %v452
      %v545 = vunpack.c.l.b16 %v453
      %v546 = vunpack.c.l.b16 %v454
      %v547 = vunpack.c.l.b16 %v455
      %v548 = vunpack.c.l.b16 %v456
      %v549 = vunpack.c.l.b16 %v457
      %v550 = vunpack.c.l.b16 %v458
      %v551 = vunpack.c.l.b16 %v459
      %v552 = vunpack.c.l.b16 %v460
      %v553 = vunpack.c.l.b16 %v461
      %v554 = vunpack.c.l.b16 %v462
      %v555 = vunpack.c.l.b16 %v463
      %v556 = vunpack.c.l.b16 %v464
      %v557 = vunpack.c.l.b16 %v465
      %v558 = vunpack.c.l.b16 %v466
      %v559 = vunpack.c.l.b16 %v467
      %v560 = vunpack.c.l.b16 %v468
      %v561 = vunpack.c.l.b16 %v469
      %v562 = vunpack.c.l.b16 %v470
      %v563 = vunpack.c.l.b16 %v471
      %v564 = vunpack.c.l.b16 %v472
      %v565 = vunpack.c.l.b16 %v473
      %v566 = vunpack.c.l.b16 %v474
      %v567 = vunpack.c.l.b16 %v475
      %v568 = vunpack.c.l.b16 %v476
      %v569 = vpack.c.b16 %v538, %v537
      %v570 = vpack.c.b16 %v540, %v539
      %v571 = vpack.c.b16 %v542, %v541
      %v572 = vpack.c.b16 %v544, %v543
      %v573 = vpack.c.b16 %v546, %v545
      %v574 = vpack.c.b16 %v548, %v547
      %v575 = vpack.c.b16 %v550, %v549
      %v576 = vpack.c.b16 %v552, %v551
      %v577 = vpack.c.b16 %v554, %v553
      %v578 = vpack.c.b16 %v556, %v555
      %v579 = vpack.c.b16 %v558, %v557
      %v580 = vpack.c.b16 %v560, %v559
      %v581 = vpack.c.b16 %v562, %v561
      %v582 = vpack.c.b16 %v564, %v563
      %v583 = vpack.c.b16 %v566, %v565
      %v584 = vpack.c.b16 %v568, %v567
      %v617 = vunpack.c.l.b16 %v477
      %v618 = vunpack.c.h.b16 %v477
      %v619 = vunpack.c.l.b16 %v478
      %v620 = vunpack.c.h.b16 %v478
      %v621 = vunpack.c.l.b16 %v479
      %v622 = vunpack.c.h.b16 %v479
      %v623 = vunpack.c.l.b16 %v480
      %v624 = vunpack.c.h.b16 %v480
      %v625 = vunpack.c.l.b16 %v481
      %v626 = vunpack.c.h.b16 %v481
      %v627 = vunpack.c.l.b16 %v482
      %v628 = vunpack.c.h.b16 %v482
      %v629 = vunpack.c.l.b16 %v483
      %v630 = vunpack.c.h.b16 %v483
      %v631 = vunpack.c.l.b16 %v484
      %v632 = vunpack.c.h.b16 %v484
      %v633 = vunpack.c.l.b16 %v485
      %v634 = vunpack.c.h.b16 %v485
      %v635 = vunpack.c.l.b16 %v486
      %v636 = vunpack.c.h.b16 %v486
      %v637 = vunpack.c.l.b16 %v487
      %v638 = vunpack.c.h.b16 %v487
      %v639 = vunpack.c.l.b16 %v488
      %v640 = vunpack.c.h.b16 %v488
      %v641 = vunpack.c.l.b16 %v489
      %v642 = vunpack.c.h.b16 %v489
      %v643 = vunpack.c.l.b16 %v490
      %v644 = vunpack.c.h.b16 %v490
      %v645 = vunpack.c.l.b16 %v491
      %v646 = vunpack.c.h.b16 %v491
      %v647 = vunpack.c.l.b16 %v492
      %v648 = vunpack.c.h.b16 %v492
      %v649 = vpack.c.b16 %v619, %v617
      %v650 = vpack.c.b16 %v620, %v618
      %v651 = vpack.c.b16 %v623, %v621
      %v652 = vpack.c.b16 %v624, %v622
      %v653 = vpack.c.b16 %v627, %v625
      %v654 = vpack.c.b16 %v628, %v626
      %v655 = vpack.c.b16 %v631, %v629
      %v656 = vpack.c.b16 %v632, %v630
      %v657 = vpack.c.b16 %v635, %v633
      %v658 = vpack.c.b16 %v636, %v634
      %v659 = vpack.c.b16 %v639, %v637
      %v660 = vpack.c.b16 %v640, %v638
      %v661 = vpack.c.b16 %v643, %v641
      %v662 = vpack.c.b16 %v644, %v642
      %v663 = vpack.c.b16 %v647, %v645
      %v664 = vpack.c.b16 %v648, %v646
      %681 = vmatprep.subr.bf16.mxu0 %v650
      %682 = vmatpush1.bf16.msra.mxu0 %v649
      %683 = vmatprep.subr.bf16.mxu0 %v652
      %684 = vmatpush1.bf16.msra.mxu0 %v651
      %685 = vmatprep.subr.bf16.mxu0 %v654
      %686 = vmatpush1.bf16.msra.mxu0 %v653
      %687 = vmatprep.subr.bf16.mxu0 %v656
      %688 = vmatpush1.bf16.msra.mxu0 %v655
      %689 = vmatprep.subr.bf16.mxu0 %v658
      %690 = vmatpush1.bf16.msra.mxu0 %v657
      %691 = vmatprep.subr.bf16.mxu0 %v660
      %692 = vmatpush1.bf16.msra.mxu0 %v659
      %693 = vmatprep.subr.bf16.mxu0 %v662
      %694 = vmatpush1.bf16.msra.mxu0 %v661
      %695 = vmatprep.subr.bf16.mxu0 %v664
      %696 = vmatpush1.bf16.msra.mxu0 %v663
      %697 = vmatprep.subr.bf16.mxu0 0
      %698 = vmatpush1.bf16.msra.mxu0 0
      %699 = vmatprep.subr.bf16.mxu0 0
      %700 = vmatpush1.bf16.msra.mxu0 0
      %701 = vmatprep.subr.bf16.mxu0 0
      %702 = vmatpush1.bf16.msra.mxu0 0
      %703 = vmatprep.subr.bf16.mxu0 0
      %704 = vmatpush1.bf16.msra.mxu0 0
      %705 = vmatprep.subr.bf16.mxu0 0
      %706 = vmatpush1.bf16.msra.mxu0 0
      %707 = vmatprep.subr.bf16.mxu0 0
      %708 = vmatpush1.bf16.msra.mxu0 0
      %709 = vmatprep.subr.bf16.mxu0 0
      %710 = vmatpush1.bf16.msra.mxu0 0
      %711 = vmatprep.subr.bf16.mxu0 0
      %712 = vmatpush1.bf16.msra.mxu0 0
      %713 = vmatprep.mubr.bf16.mxu0 0
      %714 = vmatmul.mubr.bf16.gmra.mrb[0].mxu0 %v569
      %v715 = vpop.f32.mrb[0].mxu0
      %v716 = vadd.f32 %v498, %v715
      %v717 = vpop.f32.mrb[0].mxu0
      %v718 = vadd.f32 %v502, %v717
      %v719 = vpop.f32.mrb[0].mxu0
      %v720 = vadd.f32 %v498, %v719
      %v721 = vpop.f32.mrb[0].mxu0
      %v722 = vadd.f32 %v502, %v721
      %723 = vmatprep.mubr.bf16.mxu0 0
      %724 = vmatmul.mubr.bf16.gmra.mrb[0].mxu0 %v570
      %v725 = vpop.f32.mrb[0].mxu0
      %v726 = vadd.f32 %v498, %v725
      %v727 = vpop.f32.mrb[0].mxu0
      %v728 = vadd.f32 %v502, %v727
      %v729 = vpop.f32.mrb[0].mxu0
      %v730 = vadd.f32 %v498, %v729
      %v731 = vpop.f32.mrb[0].mxu0
      %v732 = vadd.f32 %v502, %v731
      %733 = vmatprep.mubr.bf16.mxu0 0
      %734 = vmatmul.mubr.bf16.gmra.mrb[0].mxu0 %v571
      %v735 = vpop.f32.mrb[0].mxu0
      %v736 = vadd.f32 %v498, %v735
      %v737 = vpop.f32.mrb[0].mxu0
      %v738 = vadd.f32 %v502, %v737
      %v739 = vpop.f32.mrb[0].mxu0
      %v740 = vadd.f32 %v498, %v739
      %v741 = vpop.f32.mrb[0].mxu0
      %v742 = vadd.f32 %v502, %v741
      %743 = vmatprep.mubr.bf16.mxu0 0
      %744 = vmatmul.mubr.bf16.gmra.mrb[0].mxu0 %v572
      %v745 = vpop.f32.mrb[0].mxu0
      %v746 = vadd.f32 %v498, %v745
      %v747 = vpop.f32.mrb[0].mxu0
      %v748 = vadd.f32 %v502, %v747
      %v749 = vpop.f32.mrb[0].mxu0
      %v750 = vadd.f32 %v498, %v749
      %v751 = vpop.f32.mrb[0].mxu0
      %v752 = vadd.f32 %v502, %v751
      %753 = vmatprep.mubr.bf16.mxu0 0
      %754 = vmatmul.mubr.bf16.gmra.mrb[0].mxu0 %v573
      %v755 = vpop.f32.mrb[0].mxu0
      %v756 = vadd.f32 %v498, %v755
      %v757 = vpop.f32.mrb[0].mxu0
      %v758 = vadd.f32 %v502, %v757
      %v759 = vpop.f32.mrb[0].mxu0
      %v760 = vadd.f32 %v498, %v759
      %v761 = vpop.f32.mrb[0].mxu0
      %v762 = vadd.f32 %v502, %v761
      %763 = vmatprep.mubr.bf16.mxu0 0
      %764 = vmatmul.mubr.bf16.gmra.mrb[0].mxu0 %v574
      %v765 = vpop.f32.mrb[0].mxu0
      %v766 = vadd.f32 %v498, %v765
      %v767 = vpop.f32.mrb[0].mxu0
      %v768 = vadd.f32 %v502, %v767
      %v769 = vpop.f32.mrb[0].mxu0
      %v770 = vadd.f32 %v498, %v769
      %v771 = vpop.f32.mrb[0].mxu0
      %v772 = vadd.f32 %v502, %v771
      %773 = vmatprep.mubr.bf16.mxu0 0
      %774 = vmatmul.mubr.bf16.gmra.mrb[0].mxu0 %v575
      %v775 = vpop.f32.mrb[0].mxu0
      %v776 = vadd.f32 %v498, %v775
      %v777 = vpop.f32.mrb[0].mxu0
      %v778 = vadd.f32 %v502, %v777
      %v779 = vpop.f32.mrb[0].mxu0
      %v780 = vadd.f32 %v498, %v779
      %v781 = vpop.f32.mrb[0].mxu0
      %v782 = vadd.f32 %v502, %v781
      %783 = vmatprep.mubr.bf16.mxu0 0
      %784 = vmatmul.mubr.bf16.gmra.mrb[0].mxu0 %v576
      %v785 = vpop.f32.mrb[0].mxu0
      %v786 = vadd.f32 %v498, %v785
      %v787 = vpop.f32.mrb[0].mxu0
      %v788 = vadd.f32 %v502, %v787
      %v789 = vpop.f32.mrb[0].mxu0
      %v790 = vadd.f32 %v498, %v789
      %v791 = vpop.f32.mrb[0].mxu0
      %v792 = vadd.f32 %v502, %v791
      %793 = vmatprep.mubr.bf16.mxu0 0
      %794 = vmatmul.mubr.bf16.gmra.mrb[0].mxu0 %v577
      %v795 = vpop.f32.mrb[0].mxu0
      %v796 = vadd.f32 %v498, %v795
      %v797 = vpop.f32.mrb[0].mxu0
      %v798 = vadd.f32 %v502, %v797
      %v799 = vpop.f32.mrb[0].mxu0
      %v800 = vadd.f32 %v498, %v799
      %v801 = vpop.f32.mrb[0].mxu0
      %v802 = vadd.f32 %v502, %v801
      %803 = vmatprep.mubr.bf16.mxu0 0
      %804 = vmatmul.mubr.bf16.gmra.mrb[0].mxu0 %v578
      %v805 = vpop.f32.mrb[0].mxu0
      %v806 = vadd.f32 %v498, %v805
      %v807 = vpop.f32.mrb[0].mxu0
      %v808 = vadd.f32 %v502, %v807
      %v809 = vpop.f32.mrb[0].mxu0
      %v810 = vadd.f32 %v498, %v809
      %v811 = vpop.f32.mrb[0].mxu0
      %v812 = vadd.f32 %v502, %v811
      %813 = vmatprep.mubr.bf16.mxu0 0
      %814 = vmatmul.mubr.bf16.gmra.mrb[0].mxu0 %v579
      %v815 = vpop.f32.mrb[0].mxu0
      %v816 = vadd.f32 %v498, %v815
      %v817 = vpop.f32.mrb[0].mxu0
      %v818 = vadd.f32 %v502, %v817
      %v819 = vpop.f32.mrb[0].mxu0
      %v820 = vadd.f32 %v498, %v819
      %v821 = vpop.f32.mrb[0].mxu0
      %v822 = vadd.f32 %v502, %v821
      %823 = vmatprep.mubr.bf16.mxu0 0
      %824 = vmatmul.mubr.bf16.gmra.mrb[0].mxu0 %v580
      %v825 = vpop.f32.mrb[0].mxu0
      %v826 = vadd.f32 %v498, %v825
      %v827 = vpop.f32.mrb[0].mxu0
      %v828 = vadd.f32 %v502, %v827
      %v829 = vpop.f32.mrb[0].mxu0
      %v830 = vadd.f32 %v498, %v829
      %v831 = vpop.f32.mrb[0].mxu0
      %v832 = vadd.f32 %v502, %v831
      %833 = vmatprep.mubr.bf16.mxu0 0
      %834 = vmatmul.mubr.bf16.gmra.mrb[0].mxu0 %v581
      %v835 = vpop.f32.mrb[0].mxu0
      %v836 = vadd.f32 %v498, %v835
      %v837 = vpop.f32.mrb[0].mxu0
      %v838 = vadd.f32 %v502, %v837
      %v839 = vpop.f32.mrb[0].mxu0
      %v840 = vadd.f32 %v498, %v839
      %v841 = vpop.f32.mrb[0].mxu0
      %v842 = vadd.f32 %v502, %v841
      %843 = vmatprep.mubr.bf16.mxu0 0
      %844 = vmatmul.mubr.bf16.gmra.mrb[0].mxu0 %v582
      %v845 = vpop.f32.mrb[0].mxu0
      %v846 = vadd.f32 %v498, %v845
      %v847 = vpop.f32.mrb[0].mxu0
      %v848 = vadd.f32 %v502, %v847
      %v849 = vpop.f32.mrb[0].mxu0
      %v850 = vadd.f32 %v498, %v849
      %v851 = vpop.f32.mrb[0].mxu0
      %v852 = vadd.f32 %v502, %v851
      %853 = vmatprep.mubr.bf16.mxu0 0
      %854 = vmatmul.mubr.bf16.gmra.mrb[0].mxu0 %v583
      %v855 = vpop.f32.mrb[0].mxu0
      %v856 = vadd.f32 %v498, %v855
      %v857 = vpop.f32.mrb[0].mxu0
      %v858 = vadd.f32 %v502, %v857
      %v859 = vpop.f32.mrb[0].mxu0
      %v860 = vadd.f32 %v498, %v859
      %v861 = vpop.f32.mrb[0].mxu0
      %v862 = vadd.f32 %v502, %v861
      %863 = vmatprep.mubr.bf16.mxu0 0
      %864 = vmatmul.mubr.bf16.gmra.mrb[0].mxu0 %v584
      %v865 = vpop.f32.mrb[0].mxu0
      %v866 = vadd.f32 %v498, %v865
      %v867 = vpop.f32.mrb[0].mxu0
      %v868 = vadd.f32 %v502, %v867
      %v869 = vpop.f32.mrb[0].mxu0
      %v870 = vadd.f32 %v498, %v869
      %v871 = vpop.f32.mrb[0].mxu0
      %v872 = vadd.f32 %v502, %v871
      %873 = vdwg.mxu0
      %v874 = vmul.f32 %v716, %v716
      %v875 = vmul.f32 %v718, %v718
      %v876 = vmul.f32 %v720, %v720
      %v877 = vmul.f32 %v722, %v722
      %v878 = vmul.f32 %v726, %v726
      %v879 = vmul.f32 %v728, %v728
      %v880 = vmul.f32 %v730, %v730
      %v881 = vmul.f32 %v732, %v732
      %v882 = vmul.f32 %v736, %v736
      %v883 = vmul.f32 %v738, %v738
      %v884 = vmul.f32 %v740, %v740
      %v885 = vmul.f32 %v742, %v742
      %v886 = vmul.f32 %v746, %v746
      %v887 = vmul.f32 %v748, %v748
      %v888 = vmul.f32 %v750, %v750
      %v889 = vmul.f32 %v752, %v752
      %v890 = vmul.f32 %v756, %v756
      %v891 = vmul.f32 %v758, %v758
      %v892 = vmul.f32 %v760, %v760
      %v893 = vmul.f32 %v762, %v762
      %v894 = vmul.f32 %v766, %v766
      %v895 = vmul.f32 %v768, %v768
      %v896 = vmul.f32 %v770, %v770
      %v897 = vmul.f32 %v772, %v772
      %v898 = vmul.f32 %v776, %v776
      %v899 = vmul.f32 %v778, %v778
      %v900 = vmul.f32 %v780, %v780
      %v901 = vmul.f32 %v782, %v782
      %v902 = vmul.f32 %v786, %v786
      %v903 = vmul.f32 %v788, %v788
      %v904 = vmul.f32 %v790, %v790
      %v905 = vmul.f32 %v792, %v792
      %v906 = vmul.f32 %v796, %v796
      %v907 = vmul.f32 %v798, %v798
      %v908 = vmul.f32 %v800, %v800
      %v909 = vmul.f32 %v802, %v802
      %v910 = vmul.f32 %v806, %v806
      %v911 = vmul.f32 %v808, %v808
      %v912 = vmul.f32 %v810, %v810
      %v913 = vmul.f32 %v812, %v812
      %v914 = vmul.f32 %v816, %v816
      %v915 = vmul.f32 %v818, %v818
      %v916 = vmul.f32 %v820, %v820
      %v917 = vmul.f32 %v822, %v822
      %v918 = vmul.f32 %v826, %v826
      %v919 = vmul.f32 %v828, %v828
      %v920 = vmul.f32 %v830, %v830
      %v921 = vmul.f32 %v832, %v832
      %v922 = vmul.f32 %v836, %v836
      %v923 = vmul.f32 %v838, %v838
      %v924 = vmul.f32 %v840, %v840
      %v925 = vmul.f32 %v842, %v842
      %v926 = vmul.f32 %v846, %v846
      %v927 = vmul.f32 %v848, %v848
      %v928 = vmul.f32 %v850, %v850
      %v929 = vmul.f32 %v852, %v852
      %v930 = vmul.f32 %v856, %v856
      %v931 = vmul.f32 %v858, %v858
      %v932 = vmul.f32 %v860, %v860
      %v933 = vmul.f32 %v862, %v862
      %v934 = vmul.f32 %v866, %v866
      %v935 = vmul.f32 %v868, %v868
      %v936 = vmul.f32 %v870, %v870
      %v937 = vmul.f32 %v872, %v872
      %v938 = vmul.f32 %v716, %v874
      %v939 = vmul.f32 %v718, %v875
      %v940 = vmul.f32 %v720, %v876
      %v941 = vmul.f32 %v722, %v877
      %v942 = vmul.f32 %v726, %v878
      %v943 = vmul.f32 %v728, %v879
      %v944 = vmul.f32 %v730, %v880
      %v945 = vmul.f32 %v732, %v881
      %v946 = vmul.f32 %v736, %v882
      %v947 = vmul.f32 %v738, %v883
      %v948 = vmul.f32 %v740, %v884
      %v949 = vmul.f32 %v742, %v885
      %v950 = vmul.f32 %v746, %v886
      %v951 = vmul.f32 %v748, %v887
      %v952 = vmul.f32 %v750, %v888
      %v953 = vmul.f32 %v752, %v889
      %v954 = vmul.f32 %v756, %v890
      %v955 = vmul.f32 %v758, %v891
      %v956 = vmul.f32 %v760, %v892
      %v957 = vmul.f32 %v762, %v893
      %v958 = vmul.f32 %v766, %v894
      %v959 = vmul.f32 %v768, %v895
      %v960 = vmul.f32 %v770, %v896
      %v961 = vmul.f32 %v772, %v897
      %v962 = vmul.f32 %v776, %v898
      %v963 = vmul.f32 %v778, %v899
      %v964 = vmul.f32 %v780, %v900
      %v965 = vmul.f32 %v782, %v901
      %v966 = vmul.f32 %v786, %v902
      %v967 = vmul.f32 %v788, %v903
      %v968 = vmul.f32 %v790, %v904
      %v969 = vmul.f32 %v792, %v905
      %v970 = vmul.f32 %v796, %v906
      %v971 = vmul.f32 %v798, %v907
      %v972 = vmul.f32 %v800, %v908
      %v973 = vmul.f32 %v802, %v909
      %v974 = vmul.f32 %v806, %v910
      %v975 = vmul.f32 %v808, %v911
      %v976 = vmul.f32 %v810, %v912
      %v977 = vmul.f32 %v812, %v913
      %v978 = vmul.f32 %v816, %v914
      %v979 = vmul.f32 %v818, %v915
      %v980 = vmul.f32 %v820, %v916
      %v981 = vmul.f32 %v822, %v917
      %v982 = vmul.f32 %v826, %v918
      %v983 = vmul.f32 %v828, %v919
      %v984 = vmul.f32 %v830, %v920
      %v985 = vmul.f32 %v832, %v921
      %v986 = vmul.f32 %v836, %v922
      %v987 = vmul.f32 %v838, %v923
      %v988 = vmul.f32 %v840, %v924
      %v989 = vmul.f32 %v842, %v925
      %v990 = vmul.f32 %v846, %v926
      %v991 = vmul.f32 %v848, %v927
      %v992 = vmul.f32 %v850, %v928
      %v993 = vmul.f32 %v852, %v929
      %v994 = vmul.f32 %v856, %v930
      %v995 = vmul.f32 %v858, %v931
      %v996 = vmul.f32 %v860, %v932
      %v997 = vmul.f32 %v862, %v933
      %v998 = vmul.f32 %v866, %v934
      %v999 = vmul.f32 %v868, %v935
      %v1000 = vmul.f32 %v870, %v936
      %v1001 = vmul.f32 %v872, %v937
      %v1002 = vmul.f32 %v938, 0.044715
      %v1003 = vmul.f32 %v939, 0.044715
      %v1004 = vmul.f32 %v940, 0.044715
      %v1005 = vmul.f32 %v941, 0.044715
      %v1006 = vmul.f32 %v942, 0.044715
      %v1007 = vmul.f32 %v943, 0.044715
      %v1008 = vmul.f32 %v944, 0.044715
      %v1009 = vmul.f32 %v945, 0.044715
      %v1010 = vmul.f32 %v946, 0.044715
      %v1011 = vmul.f32 %v947, 0.044715
      %v1012 = vmul.f32 %v948, 0.044715
      %v1013 = vmul.f32 %v949, 0.044715
      %v1014 = vmul.f32 %v950, 0.044715
      %v1015 = vmul.f32 %v951, 0.044715
      %v1016 = vmul.f32 %v952, 0.044715
      %v1017 = vmul.f32 %v953, 0.044715
      %v1018 = vmul.f32 %v954, 0.044715
      %v1019 = vmul.f32 %v955, 0.044715
      %v1020 = vmul.f32 %v956, 0.044715
      %v1021 = vmul.f32 %v957, 0.044715
      %v1022 = vmul.f32 %v958, 0.044715
      %v1023 = vmul.f32 %v959, 0.044715
      %v1024 = vmul.f32 %v960, 0.044715
      %v1025 = vmul.f32 %v961, 0.044715
      %v1026 = vmul.f32 %v962, 0.044715
      %v1027 = vmul.f32 %v963, 0.044715
      %v1028 = vmul.f32 %v964, 0.044715
      %v1029 = vmul.f32 %v965, 0.044715
      %v1030 = vmul.f32 %v966, 0.044715
      %v1031 = vmul.f32 %v967, 0.044715
      %v1032 = vmul.f32 %v968, 0.044715
      %v1033 = vmul.f32 %v969, 0.044715
      %v1034 = vmul.f32 %v970, 0.044715
      %v1035 = vmul.f32 %v971, 0.044715
      %v1036 = vmul.f32 %v972, 0.044715
      %v1037 = vmul.f32 %v973, 0.044715
      %v1038 = vmul.f32 %v974, 0.044715
      %v1039 = vmul.f32 %v975, 0.044715
      %v1040 = vmul.f32 %v976, 0.044715
      %v1041 = vmul.f32 %v977, 0.044715
      %v1042 = vmul.f32 %v978, 0.044715
      %v1043 = vmul.f32 %v979, 0.044715
      %v1044 = vmul.f32 %v980, 0.044715
      %v1045 = vmul.f32 %v981, 0.044715
      %v1046 = vmul.f32 %v982, 0.044715
      %v1047 = vmul.f32 %v983, 0.044715
      %v1048 = vmul.f32 %v984, 0.044715
      %v1049 = vmul.f32 %v985, 0.044715
      %v1050 = vmul.f32 %v986, 0.044715
      %v1051 = vmul.f32 %v987, 0.044715
      %v1052 = vmul.f32 %v988, 0.044715
      %v1053 = vmul.f32 %v989, 0.044715
      %v1054 = vmul.f32 %v990, 0.044715
      %v1055 = vmul.f32 %v991, 0.044715
      %v1056 = vmul.f32 %v992, 0.044715
      %v1057 = vmul.f32 %v993, 0.044715
      %v1058 = vmul.f32 %v994, 0.044715
      %v1059 = vmul.f32 %v995, 0.044715
      %v1060 = vmul.f32 %v996, 0.044715
      %v1061 = vmul.f32 %v997, 0.044715
      %v1062 = vmul.f32 %v998, 0.044715
      %v1063 = vmul.f32 %v999, 0.044715
      %v1064 = vmul.f32 %v1000, 0.044715
      %v1065 = vmul.f32 %v1001, 0.044715
      %v1066 = vadd.f32 %v716, %v1002
      %v1067 = vadd.f32 %v718, %v1003
      %v1068 = vadd.f32 %v720, %v1004
      %v1069 = vadd.f32 %v722, %v1005
      %v1070 = vadd.f32 %v726, %v1006
      %v1071 = vadd.f32 %v728, %v1007
      %v1072 = vadd.f32 %v730, %v1008
      %v1073 = vadd.f32 %v732, %v1009
      %v1074 = vadd.f32 %v736, %v1010
      %v1075 = vadd.f32 %v738, %v1011
      %v1076 = vadd.f32 %v740, %v1012
      %v1077 = vadd.f32 %v742, %v1013
      %v1078 = vadd.f32 %v746, %v1014
      %v1079 = vadd.f32 %v748, %v1015
      %v1080 = vadd.f32 %v750, %v1016
      %v1081 = vadd.f32 %v752, %v1017
      %v1082 = vadd.f32 %v756, %v1018
      %v1083 = vadd.f32 %v758, %v1019
      %v1084 = vadd.f32 %v760, %v1020
      %v1085 = vadd.f32 %v762, %v1021
      %v1086 = vadd.f32 %v766, %v1022
      %v1087 = vadd.f32 %v768, %v1023
      %v1088 = vadd.f32 %v770, %v1024
      %v1089 = vadd.f32 %v772, %v1025
      %v1090 = vadd.f32 %v776, %v1026
      %v1091 = vadd.f32 %v778, %v1027
      %v1092 = vadd.f32 %v780, %v1028
      %v1093 = vadd.f32 %v782, %v1029
      %v1094 = vadd.f32 %v786, %v1030
      %v1095 = vadd.f32 %v788, %v1031
      %v1096 = vadd.f32 %v790, %v1032
      %v1097 = vadd.f32 %v792, %v1033
      %v1098 = vadd.f32 %v796, %v1034
      %v1099 = vadd.f32 %v798, %v1035
      %v1100 = vadd.f32 %v800, %v1036
      %v1101 = vadd.f32 %v802, %v1037
      %v1102 = vadd.f32 %v806, %v1038
      %v1103 = vadd.f32 %v808, %v1039
      %v1104 = vadd.f32 %v810, %v1040
      %v1105 = vadd.f32 %v812, %v1041
      %v1106 = vadd.f32 %v816, %v1042
      %v1107 = vadd.f32 %v818, %v1043
      %v1108 = vadd.f32 %v820, %v1044
      %v1109 = vadd.f32 %v822, %v1045
      %v1110 = vadd.f32 %v826, %v1046
      %v1111 = vadd.f32 %v828, %v1047
      %v1112 = vadd.f32 %v830, %v1048
      %v1113 = vadd.f32 %v832, %v1049
      %v1114 = vadd.f32 %v836, %v1050
      %v1115 = vadd.f32 %v838, %v1051
      %v1116 = vadd.f32 %v840, %v1052
      %v1117 = vadd.f32 %v842, %v1053
      %v1118 = vadd.f32 %v846, %v1054
      %v1119 = vadd.f32 %v848, %v1055
      %v1120 = vadd.f32 %v850, %v1056
      %v1121 = vadd.f32 %v852, %v1057
      %v1122 = vadd.f32 %v856, %v1058
      %v1123 = vadd.f32 %v858, %v1059
      %v1124 = vadd.f32 %v860, %v1060
      %v1125 = vadd.f32 %v862, %v1061
      %v1126 = vadd.f32 %v866, %v1062
      %v1127 = vadd.f32 %v868, %v1063
      %v1128 = vadd.f32 %v870, %v1064
      %v1129 = vadd.f32 %v872, %v1065
      %v1130 = vmul.f32 %v1066, 0.7978846
      %v1131 = vmul.f32 %v1067, 0.7978846
      %v1132 = vmul.f32 %v1068, 0.7978846
      %v1133 = vmul.f32 %v1069, 0.7978846
      %v1134 = vmul.f32 %v1070, 0.7978846
      %v1135 = vmul.f32 %v1071, 0.7978846
      %v1136 = vmul.f32 %v1072, 0.7978846
      %v1137 = vmul.f32 %v1073, 0.7978846
      %v1138 = vmul.f32 %v1074, 0.7978846
      %v1139 = vmul.f32 %v1075, 0.7978846
      %v1140 = vmul.f32 %v1076, 0.7978846
      %v1141 = vmul.f32 %v1077, 0.7978846
      %v1142 = vmul.f32 %v1078, 0.7978846
      %v1143 = vmul.f32 %v1079, 0.7978846
      %v1144 = vmul.f32 %v1080, 0.7978846
      %v1145 = vmul.f32 %v1081, 0.7978846
      %v1146 = vmul.f32 %v1082, 0.7978846
      %v1147 = vmul.f32 %v1083, 0.7978846
      %v1148 = vmul.f32 %v1084, 0.7978846
      %v1149 = vmul.f32 %v1085, 0.7978846
      %v1150 = vmul.f32 %v1086, 0.7978846
      %v1151 = vmul.f32 %v1087, 0.7978846
      %v1152 = vmul.f32 %v1088, 0.7978846
      %v1153 = vmul.f32 %v1089, 0.7978846
      %v1154 = vmul.f32 %v1090, 0.7978846
      %v1155 = vmul.f32 %v1091, 0.7978846
      %v1156 = vmul.f32 %v1092, 0.7978846
      %v1157 = vmul.f32 %v1093, 0.7978846
      %v1158 = vmul.f32 %v1094, 0.7978846
      %v1159 = vmul.f32 %v1095, 0.7978846
      %v1160 = vmul.f32 %v1096, 0.7978846
      %v1161 = vmul.f32 %v1097, 0.7978846
      %v1162 = vmul.f32 %v1098, 0.7978846
      %v1163 = vmul.f32 %v1099, 0.7978846
      %v1164 = vmul.f32 %v1100, 0.7978846
      %v1165 = vmul.f32 %v1101, 0.7978846
      %v1166 = vmul.f32 %v1102, 0.7978846
      %v1167 = vmul.f32 %v1103, 0.7978846
      %v1168 = vmul.f32 %v1104, 0.7978846
      %v1169 = vmul.f32 %v1105, 0.7978846
      %v1170 = vmul.f32 %v1106, 0.7978846
      %v1171 = vmul.f32 %v1107, 0.7978846
      %v1172 = vmul.f32 %v1108, 0.7978846
      %v1173 = vmul.f32 %v1109, 0.7978846
      %v1174 = vmul.f32 %v1110, 0.7978846
      %v1175 = vmul.f32 %v1111, 0.7978846
      %v1176 = vmul.f32 %v1112, 0.7978846
      %v1177 = vmul.f32 %v1113, 0.7978846
      %v1178 = vmul.f32 %v1114, 0.7978846
      %v1179 = vmul.f32 %v1115, 0.7978846
      %v1180 = vmul.f32 %v1116, 0.7978846
      %v1181 = vmul.f32 %v1117, 0.7978846
      %v1182 = vmul.f32 %v1118, 0.7978846
      %v1183 = vmul.f32 %v1119, 0.7978846
      %v1184 = vmul.f32 %v1120, 0.7978846
      %v1185 = vmul.f32 %v1121, 0.7978846
      %v1186 = vmul.f32 %v1122, 0.7978846
      %v1187 = vmul.f32 %v1123, 0.7978846
      %v1188 = vmul.f32 %v1124, 0.7978846
      %v1189 = vmul.f32 %v1125, 0.7978846
      %v1190 = vmul.f32 %v1126, 0.7978846
      %v1191 = vmul.f32 %v1127, 0.7978846
      %v1192 = vmul.f32 %v1128, 0.7978846
      %v1193 = vmul.f32 %v1129, 0.7978846
      %v1194 = vtanh.pop %v1130
      %v1195 = vtanh.pop %v1131
      %v1196 = vtanh.pop %v1132
      %v1197 = vtanh.pop %v1133
      %v1198 = vtanh.pop %v1134
      %v1199 = vtanh.pop %v1135
      %v1200 = vtanh.pop %v1136
      %v1201 = vtanh.pop %v1137
      %v1202 = vtanh.pop %v1138
      %v1203 = vtanh.pop %v1139
      %v1204 = vtanh.pop %v1140
      %v1205 = vtanh.pop %v1141
      %v1206 = vtanh.pop %v1142
      %v1207 = vtanh.pop %v1143
      %v1208 = vtanh.pop %v1144
      %v1209 = vtanh.pop %v1145
      %v1210 = vtanh.pop %v1146
      %v1211 = vtanh.pop %v1147
      %v1212 = vtanh.pop %v1148
      %v1213 = vtanh.pop %v1149
      %v1214 = vtanh.pop %v1150
      %v1215 = vtanh.pop %v1151
      %v1216 = vtanh.pop %v1152
      %v1217 = vtanh.pop %v1153
      %v1218 = vtanh.pop %v1154
      %v1219 = vtanh.pop %v1155
      %v1220 = vtanh.pop %v1156
      %v1221 = vtanh.pop %v1157
      %v1222 = vtanh.pop %v1158
      %v1223 = vtanh.pop %v1159
      %v1224 = vtanh.pop %v1160
      %v1225 = vtanh.pop %v1161
      %v1226 = vtanh.pop %v1162
      %v1227 = vtanh.pop %v1163
      %v1228 = vtanh.pop %v1164
      %v1229 = vtanh.pop %v1165
      %v1230 = vtanh.pop %v1166
      %v1231 = vtanh.pop %v1167
      %v1232 = vtanh.pop %v1168
      %v1233 = vtanh.pop %v1169
      %v1234 = vtanh.pop %v1170
      %v1235 = vtanh.pop %v1171
      %v1236 = vtanh.pop %v1172
      %v1237 = vtanh.pop %v1173
      %v1238 = vtanh.pop %v1174
      %v1239 = vtanh.pop %v1175
      %v1240 = vtanh.pop %v1176
      %v1241 = vtanh.pop %v1177
      %v1242 = vtanh.pop %v1178
      %v1243 = vtanh.pop %v1179
      %v1244 = vtanh.pop %v1180
      %v1245 = vtanh.pop %v1181
      %v1246 = vtanh.pop %v1182
      %v1247 = vtanh.pop %v1183
      %v1248 = vtanh.pop %v1184
      %v1249 = vtanh.pop %v1185
      %v1250 = vtanh.pop %v1186
      %v1251 = vtanh.pop %v1187
      %v1252 = vtanh.pop %v1188
      %v1253 = vtanh.pop %v1189
      %v1254 = vtanh.pop %v1190
      %v1255 = vtanh.pop %v1191
      %v1256 = vtanh.pop %v1192
      %v1257 = vtanh.pop %v1193
      %v1258 = vadd.f32 %v1194, 1.0
      %v1259 = vadd.f32 %v1195, 1.0
      %v1260 = vadd.f32 %v1196, 1.0
      %v1261 = vadd.f32 %v1197, 1.0
      %v1262 = vadd.f32 %v1198, 1.0
      %v1263 = vadd.f32 %v1199, 1.0
      %v1264 = vadd.f32 %v1200, 1.0
      %v1265 = vadd.f32 %v1201, 1.0
      %v1266 = vadd.f32 %v1202, 1.0
      %v1267 = vadd.f32 %v1203, 1.0
      %v1268 = vadd.f32 %v1204, 1.0
      %v1269 = vadd.f32 %v1205, 1.0
      %v1270 = vadd.f32 %v1206, 1.0
      %v1271 = vadd.f32 %v1207, 1.0
      %v1272 = vadd.f32 %v1208, 1.0
      %v1273 = vadd.f32 %v1209, 1.0
      %v1274 = vadd.f32 %v1210, 1.0
      %v1275 = vadd.f32 %v1211, 1.0
      %v1276 = vadd.f32 %v1212, 1.0
      %v1277 = vadd.f32 %v1213, 1.0
      %v1278 = vadd.f32 %v1214, 1.0
      %v1279 = vadd.f32 %v1215, 1.0
      %v1280 = vadd.f32 %v1216, 1.0
      %v1281 = vadd.f32 %v1217, 1.0
      %v1282 = vadd.f32 %v1218, 1.0
      %v1283 = vadd.f32 %v1219, 1.0
      %v1284 = vadd.f32 %v1220, 1.0
      %v1285 = vadd.f32 %v1221, 1.0
      %v1286 = vadd.f32 %v1222, 1.0
      %v1287 = vadd.f32 %v1223, 1.0
      %v1288 = vadd.f32 %v1224, 1.0
      %v1289 = vadd.f32 %v1225, 1.0
      %v1290 = vadd.f32 %v1226, 1.0
      %v1291 = vadd.f32 %v1227, 1.0
      %v1292 = vadd.f32 %v1228, 1.0
      %v1293 = vadd.f32 %v1229, 1.0
      %v1294 = vadd.f32 %v1230, 1.0
      %v1295 = vadd.f32 %v1231, 1.0
      %v1296 = vadd.f32 %v1232, 1.0
      %v1297 = vadd.f32 %v1233, 1.0
      %v1298 = vadd.f32 %v1234, 1.0
      %v1299 = vadd.f32 %v1235, 1.0
      %v1300 = vadd.f32 %v1236, 1.0
      %v1301 = vadd.f32 %v1237, 1.0
      %v1302 = vadd.f32 %v1238, 1.0
      %v1303 = vadd.f32 %v1239, 1.0
      %v1304 = vadd.f32 %v1240, 1.0
      %v1305 = vadd.f32 %v1241, 1.0
      %v1306 = vadd.f32 %v1242, 1.0
      %v1307 = vadd.f32 %v1243, 1.0
      %v1308 = vadd.f32 %v1244, 1.0
      %v1309 = vadd.f32 %v1245, 1.0
      %v1310 = vadd.f32 %v1246, 1.0
      %v1311 = vadd.f32 %v1247, 1.0
      %v1312 = vadd.f32 %v1248, 1.0
      %v1313 = vadd.f32 %v1249, 1.0
      %v1314 = vadd.f32 %v1250, 1.0
      %v1315 = vadd.f32 %v1251, 1.0
      %v1316 = vadd.f32 %v1252, 1.0
      %v1317 = vadd.f32 %v1253, 1.0
      %v1318 = vadd.f32 %v1254, 1.0
      %v1319 = vadd.f32 %v1255, 1.0
      %v1320 = vadd.f32 %v1256, 1.0
      %v1321 = vadd.f32 %v1257, 1.0
      %v1322 = vmul.f32 %v1258, 0.5
      %v1323 = vmul.f32 %v1259, 0.5
      %v1324 = vmul.f32 %v1260, 0.5
      %v1325 = vmul.f32 %v1261, 0.5
      %v1326 = vmul.f32 %v1262, 0.5
      %v1327 = vmul.f32 %v1263, 0.5
      %v1328 = vmul.f32 %v1264, 0.5
      %v1329 = vmul.f32 %v1265, 0.5
      %v1330 = vmul.f32 %v1266, 0.5
      %v1331 = vmul.f32 %v1267, 0.5
      %v1332 = vmul.f32 %v1268, 0.5
      %v1333 = vmul.f32 %v1269, 0.5
      %v1334 = vmul.f32 %v1270, 0.5
      %v1335 = vmul.f32 %v1271, 0.5
      %v1336 = vmul.f32 %v1272, 0.5
      %v1337 = vmul.f32 %v1273, 0.5
      %v1338 = vmul.f32 %v1274, 0.5
      %v1339 = vmul.f32 %v1275, 0.5
      %v1340 = vmul.f32 %v1276, 0.5
      %v1341 = vmul.f32 %v1277, 0.5
      %v1342 = vmul.f32 %v1278, 0.5
      %v1343 = vmul.f32 %v1279, 0.5
      %v1344 = vmul.f32 %v1280, 0.5
      %v1345 = vmul.f32 %v1281, 0.5
      %v1346 = vmul.f32 %v1282, 0.5
      %v1347 = vmul.f32 %v1283, 0.5
      %v1348 = vmul.f32 %v1284, 0.5
      %v1349 = vmul.f32 %v1285, 0.5
      %v1350 = vmul.f32 %v1286, 0.5
      %v1351 = vmul.f32 %v1287, 0.5
      %v1352 = vmul.f32 %v1288, 0.5
      %v1353 = vmul.f32 %v1289, 0.5
      %v1354 = vmul.f32 %v1290, 0.5
      %v1355 = vmul.f32 %v1291, 0.5
      %v1356 = vmul.f32 %v1292, 0.5
      %v1357 = vmul.f32 %v1293, 0.5
      %v1358 = vmul.f32 %v1294, 0.5
      %v1359 = vmul.f32 %v1295, 0.5
      %v1360 = vmul.f32 %v1296, 0.5
      %v1361 = vmul.f32 %v1297, 0.5
      %v1362 = vmul.f32 %v1298, 0.5
      %v1363 = vmul.f32 %v1299, 0.5
      %v1364 = vmul.f32 %v1300, 0.5
      %v1365 = vmul.f32 %v1301, 0.5
      %v1366 = vmul.f32 %v1302, 0.5
      %v1367 = vmul.f32 %v1303, 0.5
      %v1368 = vmul.f32 %v1304, 0.5
      %v1369 = vmul.f32 %v1305, 0.5
      %v1370 = vmul.f32 %v1306, 0.5
      %v1371 = vmul.f32 %v1307, 0.5
      %v1372 = vmul.f32 %v1308, 0.5
      %v1373 = vmul.f32 %v1309, 0.5
      %v1374 = vmul.f32 %v1310, 0.5
      %v1375 = vmul.f32 %v1311, 0.5
      %v1376 = vmul.f32 %v1312, 0.5
      %v1377 = vmul.f32 %v1313, 0.5
      %v1378 = vmul.f32 %v1314, 0.5
      %v1379 = vmul.f32 %v1315, 0.5
      %v1380 = vmul.f32 %v1316, 0.5
      %v1381 = vmul.f32 %v1317, 0.5
      %v1382 = vmul.f32 %v1318, 0.5
      %v1383 = vmul.f32 %v1319, 0.5
      %v1384 = vmul.f32 %v1320, 0.5
      %v1385 = vmul.f32 %v1321, 0.5
      %v1386 = vmul.f32 %v716, %v1322
      %v1387 = vmul.f32 %v718, %v1323
      %v1388 = vmul.f32 %v720, %v1324
      %v1389 = vmul.f32 %v722, %v1325
      %v1390 = vmul.f32 %v726, %v1326
      %v1391 = vmul.f32 %v728, %v1327
      %v1392 = vmul.f32 %v730, %v1328
      %v1393 = vmul.f32 %v732, %v1329
      %v1394 = vmul.f32 %v736, %v1330
      %v1395 = vmul.f32 %v738, %v1331
      %v1396 = vmul.f32 %v740, %v1332
      %v1397 = vmul.f32 %v742, %v1333
      %v1398 = vmul.f32 %v746, %v1334
      %v1399 = vmul.f32 %v748, %v1335
      %v1400 = vmul.f32 %v750, %v1336
      %v1401 = vmul.f32 %v752, %v1337
      %v1402 = vmul.f32 %v756, %v1338
      %v1403 = vmul.f32 %v758, %v1339
      %v1404 = vmul.f32 %v760, %v1340
      %v1405 = vmul.f32 %v762, %v1341
      %v1406 = vmul.f32 %v766, %v1342
      %v1407 = vmul.f32 %v768, %v1343
      %v1408 = vmul.f32 %v770, %v1344
      %v1409 = vmul.f32 %v772, %v1345
      %v1410 = vmul.f32 %v776, %v1346
      %v1411 = vmul.f32 %v778, %v1347
      %v1412 = vmul.f32 %v780, %v1348
      %v1413 = vmul.f32 %v782, %v1349
      %v1414 = vmul.f32 %v786, %v1350
      %v1415 = vmul.f32 %v788, %v1351
      %v1416 = vmul.f32 %v790, %v1352
      %v1417 = vmul.f32 %v792, %v1353
      %v1418 = vmul.f32 %v796, %v1354
      %v1419 = vmul.f32 %v798, %v1355
      %v1420 = vmul.f32 %v800, %v1356
      %v1421 = vmul.f32 %v802, %v1357
      %v1422 = vmul.f32 %v806, %v1358
      %v1423 = vmul.f32 %v808, %v1359
      %v1424 = vmul.f32 %v810, %v1360
      %v1425 = vmul.f32 %v812, %v1361
      %v1426 = vmul.f32 %v816, %v1362
      %v1427 = vmul.f32 %v818, %v1363
      %v1428 = vmul.f32 %v820, %v1364
      %v1429 = vmul.f32 %v822, %v1365
      %v1430 = vmul.f32 %v826, %v1366
      %v1431 = vmul.f32 %v828, %v1367
      %v1432 = vmul.f32 %v830, %v1368
      %v1433 = vmul.f32 %v832, %v1369
      %v1434 = vmul.f32 %v836, %v1370
      %v1435 = vmul.f32 %v838, %v1371
      %v1436 = vmul.f32 %v840, %v1372
      %v1437 = vmul.f32 %v842, %v1373
      %v1438 = vmul.f32 %v846, %v1374
      %v1439 = vmul.f32 %v848, %v1375
      %v1440 = vmul.f32 %v850, %v1376
      %v1441 = vmul.f32 %v852, %v1377
      %v1442 = vmul.f32 %v856, %v1378
      %v1443 = vmul.f32 %v858, %v1379
      %v1444 = vmul.f32 %v860, %v1380
      %v1445 = vmul.f32 %v862, %v1381
      %v1446 = vmul.f32 %v866, %v1382
      %v1447 = vmul.f32 %v868, %v1383
      %v1448 = vmul.f32 %v870, %v1384
      %v1449 = vmul.f32 %v872, %v1385
      %v1450 = vpack.c.bf16 %v1388, %v1386
      %v1451 = vpack.c.bf16 %v1389, %v1387
      %v1452 = vpack.c.bf16 %v1392, %v1390
      %v1453 = vpack.c.bf16 %v1393, %v1391
      %v1454 = vpack.c.bf16 %v1396, %v1394
      %v1455 = vpack.c.bf16 %v1397, %v1395
      %v1456 = vpack.c.bf16 %v1400, %v1398
      %v1457 = vpack.c.bf16 %v1401, %v1399
      %v1458 = vpack.c.bf16 %v1404, %v1402
      %v1459 = vpack.c.bf16 %v1405, %v1403
      %v1460 = vpack.c.bf16 %v1408, %v1406
      %v1461 = vpack.c.bf16 %v1409, %v1407
      %v1462 = vpack.c.bf16 %v1412, %v1410
      %v1463 = vpack.c.bf16 %v1413, %v1411
      %v1464 = vpack.c.bf16 %v1416, %v1414
      %v1465 = vpack.c.bf16 %v1417, %v1415
      %v1466 = vpack.c.bf16 %v1420, %v1418
      %v1467 = vpack.c.bf16 %v1421, %v1419
      %v1468 = vpack.c.bf16 %v1424, %v1422
      %v1469 = vpack.c.bf16 %v1425, %v1423
      %v1470 = vpack.c.bf16 %v1428, %v1426
      %v1471 = vpack.c.bf16 %v1429, %v1427
      %v1472 = vpack.c.bf16 %v1432, %v1430
      %v1473 = vpack.c.bf16 %v1433, %v1431
      %v1474 = vpack.c.bf16 %v1436, %v1434
      %v1475 = vpack.c.bf16 %v1437, %v1435
      %v1476 = vpack.c.bf16 %v1440, %v1438
      %v1477 = vpack.c.bf16 %v1441, %v1439
      %v1478 = vpack.c.bf16 %v1444, %v1442
      %v1479 = vpack.c.bf16 %v1445, %v1443
      %v1480 = vpack.c.bf16 %v1448, %v1446
      %v1481 = vpack.c.bf16 %v1449, %v1447
      %v1482 = vld [vmem:[%s3] sm:$0xf]
      %v1483 = vld [vmem:[%s3 + $0x4] sm:$0xf]
      %v1484 = vld [vmem:[%s3 + $0x8] sm:$0xf]
      %v1485 = vld [vmem:[%s3 + $0xc] sm:$0xf]
      %v1486 = vld [vmem:[%s3 + $0x10] sm:$0xf]
      %v1487 = vld [vmem:[%s3 + $0x14] sm:$0xf]
      %v1488 = vld [vmem:[%s3 + $0x18] sm:$0xf]
      %v1489 = vld [vmem:[%s3 + $0x1c] sm:$0xf]
      %v1490 = vld [vmem:[%s3 + $0x20] sm:$0xf]
      %v1491 = vld [vmem:[%s3 + $0x24] sm:$0xf]
      %v1492 = vld [vmem:[%s3 + $0x28] sm:$0xf]
      %v1493 = vld [vmem:[%s3 + $0x2c] sm:$0xf]
      %v1494 = vld [vmem:[%s3 + $0x30] sm:$0xf]
      %v1495 = vld [vmem:[%s3 + $0x34] sm:$0xf]
      %v1496 = vld [vmem:[%s3 + $0x38] sm:$0xf]
      %v1497 = vld [vmem:[%s3 + $0x3c] sm:$0xf]
      %v1498 = vld [vmem:[%s3 + $0x40] sm:$0xf]
      %v1499 = vld [vmem:[%s3 + $0x44] sm:$0xf]
      %v1500 = vld [vmem:[%s3 + $0x48] sm:$0xf]
      %v1501 = vld [vmem:[%s3 + $0x4c] sm:$0xf]
      %v1502 = vld [vmem:[%s3 + $0x50] sm:$0xf]
      %v1503 = vld [vmem:[%s3 + $0x54] sm:$0xf]
      %v1504 = vld [vmem:[%s3 + $0x58] sm:$0xf]
      %v1505 = vld [vmem:[%s3 + $0x5c] sm:$0xf]
      %v1506 = vld [vmem:[%s3 + $0x60] sm:$0xf]
      %v1507 = vld [vmem:[%s3 + $0x64] sm:$0xf]
      %v1508 = vld [vmem:[%s3 + $0x68] sm:$0xf]
      %v1509 = vld [vmem:[%s3 + $0x6c] sm:$0xf]
      %v1510 = vld [vmem:[%s3 + $0x70] sm:$0xf]
      %v1511 = vld [vmem:[%s3 + $0x74] sm:$0xf]
      %v1512 = vld [vmem:[%s3 + $0x78] sm:$0xf]
      %v1513 = vld [vmem:[%s3 + $0x7c] sm:$0xf]
      %v1514 = vld [vmem:[%s4] sm:$0x1]
      %v1516 = vlaneseq
      %v1517 = vshrl.u32 %v1516, 7
      %v1518 = vsub.s32 0, %v1517
      %v1519 = vrot.slane %v1514, %v1518
      %v1553 = vunpack.c.l.b16 %v1482
      %v1554 = vunpack.c.l.b16 %v1483
      %v1555 = vunpack.c.l.b16 %v1484
      %v1556 = vunpack.c.l.b16 %v1485
      %v1557 = vunpack.c.l.b16 %v1486
      %v1558 = vunpack.c.l.b16 %v1487
      %v1559 = vunpack.c.l.b16 %v1488
      %v1560 = vunpack.c.l.b16 %v1489
      %v1561 = vunpack.c.l.b16 %v1490
      %v1562 = vunpack.c.l.b16 %v1491
      %v1563 = vunpack.c.l.b16 %v1492
      %v1564 = vunpack.c.l.b16 %v1493
      %v1565 = vunpack.c.l.b16 %v1494
      %v1566 = vunpack.c.l.b16 %v1495
      %v1567 = vunpack.c.l.b16 %v1496
      %v1568 = vunpack.c.l.b16 %v1497
      %v1569 = vunpack.c.l.b16 %v1498
      %v1570 = vunpack.c.l.b16 %v1499
      %v1571 = vunpack.c.l.b16 %v1500
      %v1572 = vunpack.c.l.b16 %v1501
      %v1573 = vunpack.c.l.b16 %v1502
      %v1574 = vunpack.c.l.b16 %v1503
      %v1575 = vunpack.c.l.b16 %v1504
      %v1576 = vunpack.c.l.b16 %v1505
      %v1577 = vunpack.c.l.b16 %v1506
      %v1578 = vunpack.c.l.b16 %v1507
      %v1579 = vunpack.c.l.b16 %v1508
      %v1580 = vunpack.c.l.b16 %v1509
      %v1581 = vunpack.c.l.b16 %v1510
      %v1582 = vunpack.c.l.b16 %v1511
      %v1583 = vunpack.c.l.b16 %v1512
      %v1584 = vunpack.c.l.b16 %v1513
      %v1585 = vpack.c.b16 %v1554, %v1553
      %v1586 = vpack.c.b16 %v1556, %v1555
      %v1587 = vpack.c.b16 %v1558, %v1557
      %v1588 = vpack.c.b16 %v1560, %v1559
      %v1589 = vpack.c.b16 %v1562, %v1561
      %v1590 = vpack.c.b16 %v1564, %v1563
      %v1591 = vpack.c.b16 %v1566, %v1565
      %v1592 = vpack.c.b16 %v1568, %v1567
      %v1593 = vpack.c.b16 %v1570, %v1569
      %v1594 = vpack.c.b16 %v1572, %v1571
      %v1595 = vpack.c.b16 %v1574, %v1573
      %v1596 = vpack.c.b16 %v1576, %v1575
      %v1597 = vpack.c.b16 %v1578, %v1577
      %v1598 = vpack.c.b16 %v1580, %v1579
      %v1599 = vpack.c.b16 %v1582, %v1581
      %v1600 = vpack.c.b16 %v1584, %v1583
      %1617 = vmatprep.subr.bf16.mxu0 0
      %1618 = vmatpush1.bf16.msra.mxu0 %v1585
      %1619 = vmatprep.subr.bf16.mxu0 0
      %1620 = vmatpush1.bf16.msra.mxu0 %v1586
      %1621 = vmatprep.subr.bf16.mxu0 0
      %1622 = vmatpush1.bf16.msra.mxu0 %v1587
      %1623 = vmatprep.subr.bf16.mxu0 0
      %1624 = vmatpush1.bf16.msra.mxu0 %v1588
      %1625 = vmatprep.subr.bf16.mxu0 0
      %1626 = vmatpush1.bf16.msra.mxu0 %v1589
      %1627 = vmatprep.subr.bf16.mxu0 0
      %1628 = vmatpush1.bf16.msra.mxu0 %v1590
      %1629 = vmatprep.subr.bf16.mxu0 0
      %1630 = vmatpush1.bf16.msra.mxu0 %v1591
      %1631 = vmatprep.subr.bf16.mxu0 0
      %1632 = vmatpush1.bf16.msra.mxu0 %v1592
      %1633 = vmatprep.subr.bf16.mxu0 0
      %1634 = vmatpush1.bf16.msra.mxu0 %v1593
      %1635 = vmatprep.subr.bf16.mxu0 0
      %1636 = vmatpush1.bf16.msra.mxu0 %v1594
      %1637 = vmatprep.subr.bf16.mxu0 0
      %1638 = vmatpush1.bf16.msra.mxu0 %v1595
      %1639 = vmatprep.subr.bf16.mxu0 0
      %1640 = vmatpush1.bf16.msra.mxu0 %v1596
      %1641 = vmatprep.subr.bf16.mxu0 0
      %1642 = vmatpush1.bf16.msra.mxu0 %v1597
      %1643 = vmatprep.subr.bf16.mxu0 0
      %1644 = vmatpush1.bf16.msra.mxu0 %v1598
      %1645 = vmatprep.subr.bf16.mxu0 0
      %1646 = vmatpush1.bf16.msra.mxu0 %v1599
      %1647 = vmatprep.subr.bf16.mxu0 0
      %1648 = vmatpush1.bf16.msra.mxu0 %v1600
      %1649 = vmatprep.mubr.bf16.mxu0 %v1451
      %1650 = vmatmul.mubr.bf16.gmra.mrb[0].mxu0 %v1450
      %v1651 = vpop.f32.mrb[0].mxu0
      %v1652 = vadd.f32 %v1519, %v1651
      %v1653 = vpop.f32.mrb[0].mxu0
      %v1654 = vpop.f32.mrb[0].mxu0
      %v1655 = vadd.f32 %v1519, %v1654
      %v1656 = vpop.f32.mrb[0].mxu0
      %1657 = vmatprep.mubr.bf16.mxu0 %v1453
      %1658 = vmatmul.mubr.bf16.gmra.mrb[0].mxu0 %v1452
      %v1659 = vpop.f32.mrb[0].mxu0
      %v1660 = vadd.f32 %v1519, %v1659
      %v1661 = vpop.f32.mrb[0].mxu0
      %v1662 = vpop.f32.mrb[0].mxu0
      %v1663 = vadd.f32 %v1519, %v1662
      %v1664 = vpop.f32.mrb[0].mxu0
      %1665 = vmatprep.mubr.bf16.mxu0 %v1455
      %1666 = vmatmul.mubr.bf16.gmra.mrb[0].mxu0 %v1454
      %v1667 = vpop.f32.mrb[0].mxu0
      %v1668 = vadd.f32 %v1519, %v1667
      %v1669 = vpop.f32.mrb[0].mxu0
      %v1670 = vpop.f32.mrb[0].mxu0
      %v1671 = vadd.f32 %v1519, %v1670
      %v1672 = vpop.f32.mrb[0].mxu0
      %1673 = vmatprep.mubr.bf16.mxu0 %v1457
      %1674 = vmatmul.mubr.bf16.gmra.mrb[0].mxu0 %v1456
      %v1675 = vpop.f32.mrb[0].mxu0
      %v1676 = vadd.f32 %v1519, %v1675
      %v1677 = vpop.f32.mrb[0].mxu0
      %v1678 = vpop.f32.mrb[0].mxu0
      %v1679 = vadd.f32 %v1519, %v1678
      %v1680 = vpop.f32.mrb[0].mxu0
      %1681 = vmatprep.mubr.bf16.mxu0 %v1459
      %1682 = vmatmul.mubr.bf16.gmra.mrb[0].mxu0 %v1458
      %v1683 = vpop.f32.mrb[0].mxu0
      %v1684 = vadd.f32 %v1519, %v1683
      %v1685 = vpop.f32.mrb[0].mxu0
      %v1686 = vpop.f32.mrb[0].mxu0
      %v1687 = vadd.f32 %v1519, %v1686
      %v1688 = vpop.f32.mrb[0].mxu0
      %1689 = vmatprep.mubr.bf16.mxu0 %v1461
      %1690 = vmatmul.mubr.bf16.gmra.mrb[0].mxu0 %v1460
      %v1691 = vpop.f32.mrb[0].mxu0
      %v1692 = vadd.f32 %v1519, %v1691
      %v1693 = vpop.f32.mrb[0].mxu0
      %v1694 = vpop.f32.mrb[0].mxu0
      %v1695 = vadd.f32 %v1519, %v1694
      %v1696 = vpop.f32.mrb[0].mxu0
      %1697 = vmatprep.mubr.bf16.mxu0 %v1463
      %1698 = vmatmul.mubr.bf16.gmra.mrb[0].mxu0 %v1462
      %v1699 = vpop.f32.mrb[0].mxu0
      %v1700 = vadd.f32 %v1519, %v1699
      %v1701 = vpop.f32.mrb[0].mxu0
      %v1702 = vpop.f32.mrb[0].mxu0
      %v1703 = vadd.f32 %v1519, %v1702
      %v1704 = vpop.f32.mrb[0].mxu0
      %1705 = vmatprep.mubr.bf16.mxu0 %v1465
      %1706 = vmatmul.mubr.bf16.gmra.mrb[0].mxu0 %v1464
      %v1707 = vpop.f32.mrb[0].mxu0
      %v1708 = vadd.f32 %v1519, %v1707
      %v1709 = vpop.f32.mrb[0].mxu0
      %v1710 = vpop.f32.mrb[0].mxu0
      %v1711 = vadd.f32 %v1519, %v1710
      %v1712 = vpop.f32.mrb[0].mxu0
      %1713 = vmatprep.mubr.bf16.mxu0 %v1467
      %1714 = vmatmul.mubr.bf16.gmra.mrb[0].mxu0 %v1466
      %v1715 = vpop.f32.mrb[0].mxu0
      %v1716 = vadd.f32 %v1519, %v1715
      %v1717 = vpop.f32.mrb[0].mxu0
      %v1718 = vpop.f32.mrb[0].mxu0
      %v1719 = vadd.f32 %v1519, %v1718
      %v1720 = vpop.f32.mrb[0].mxu0
      %1721 = vmatprep.mubr.bf16.mxu0 %v1469
      %1722 = vmatmul.mubr.bf16.gmra.mrb[0].mxu0 %v1468
      %v1723 = vpop.f32.mrb[0].mxu0
      %v1724 = vadd.f32 %v1519, %v1723
      %v1725 = vpop.f32.mrb[0].mxu0
      %v1726 = vpop.f32.mrb[0].mxu0
      %v1727 = vadd.f32 %v1519, %v1726
      %v1728 = vpop.f32.mrb[0].mxu0
      %1729 = vmatprep.mubr.bf16.mxu0 %v1471
      %1730 = vmatmul.mubr.bf16.gmra.mrb[0].mxu0 %v1470
      %v1731 = vpop.f32.mrb[0].mxu0
      %v1732 = vadd.f32 %v1519, %v1731
      %v1733 = vpop.f32.mrb[0].mxu0
      %v1734 = vpop.f32.mrb[0].mxu0
      %v1735 = vadd.f32 %v1519, %v1734
      %v1736 = vpop.f32.mrb[0].mxu0
      %1737 = vmatprep.mubr.bf16.mxu0 %v1473
      %1738 = vmatmul.mubr.bf16.gmra.mrb[0].mxu0 %v1472
      %v1739 = vpop.f32.mrb[0].mxu0
      %v1740 = vadd.f32 %v1519, %v1739
      %v1741 = vpop.f32.mrb[0].mxu0
      %v1742 = vpop.f32.mrb[0].mxu0
      %v1743 = vadd.f32 %v1519, %v1742
      %v1744 = vpop.f32.mrb[0].mxu0
      %1745 = vmatprep.mubr.bf16.mxu0 %v1475
      %1746 = vmatmul.mubr.bf16.gmra.mrb[0].mxu0 %v1474
      %v1747 = vpop.f32.mrb[0].mxu0
      %v1748 = vadd.f32 %v1519, %v1747
      %v1749 = vpop.f32.mrb[0].mxu0
      %v1750 = vpop.f32.mrb[0].mxu0
      %v1751 = vadd.f32 %v1519, %v1750
      %v1752 = vpop.f32.mrb[0].mxu0
      %1753 = vmatprep.mubr.bf16.mxu0 %v1477
      %1754 = vmatmul.mubr.bf16.gmra.mrb[0].mxu0 %v1476
      %v1755 = vpop.f32.mrb[0].mxu0
      %v1756 = vadd.f32 %v1519, %v1755
      %v1757 = vpop.f32.mrb[0].mxu0
      %v1758 = vpop.f32.mrb[0].mxu0
      %v1759 = vadd.f32 %v1519, %v1758
      %v1760 = vpop.f32.mrb[0].mxu0
      %1761 = vmatprep.mubr.bf16.mxu0 %v1479
      %1762 = vmatmul.mubr.bf16.gmra.mrb[0].mxu0 %v1478
      %v1763 = vpop.f32.mrb[0].mxu0
      %v1764 = vadd.f32 %v1519, %v1763
      %v1765 = vpop.f32.mrb[0].mxu0
      %v1766 = vpop.f32.mrb[0].mxu0
      %v1767 = vadd.f32 %v1519, %v1766
      %v1768 = vpop.f32.mrb[0].mxu0
      %1769 = vmatprep.mubr.bf16.mxu0 %v1481
      %1770 = vmatmul.mubr.bf16.gmra.mrb[0].mxu0 %v1480
      %v1771 = vpop.f32.mrb[0].mxu0
      %v1772 = vadd.f32 %v1519, %v1771
      %v1773 = vpop.f32.mrb[0].mxu0
      %v1774 = vpop.f32.mrb[0].mxu0
      %v1775 = vadd.f32 %v1519, %v1774
      %v1776 = vpop.f32.mrb[0].mxu0
      %1777 = vdwg.mxu0
      %v1778 = vpack.c.bf16 %v1655, %v1652
      %v1779 = vpack.c.bf16 %v1663, %v1660
      %v1780 = vpack.c.bf16 %v1671, %v1668
      %v1781 = vpack.c.bf16 %v1679, %v1676
      %v1782 = vpack.c.bf16 %v1687, %v1684
      %v1783 = vpack.c.bf16 %v1695, %v1692
      %v1784 = vpack.c.bf16 %v1703, %v1700
      %v1785 = vpack.c.bf16 %v1711, %v1708
      %v1786 = vpack.c.bf16 %v1719, %v1716
      %v1787 = vpack.c.bf16 %v1727, %v1724
      %v1788 = vpack.c.bf16 %v1735, %v1732
      %v1789 = vpack.c.bf16 %v1743, %v1740
      %v1790 = vpack.c.bf16 %v1751, %v1748
      %v1791 = vpack.c.bf16 %v1759, %v1756
      %v1792 = vpack.c.bf16 %v1767, %v1764
      %v1793 = vpack.c.bf16 %v1775, %v1772
      %v1794 = vld [vmem:[%s5] sm:$0xff]
      %v1795 = vld [vmem:[%s5 + $0x8] sm:$0xff]
      %v1796 = vld [vmem:[%s5 + $0x10] sm:$0xff]
      %v1797 = vld [vmem:[%s5 + $0x18] sm:$0xff]
      %v1798 = vld [vmem:[%s5 + $0x20] sm:$0xff]
      %v1799 = vld [vmem:[%s5 + $0x28] sm:$0xff]
      %v1800 = vld [vmem:[%s5 + $0x30] sm:$0xff]
      %v1801 = vld [vmem:[%s5 + $0x38] sm:$0xff]
      %v1802 = vld [vmem:[%s5 + $0x40] sm:$0xff]
      %v1803 = vld [vmem:[%s5 + $0x48] sm:$0xff]
      %v1804 = vld [vmem:[%s5 + $0x50] sm:$0xff]
      %v1805 = vld [vmem:[%s5 + $0x58] sm:$0xff]
      %v1806 = vld [vmem:[%s5 + $0x60] sm:$0xff]
      %v1807 = vld [vmem:[%s5 + $0x68] sm:$0xff]
      %v1808 = vld [vmem:[%s5 + $0x70] sm:$0xff]
      %v1809 = vld [vmem:[%s5 + $0x78] sm:$0xff]
      %v1810 = vld [vmem:[%s6] sm:$0x3]
      %v1812 = vlaneseq
      %v1813 = vshrl.u32 %v1812, 7
      %v1814 = vsub.s32 0, %v1813
      %v1815 = vrot.slane %v1810, %v1814
      %v1816 = vlaneseq
      %v1817 = vshrl.u32 %v1816, 7
      %v1818 = vsub.s32 1, %v1817
      %v1819 = vrot.slane %v1810, %v1818
      %v1838 = vunpack.c.l.b16 %v1794
      %v1839 = vunpack.c.h.b16 %v1794
      %v1840 = vunpack.c.l.b16 %v1795
      %v1841 = vunpack.c.h.b16 %v1795
      %v1842 = vunpack.c.l.b16 %v1796
      %v1843 = vunpack.c.h.b16 %v1796
      %v1844 = vunpack.c.l.b16 %v1797
      %v1845 = vunpack.c.h.b16 %v1797
      %v1846 = vunpack.c.l.b16 %v1798
      %v1847 = vunpack.c.h.b16 %v1798
      %v1848 = vunpack.c.l.b16 %v1799
      %v1849 = vunpack.c.h.b16 %v1799
      %v1850 = vunpack.c.l.b16 %v1800
      %v1851 = vunpack.c.h.b16 %v1800
      %v1852 = vunpack.c.l.b16 %v1801
      %v1853 = vunpack.c.h.b16 %v1801
      %v1854 = vunpack.c.l.b16 %v1802
      %v1855 = vunpack.c.h.b16 %v1802
      %v1856 = vunpack.c.l.b16 %v1803
      %v1857 = vunpack.c.h.b16 %v1803
      %v1858 = vunpack.c.l.b16 %v1804
      %v1859 = vunpack.c.h.b16 %v1804
      %v1860 = vunpack.c.l.b16 %v1805
      %v1861 = vunpack.c.h.b16 %v1805
      %v1862 = vunpack.c.l.b16 %v1806
      %v1863 = vunpack.c.h.b16 %v1806
      %v1864 = vunpack.c.l.b16 %v1807
      %v1865 = vunpack.c.h.b16 %v1807
      %v1866 = vunpack.c.l.b16 %v1808
      %v1867 = vunpack.c.h.b16 %v1808
      %v1868 = vunpack.c.l.b16 %v1809
      %v1869 = vunpack.c.h.b16 %v1809
      %v1870 = vpack.c.b16 %v1840, %v1838
      %v1871 = vpack.c.b16 %v1841, %v1839
      %v1872 = vpack.c.b16 %v1844, %v1842
      %v1873 = vpack.c.b16 %v1845, %v1843
      %v1874 = vpack.c.b16 %v1848, %v1846
      %v1875 = vpack.c.b16 %v1849, %v1847
      %v1876 = vpack.c.b16 %v1852, %v1850
      %v1877 = vpack.c.b16 %v1853, %v1851
      %v1878 = vpack.c.b16 %v1856, %v1854
      %v1879 = vpack.c.b16 %v1857, %v1855
      %v1880 = vpack.c.b16 %v1860, %v1858
      %v1881 = vpack.c.b16 %v1861, %v1859
      %v1882 = vpack.c.b16 %v1864, %v1862
      %v1883 = vpack.c.b16 %v1865, %v1863
      %v1884 = vpack.c.b16 %v1868, %v1866
      %v1885 = vpack.c.b16 %v1869, %v1867
      %1902 = vmatprep.subr.bf16.mxu0 %v1871
      %1903 = vmatpush1.bf16.msra.mxu0 %v1870
      %1904 = vmatprep.subr.bf16.mxu0 %v1873
      %1905 = vmatpush1.bf16.msra.mxu0 %v1872
      %1906 = vmatprep.subr.bf16.mxu0 %v1875
      %1907 = vmatpush1.bf16.msra.mxu0 %v1874
      %1908 = vmatprep.subr.bf16.mxu0 %v1877
      %1909 = vmatpush1.bf16.msra.mxu0 %v1876
      %1910 = vmatprep.subr.bf16.mxu0 %v1879
      %1911 = vmatpush1.bf16.msra.mxu0 %v1878
      %1912 = vmatprep.subr.bf16.mxu0 %v1881
      %1913 = vmatpush1.bf16.msra.mxu0 %v1880
      %1914 = vmatprep.subr.bf16.mxu0 %v1883
      %1915 = vmatpush1.bf16.msra.mxu0 %v1882
      %1916 = vmatprep.subr.bf16.mxu0 %v1885
      %1917 = vmatpush1.bf16.msra.mxu0 %v1884
      %1918 = vmatprep.subr.bf16.mxu0 0
      %1919 = vmatpush1.bf16.msra.mxu0 0
      %1920 = vmatprep.subr.bf16.mxu0 0
      %1921 = vmatpush1.bf16.msra.mxu0 0
      %1922 = vmatprep.subr.bf16.mxu0 0
      %1923 = vmatpush1.bf16.msra.mxu0 0
      %1924 = vmatprep.subr.bf16.mxu0 0
      %1925 = vmatpush1.bf16.msra.mxu0 0
      %1926 = vmatprep.subr.bf16.mxu0 0
      %1927 = vmatpush1.bf16.msra.mxu0 0
      %1928 = vmatprep.subr.bf16.mxu0 0
      %1929 = vmatpush1.bf16.msra.mxu0 0
      %1930 = vmatprep.subr.bf16.mxu0 0
      %1931 = vmatpush1.bf16.msra.mxu0 0
      %1932 = vmatprep.subr.bf16.mxu0 0
      %1933 = vmatpush1.bf16.msra.mxu0 0
      %1934 = vmatprep.mubr.bf16.mxu0 0
      %1935 = vmatmul.mubr.bf16.gmra.mrb[0].mxu0 %v1778
      %v1936 = vpop.f32.mrb[0].mxu0
      %v1937 = vadd.f32 %v1815, %v1936
      %v1938 = vpop.f32.mrb[0].mxu0
      %v1939 = vadd.f32 %v1819, %v1938
      %v1940 = vpop.f32.mrb[0].mxu0
      %v1941 = vadd.f32 %v1815, %v1940
      %v1942 = vpop.f32.mrb[0].mxu0
      %v1943 = vadd.f32 %v1819, %v1942
      %1944 = vmatprep.mubr.bf16.mxu0 0
      %1945 = vmatmul.mubr.bf16.gmra.mrb[0].mxu0 %v1779
      %v1946 = vpop.f32.mrb[0].mxu0
      %v1947 = vadd.f32 %v1815, %v1946
      %v1948 = vpop.f32.mrb[0].mxu0
      %v1949 = vadd.f32 %v1819, %v1948
      %v1950 = vpop.f32.mrb[0].mxu0
      %v1951 = vadd.f32 %v1815, %v1950
      %v1952 = vpop.f32.mrb[0].mxu0
      %v1953 = vadd.f32 %v1819, %v1952
      %1954 = vmatprep.mubr.bf16.mxu0 0
      %1955 = vmatmul.mubr.bf16.gmra.mrb[0].mxu0 %v1780
      %v1956 = vpop.f32.mrb[0].mxu0
      %v1957 = vadd.f32 %v1815, %v1956
      %v1958 = vpop.f32.mrb[0].mxu0
      %v1959 = vadd.f32 %v1819, %v1958
      %v1960 = vpop.f32.mrb[0].mxu0
      %v1961 = vadd.f32 %v1815, %v1960
      %v1962 = vpop.f32.mrb[0].mxu0
      %v1963 = vadd.f32 %v1819, %v1962
      %1964 = vmatprep.mubr.bf16.mxu0 0
      %1965 = vmatmul.mubr.bf16.gmra.mrb[0].mxu0 %v1781
      %v1966 = vpop.f32.mrb[0].mxu0
      %v1967 = vadd.f32 %v1815, %v1966
      %v1968 = vpop.f32.mrb[0].mxu0
      %v1969 = vadd.f32 %v1819, %v1968
      %v1970 = vpop.f32.mrb[0].mxu0
      %v1971 = vadd.f32 %v1815, %v1970
      %v1972 = vpop.f32.mrb[0].mxu0
      %v1973 = vadd.f32 %v1819, %v1972
      %1974 = vmatprep.mubr.bf16.mxu0 0
      %1975 = vmatmul.mubr.bf16.gmra.mrb[0].mxu0 %v1782
      %v1976 = vpop.f32.mrb[0].mxu0
      %v1977 = vadd.f32 %v1815, %v1976
      %v1978 = vpop.f32.mrb[0].mxu0
      %v1979 = vadd.f32 %v1819, %v1978
      %v1980 = vpop.f32.mrb[0].mxu0
      %v1981 = vadd.f32 %v1815, %v1980
      %v1982 = vpop.f32.mrb[0].mxu0
      %v1983 = vadd.f32 %v1819, %v1982
      %1984 = vmatprep.mubr.bf16.mxu0 0
      %1985 = vmatmul.mubr.bf16.gmra.mrb[0].mxu0 %v1783
      %v1986 = vpop.f32.mrb[0].mxu0
      %v1987 = vadd.f32 %v1815, %v1986
      %v1988 = vpop.f32.mrb[0].mxu0
      %v1989 = vadd.f32 %v1819, %v1988
      %v1990 = vpop.f32.mrb[0].mxu0
      %v1991 = vadd.f32 %v1815, %v1990
      %v1992 = vpop.f32.mrb[0].mxu0
      %v1993 = vadd.f32 %v1819, %v1992
      %1994 = vmatprep.mubr.bf16.mxu0 0
      %1995 = vmatmul.mubr.bf16.gmra.mrb[0].mxu0 %v1784
      %v1996 = vpop.f32.mrb[0].mxu0
      %v1997 = vadd.f32 %v1815, %v1996
      %v1998 = vpop.f32.mrb[0].mxu0
      %v1999 = vadd.f32 %v1819, %v1998
      %v2000 = vpop.f32.mrb[0].mxu0
      %v2001 = vadd.f32 %v1815, %v2000
      %v2002 = vpop.f32.mrb[0].mxu0
      %v2003 = vadd.f32 %v1819, %v2002
      %2004 = vmatprep.mubr.bf16.mxu0 0
      %2005 = vmatmul.mubr.bf16.gmra.mrb[0].mxu0 %v1785
      %v2006 = vpop.f32.mrb[0].mxu0
      %v2007 = vadd.f32 %v1815, %v2006
      %v2008 = vpop.f32.mrb[0].mxu0
      %v2009 = vadd.f32 %v1819, %v2008
      %v2010 = vpop.f32.mrb[0].mxu0
      %v2011 = vadd.f32 %v1815, %v2010
      %v2012 = vpop.f32.mrb[0].mxu0
      %v2013 = vadd.f32 %v1819, %v2012
      %2014 = vmatprep.mubr.bf16.mxu0 0
      %2015 = vmatmul.mubr.bf16.gmra.mrb[0].mxu0 %v1786
      %v2016 = vpop.f32.mrb[0].mxu0
      %v2017 = vadd.f32 %v1815, %v2016
      %v2018 = vpop.f32.mrb[0].mxu0
      %v2019 = vadd.f32 %v1819, %v2018
      %v2020 = vpop.f32.mrb[0].mxu0
      %v2021 = vadd.f32 %v1815, %v2020
      %v2022 = vpop.f32.mrb[0].mxu0
      %v2023 = vadd.f32 %v1819, %v2022
      %2024 = vmatprep.mubr.bf16.mxu0 0
      %2025 = vmatmul.mubr.bf16.gmra.mrb[0].mxu0 %v1787
      %v2026 = vpop.f32.mrb[0].mxu0
      %v2027 = vadd.f32 %v1815, %v2026
      %v2028 = vpop.f32.mrb[0].mxu0
      %v2029 = vadd.f32 %v1819, %v2028
      %v2030 = vpop.f32.mrb[0].mxu0
      %v2031 = vadd.f32 %v1815, %v2030
      %v2032 = vpop.f32.mrb[0].mxu0
      %v2033 = vadd.f32 %v1819, %v2032
      %2034 = vmatprep.mubr.bf16.mxu0 0
      %2035 = vmatmul.mubr.bf16.gmra.mrb[0].mxu0 %v1788
      %v2036 = vpop.f32.mrb[0].mxu0
      %v2037 = vadd.f32 %v1815, %v2036
      %v2038 = vpop.f32.mrb[0].mxu0
      %v2039 = vadd.f32 %v1819, %v2038
      %v2040 = vpop.f32.mrb[0].mxu0
      %v2041 = vadd.f32 %v1815, %v2040
      %v2042 = vpop.f32.mrb[0].mxu0
      %v2043 = vadd.f32 %v1819, %v2042
      %2044 = vmatprep.mubr.bf16.mxu0 0
      %2045 = vmatmul.mubr.bf16.gmra.mrb[0].mxu0 %v1789
      %v2046 = vpop.f32.mrb[0].mxu0
      %v2047 = vadd.f32 %v1815, %v2046
      %v2048 = vpop.f32.mrb[0].mxu0
      %v2049 = vadd.f32 %v1819, %v2048
      %v2050 = vpop.f32.mrb[0].mxu0
      %v2051 = vadd.f32 %v1815, %v2050
      %v2052 = vpop.f32.mrb[0].mxu0
      %v2053 = vadd.f32 %v1819, %v2052
      %2054 = vmatprep.mubr.bf16.mxu0 0
      %2055 = vmatmul.mubr.bf16.gmra.mrb[0].mxu0 %v1790
      %v2056 = vpop.f32.mrb[0].mxu0
      %v2057 = vadd.f32 %v1815, %v2056
      %v2058 = vpop.f32.mrb[0].mxu0
      %v2059 = vadd.f32 %v1819, %v2058
      %v2060 = vpop.f32.mrb[0].mxu0
      %v2061 = vadd.f32 %v1815, %v2060
      %v2062 = vpop.f32.mrb[0].mxu0
      %v2063 = vadd.f32 %v1819, %v2062
      %2064 = vmatprep.mubr.bf16.mxu0 0
      %2065 = vmatmul.mubr.bf16.gmra.mrb[0].mxu0 %v1791
      %v2066 = vpop.f32.mrb[0].mxu0
      %v2067 = vadd.f32 %v1815, %v2066
      %v2068 = vpop.f32.mrb[0].mxu0
      %v2069 = vadd.f32 %v1819, %v2068
      %v2070 = vpop.f32.mrb[0].mxu0
      %v2071 = vadd.f32 %v1815, %v2070
      %v2072 = vpop.f32.mrb[0].mxu0
      %v2073 = vadd.f32 %v1819, %v2072
      %2074 = vmatprep.mubr.bf16.mxu0 0
      %2075 = vmatmul.mubr.bf16.gmra.mrb[0].mxu0 %v1792
      %v2076 = vpop.f32.mrb[0].mxu0
      %v2077 = vadd.f32 %v1815, %v2076
      %v2078 = vpop.f32.mrb[0].mxu0
      %v2079 = vadd.f32 %v1819, %v2078
      %v2080 = vpop.f32.mrb[0].mxu0
      %v2081 = vadd.f32 %v1815, %v2080
      %v2082 = vpop.f32.mrb[0].mxu0
      %v2083 = vadd.f32 %v1819, %v2082
      %2084 = vmatprep.mubr.bf16.mxu0 0
      %2085 = vmatmul.mubr.bf16.gmra.mrb[0].mxu0 %v1793
      %v2086 = vpop.f32.mrb[0].mxu0
      %v2087 = vadd.f32 %v1815, %v2086
      %v2088 = vpop.f32.mrb[0].mxu0
      %v2089 = vadd.f32 %v1819, %v2088
      %v2090 = vpop.f32.mrb[0].mxu0
      %v2091 = vadd.f32 %v1815, %v2090
      %v2092 = vpop.f32.mrb[0].mxu0
      %v2093 = vadd.f32 %v1819, %v2092
      %2094 = vdwg.mxu0
      %v2095 = vmul.f32 %v1937, %v1937
      %v2096 = vmul.f32 %v1939, %v1939
      %v2097 = vmul.f32 %v1941, %v1941
      %v2098 = vmul.f32 %v1943, %v1943
      %v2099 = vmul.f32 %v1947, %v1947
      %v2100 = vmul.f32 %v1949, %v1949
      %v2101 = vmul.f32 %v1951, %v1951
      %v2102 = vmul.f32 %v1953, %v1953
      %v2103 = vmul.f32 %v1957, %v1957
      %v2104 = vmul.f32 %v1959, %v1959
      %v2105 = vmul.f32 %v1961, %v1961
      %v2106 = vmul.f32 %v1963, %v1963
      %v2107 = vmul.f32 %v1967, %v1967
      %v2108 = vmul.f32 %v1969, %v1969
      %v2109 = vmul.f32 %v1971, %v1971
      %v2110 = vmul.f32 %v1973, %v1973
      %v2111 = vmul.f32 %v1977, %v1977
      %v2112 = vmul.f32 %v1979, %v1979
      %v2113 = vmul.f32 %v1981, %v1981
      %v2114 = vmul.f32 %v1983, %v1983
      %v2115 = vmul.f32 %v1987, %v1987
      %v2116 = vmul.f32 %v1989, %v1989
      %v2117 = vmul.f32 %v1991, %v1991
      %v2118 = vmul.f32 %v1993, %v1993
      %v2119 = vmul.f32 %v1997, %v1997
      %v2120 = vmul.f32 %v1999, %v1999
      %v2121 = vmul.f32 %v2001, %v2001
      %v2122 = vmul.f32 %v2003, %v2003
      %v2123 = vmul.f32 %v2007, %v2007
      %v2124 = vmul.f32 %v2009, %v2009
      %v2125 = vmul.f32 %v2011, %v2011
      %v2126 = vmul.f32 %v2013, %v2013
      %v2127 = vmul.f32 %v2017, %v2017
      %v2128 = vmul.f32 %v2019, %v2019
      %v2129 = vmul.f32 %v2021, %v2021
      %v2130 = vmul.f32 %v2023, %v2023
      %v2131 = vmul.f32 %v2027, %v2027
      %v2132 = vmul.f32 %v2029, %v2029
      %v2133 = vmul.f32 %v2031, %v2031
      %v2134 = vmul.f32 %v2033, %v2033
      %v2135 = vmul.f32 %v2037, %v2037
      %v2136 = vmul.f32 %v2039, %v2039
      %v2137 = vmul.f32 %v2041, %v2041
      %v2138 = vmul.f32 %v2043, %v2043
      %v2139 = vmul.f32 %v2047, %v2047
      %v2140 = vmul.f32 %v2049, %v2049
      %v2141 = vmul.f32 %v2051, %v2051
      %v2142 = vmul.f32 %v2053, %v2053
      %v2143 = vmul.f32 %v2057, %v2057
      %v2144 = vmul.f32 %v2059, %v2059
      %v2145 = vmul.f32 %v2061, %v2061
      %v2146 = vmul.f32 %v2063, %v2063
      %v2147 = vmul.f32 %v2067, %v2067
      %v2148 = vmul.f32 %v2069, %v2069
      %v2149 = vmul.f32 %v2071, %v2071
      %v2150 = vmul.f32 %v2073, %v2073
      %v2151 = vmul.f32 %v2077, %v2077
      %v2152 = vmul.f32 %v2079, %v2079
      %v2153 = vmul.f32 %v2081, %v2081
      %v2154 = vmul.f32 %v2083, %v2083
      %v2155 = vmul.f32 %v2087, %v2087
      %v2156 = vmul.f32 %v2089, %v2089
      %v2157 = vmul.f32 %v2091, %v2091
      %v2158 = vmul.f32 %v2093, %v2093
      %v2159 = vmul.f32 %v1937, %v2095
      %v2160 = vmul.f32 %v1939, %v2096
      %v2161 = vmul.f32 %v1941, %v2097
      %v2162 = vmul.f32 %v1943, %v2098
      %v2163 = vmul.f32 %v1947, %v2099
      %v2164 = vmul.f32 %v1949, %v2100
      %v2165 = vmul.f32 %v1951, %v2101
      %v2166 = vmul.f32 %v1953, %v2102
      %v2167 = vmul.f32 %v1957, %v2103
      %v2168 = vmul.f32 %v1959, %v2104
      %v2169 = vmul.f32 %v1961, %v2105
      %v2170 = vmul.f32 %v1963, %v2106
      %v2171 = vmul.f32 %v1967, %v2107
      %v2172 = vmul.f32 %v1969, %v2108
      %v2173 = vmul.f32 %v1971, %v2109
      %v2174 = vmul.f32 %v1973, %v2110
      %v2175 = vmul.f32 %v1977, %v2111
      %v2176 = vmul.f32 %v1979, %v2112
      %v2177 = vmul.f32 %v1981, %v2113
      %v2178 = vmul.f32 %v1983, %v2114
      %v2179 = vmul.f32 %v1987, %v2115
      %v2180 = vmul.f32 %v1989, %v2116
      %v2181 = vmul.f32 %v1991, %v2117
      %v2182 = vmul.f32 %v1993, %v2118
      %v2183 = vmul.f32 %v1997, %v2119
      %v2184 = vmul.f32 %v1999, %v2120
      %v2185 = vmul.f32 %v2001, %v2121
      %v2186 = vmul.f32 %v2003, %v2122
      %v2187 = vmul.f32 %v2007, %v2123
      %v2188 = vmul.f32 %v2009, %v2124
      %v2189 = vmul.f32 %v2011, %v2125
      %v2190 = vmul.f32 %v2013, %v2126
      %v2191 = vmul.f32 %v2017, %v2127
      %v2192 = vmul.f32 %v2019, %v2128
      %v2193 = vmul.f32 %v2021, %v2129
      %v2194 = vmul.f32 %v2023, %v2130
      %v2195 = vmul.f32 %v2027, %v2131
      %v2196 = vmul.f32 %v2029, %v2132
      %v2197 = vmul.f32 %v2031, %v2133
      %v2198 = vmul.f32 %v2033, %v2134
      %v2199 = vmul.f32 %v2037, %v2135
      %v2200 = vmul.f32 %v2039, %v2136
      %v2201 = vmul.f32 %v2041, %v2137
      %v2202 = vmul.f32 %v2043, %v2138
      %v2203 = vmul.f32 %v2047, %v2139
      %v2204 = vmul.f32 %v2049, %v2140
      %v2205 = vmul.f32 %v2051, %v2141
      %v2206 = vmul.f32 %v2053, %v2142
      %v2207 = vmul.f32 %v2057, %v2143
      %v2208 = vmul.f32 %v2059, %v2144
      %v2209 = vmul.f32 %v2061, %v2145
      %v2210 = vmul.f32 %v2063, %v2146
      %v2211 = vmul.f32 %v2067, %v2147
      %v2212 = vmul.f32 %v2069, %v2148
      %v2213 = vmul.f32 %v2071, %v2149
      %v2214 = vmul.f32 %v2073, %v2150
      %v2215 = vmul.f32 %v2077, %v2151
      %v2216 = vmul.f32 %v2079, %v2152
      %v2217 = vmul.f32 %v2081, %v2153
      %v2218 = vmul.f32 %v2083, %v2154
      %v2219 = vmul.f32 %v2087, %v2155
      %v2220 = vmul.f32 %v2089, %v2156
      %v2221 = vmul.f32 %v2091, %v2157
      %v2222 = vmul.f32 %v2093, %v2158
      %v2223 = vmul.f32 %v2159, 0.044715
      %v2224 = vmul.f32 %v2160, 0.044715
      %v2225 = vmul.f32 %v2161, 0.044715
      %v2226 = vmul.f32 %v2162, 0.044715
      %v2227 = vmul.f32 %v2163, 0.044715
      %v2228 = vmul.f32 %v2164, 0.044715
      %v2229 = vmul.f32 %v2165, 0.044715
      %v2230 = vmul.f32 %v2166, 0.044715
      %v2231 = vmul.f32 %v2167, 0.044715
      %v2232 = vmul.f32 %v2168, 0.044715
      %v2233 = vmul.f32 %v2169, 0.044715
      %v2234 = vmul.f32 %v2170, 0.044715
      %v2235 = vmul.f32 %v2171, 0.044715
      %v2236 = vmul.f32 %v2172, 0.044715
      %v2237 = vmul.f32 %v2173, 0.044715
      %v2238 = vmul.f32 %v2174, 0.044715
      %v2239 = vmul.f32 %v2175, 0.044715
      %v2240 = vmul.f32 %v2176, 0.044715
      %v2241 = vmul.f32 %v2177, 0.044715
      %v2242 = vmul.f32 %v2178, 0.044715
      %v2243 = vmul.f32 %v2179, 0.044715
      %v2244 = vmul.f32 %v2180, 0.044715
      %v2245 = vmul.f32 %v2181, 0.044715
      %v2246 = vmul.f32 %v2182, 0.044715
      %v2247 = vmul.f32 %v2183, 0.044715
      %v2248 = vmul.f32 %v2184, 0.044715
      %v2249 = vmul.f32 %v2185, 0.044715
      %v2250 = vmul.f32 %v2186, 0.044715
      %v2251 = vmul.f32 %v2187, 0.044715
      %v2252 = vmul.f32 %v2188, 0.044715
      %v2253 = vmul.f32 %v2189, 0.044715
      %v2254 = vmul.f32 %v2190, 0.044715
      %v2255 = vmul.f32 %v2191, 0.044715
      %v2256 = vmul.f32 %v2192, 0.044715
      %v2257 = vmul.f32 %v2193, 0.044715
      %v2258 = vmul.f32 %v2194, 0.044715
      %v2259 = vmul.f32 %v2195, 0.044715
      %v2260 = vmul.f32 %v2196, 0.044715
      %v2261 = vmul.f32 %v2197, 0.044715
      %v2262 = vmul.f32 %v2198, 0.044715
      %v2263 = vmul.f32 %v2199, 0.044715
      %v2264 = vmul.f32 %v2200, 0.044715
      %v2265 = vmul.f32 %v2201, 0.044715
      %v2266 = vmul.f32 %v2202, 0.044715
      %v2267 = vmul.f32 %v2203, 0.044715
      %v2268 = vmul.f32 %v2204, 0.044715
      %v2269 = vmul.f32 %v2205, 0.044715
      %v2270 = vmul.f32 %v2206, 0.044715
      %v2271 = vmul.f32 %v2207, 0.044715
      %v2272 = vmul.f32 %v2208, 0.044715
      %v2273 = vmul.f32 %v2209, 0.044715
      %v2274 = vmul.f32 %v2210, 0.044715
      %v2275 = vmul.f32 %v2211, 0.044715
      %v2276 = vmul.f32 %v2212, 0.044715
      %v2277 = vmul.f32 %v2213, 0.044715
      %v2278 = vmul.f32 %v2214, 0.044715
      %v2279 = vmul.f32 %v2215, 0.044715
      %v2280 = vmul.f32 %v2216, 0.044715
      %v2281 = vmul.f32 %v2217, 0.044715
      %v2282 = vmul.f32 %v2218, 0.044715
      %v2283 = vmul.f32 %v2219, 0.044715
      %v2284 = vmul.f32 %v2220, 0.044715
      %v2285 = vmul.f32 %v2221, 0.044715
      %v2286 = vmul.f32 %v2222, 0.044715
      %v2287 = vadd.f32 %v1937, %v2223
      %v2288 = vadd.f32 %v1939, %v2224
      %v2289 = vadd.f32 %v1941, %v2225
      %v2290 = vadd.f32 %v1943, %v2226
      %v2291 = vadd.f32 %v1947, %v2227
      %v2292 = vadd.f32 %v1949, %v2228
      %v2293 = vadd.f32 %v1951, %v2229
      %v2294 = vadd.f32 %v1953, %v2230
      %v2295 = vadd.f32 %v1957, %v2231
      %v2296 = vadd.f32 %v1959, %v2232
      %v2297 = vadd.f32 %v1961, %v2233
      %v2298 = vadd.f32 %v1963, %v2234
      %v2299 = vadd.f32 %v1967, %v2235
      %v2300 = vadd.f32 %v1969, %v2236
      %v2301 = vadd.f32 %v1971, %v2237
      %v2302 = vadd.f32 %v1973, %v2238
      %v2303 = vadd.f32 %v1977, %v2239
      %v2304 = vadd.f32 %v1979, %v2240
      %v2305 = vadd.f32 %v1981, %v2241
      %v2306 = vadd.f32 %v1983, %v2242
      %v2307 = vadd.f32 %v1987, %v2243
      %v2308 = vadd.f32 %v1989, %v2244
      %v2309 = vadd.f32 %v1991, %v2245
      %v2310 = vadd.f32 %v1993, %v2246
      %v2311 = vadd.f32 %v1997, %v2247
      %v2312 = vadd.f32 %v1999, %v2248
      %v2313 = vadd.f32 %v2001, %v2249
      %v2314 = vadd.f32 %v2003, %v2250
      %v2315 = vadd.f32 %v2007, %v2251
      %v2316 = vadd.f32 %v2009, %v2252
      %v2317 = vadd.f32 %v2011, %v2253
      %v2318 = vadd.f32 %v2013, %v2254
      %v2319 = vadd.f32 %v2017, %v2255
      %v2320 = vadd.f32 %v2019, %v2256
      %v2321 = vadd.f32 %v2021, %v2257
      %v2322 = vadd.f32 %v2023, %v2258
      %v2323 = vadd.f32 %v2027, %v2259
      %v2324 = vadd.f32 %v2029, %v2260
      %v2325 = vadd.f32 %v2031, %v2261
      %v2326 = vadd.f32 %v2033, %v2262
      %v2327 = vadd.f32 %v2037, %v2263
      %v2328 = vadd.f32 %v2039, %v2264
      %v2329 = vadd.f32 %v2041, %v2265
      %v2330 = vadd.f32 %v2043, %v2266
      %v2331 = vadd.f32 %v2047, %v2267
      %v2332 = vadd.f32 %v2049, %v2268
      %v2333 = vadd.f32 %v2051, %v2269
      %v2334 = vadd.f32 %v2053, %v2270
      %v2335 = vadd.f32 %v2057, %v2271
      %v2336 = vadd.f32 %v2059, %v2272
      %v2337 = vadd.f32 %v2061, %v2273
      %v2338 = vadd.f32 %v2063, %v2274
      %v2339 = vadd.f32 %v2067, %v2275
      %v2340 = vadd.f32 %v2069, %v2276
      %v2341 = vadd.f32 %v2071, %v2277
      %v2342 = vadd.f32 %v2073, %v2278
      %v2343 = vadd.f32 %v2077, %v2279
      %v2344 = vadd.f32 %v2079, %v2280
      %v2345 = vadd.f32 %v2081, %v2281
      %v2346 = vadd.f32 %v2083, %v2282
      %v2347 = vadd.f32 %v2087, %v2283
      %v2348 = vadd.f32 %v2089, %v2284
      %v2349 = vadd.f32 %v2091, %v2285
      %v2350 = vadd.f32 %v2093, %v2286
      %v2351 = vmul.f32 %v2287, 0.7978846
      %v2352 = vmul.f32 %v2288, 0.7978846
      %v2353 = vmul.f32 %v2289, 0.7978846
      %v2354 = vmul.f32 %v2290, 0.7978846
      %v2355 = vmul.f32 %v2291, 0.7978846
      %v2356 = vmul.f32 %v2292, 0.7978846
      %v2357 = vmul.f32 %v2293, 0.7978846
      %v2358 = vmul.f32 %v2294, 0.7978846
      %v2359 = vmul.f32 %v2295, 0.7978846
      %v2360 = vmul.f32 %v2296, 0.7978846
      %v2361 = vmul.f32 %v2297, 0.7978846
      %v2362 = vmul.f32 %v2298, 0.7978846
      %v2363 = vmul.f32 %v2299, 0.7978846
      %v2364 = vmul.f32 %v2300, 0.7978846
      %v2365 = vmul.f32 %v2301, 0.7978846
      %v2366 = vmul.f32 %v2302, 0.7978846
      %v2367 = vmul.f32 %v2303, 0.7978846
      %v2368 = vmul.f32 %v2304, 0.7978846
      %v2369 = vmul.f32 %v2305, 0.7978846
      %v2370 = vmul.f32 %v2306, 0.7978846
      %v2371 = vmul.f32 %v2307, 0.7978846
      %v2372 = vmul.f32 %v2308, 0.7978846
      %v2373 = vmul.f32 %v2309, 0.7978846
      %v2374 = vmul.f32 %v2310, 0.7978846
      %v2375 = vmul.f32 %v2311, 0.7978846
      %v2376 = vmul.f32 %v2312, 0.7978846
      %v2377 = vmul.f32 %v2313, 0.7978846
      %v2378 = vmul.f32 %v2314, 0.7978846
      %v2379 = vmul.f32 %v2315, 0.7978846
      %v2380 = vmul.f32 %v2316, 0.7978846
      %v2381 = vmul.f32 %v2317, 0.7978846
      %v2382 = vmul.f32 %v2318, 0.7978846
      %v2383 = vmul.f32 %v2319, 0.7978846
      %v2384 = vmul.f32 %v2320, 0.7978846
      %v2385 = vmul.f32 %v2321, 0.7978846
      %v2386 = vmul.f32 %v2322, 0.7978846
      %v2387 = vmul.f32 %v2323, 0.7978846
      %v2388 = vmul.f32 %v2324, 0.7978846
      %v2389 = vmul.f32 %v2325, 0.7978846
      %v2390 = vmul.f32 %v2326, 0.7978846
      %v2391 = vmul.f32 %v2327, 0.7978846
      %v2392 = vmul.f32 %v2328, 0.7978846
      %v2393 = vmul.f32 %v2329, 0.7978846
      %v2394 = vmul.f32 %v2330, 0.7978846
      %v2395 = vmul.f32 %v2331, 0.7978846
      %v2396 = vmul.f32 %v2332, 0.7978846
      %v2397 = vmul.f32 %v2333, 0.7978846
      %v2398 = vmul.f32 %v2334, 0.7978846
      %v2399 = vmul.f32 %v2335, 0.7978846
      %v2400 = vmul.f32 %v2336, 0.7978846
      %v2401 = vmul.f32 %v2337, 0.7978846
      %v2402 = vmul.f32 %v2338, 0.7978846
      %v2403 = vmul.f32 %v2339, 0.7978846
      %v2404 = vmul.f32 %v2340, 0.7978846
      %v2405 = vmul.f32 %v2341, 0.7978846
      %v2406 = vmul.f32 %v2342, 0.7978846
      %v2407 = vmul.f32 %v2343, 0.7978846
      %v2408 = vmul.f32 %v2344, 0.7978846
      %v2409 = vmul.f32 %v2345, 0.7978846
      %v2410 = vmul.f32 %v2346, 0.7978846
      %v2411 = vmul.f32 %v2347, 0.7978846
      %v2412 = vmul.f32 %v2348, 0.7978846
      %v2413 = vmul.f32 %v2349, 0.7978846
      %v2414 = vmul.f32 %v2350, 0.7978846
      %v2415 = vtanh.pop %v2351
      %v2416 = vtanh.pop %v2352
      %v2417 = vtanh.pop %v2353
      %v2418 = vtanh.pop %v2354
      %v2419 = vtanh.pop %v2355
      %v2420 = vtanh.pop %v2356
      %v2421 = vtanh.pop %v2357
      %v2422 = vtanh.pop %v2358
      %v2423 = vtanh.pop %v2359
      %v2424 = vtanh.pop %v2360
      %v2425 = vtanh.pop %v2361
      %v2426 = vtanh.pop %v2362
      %v2427 = vtanh.pop %v2363
      %v2428 = vtanh.pop %v2364
      %v2429 = vtanh.pop %v2365
      %v2430 = vtanh.pop %v2366
      %v2431 = vtanh.pop %v2367
      %v2432 = vtanh.pop %v2368
      %v2433 = vtanh.pop %v2369
      %v2434 = vtanh.pop %v2370
      %v2435 = vtanh.pop %v2371
      %v2436 = vtanh.pop %v2372
      %v2437 = vtanh.pop %v2373
      %v2438 = vtanh.pop %v2374
      %v2439 = vtanh.pop %v2375
      %v2440 = vtanh.pop %v2376
      %v2441 = vtanh.pop %v2377
      %v2442 = vtanh.pop %v2378
      %v2443 = vtanh.pop %v2379
      %v2444 = vtanh.pop %v2380
      %v2445 = vtanh.pop %v2381
      %v2446 = vtanh.pop %v2382
      %v2447 = vtanh.pop %v2383
      %v2448 = vtanh.pop %v2384
      %v2449 = vtanh.pop %v2385
      %v2450 = vtanh.pop %v2386
      %v2451 = vtanh.pop %v2387
      %v2452 = vtanh.pop %v2388
      %v2453 = vtanh.pop %v2389
      %v2454 = vtanh.pop %v2390
      %v2455 = vtanh.pop %v2391
      %v2456 = vtanh.pop %v2392
      %v2457 = vtanh.pop %v2393
      %v2458 = vtanh.pop %v2394
      %v2459 = vtanh.pop %v2395
      %v2460 = vtanh.pop %v2396
      %v2461 = vtanh.pop %v2397
      %v2462 = vtanh.pop %v2398
      %v2463 = vtanh.pop %v2399
      %v2464 = vtanh.pop %v2400
      %v2465 = vtanh.pop %v2401
      %v2466 = vtanh.pop %v2402
      %v2467 = vtanh.pop %v2403
      %v2468 = vtanh.pop %v2404
      %v2469 = vtanh.pop %v2405
      %v2470 = vtanh.pop %v2406
      %v2471 = vtanh.pop %v2407
      %v2472 = vtanh.pop %v2408
      %v2473 = vtanh.pop %v2409
      %v2474 = vtanh.pop %v2410
      %v2475 = vtanh.pop %v2411
      %v2476 = vtanh.pop %v2412
      %v2477 = vtanh.pop %v2413
      %v2478 = vtanh.pop %v2414
      %v2479 = vadd.f32 %v2415, 1.0
      %v2480 = vadd.f32 %v2416, 1.0
      %v2481 = vadd.f32 %v2417, 1.0
      %v2482 = vadd.f32 %v2418, 1.0
      %v2483 = vadd.f32 %v2419, 1.0
      %v2484 = vadd.f32 %v2420, 1.0
      %v2485 = vadd.f32 %v2421, 1.0
      %v2486 = vadd.f32 %v2422, 1.0
      %v2487 = vadd.f32 %v2423, 1.0
      %v2488 = vadd.f32 %v2424, 1.0
      %v2489 = vadd.f32 %v2425, 1.0
      %v2490 = vadd.f32 %v2426, 1.0
      %v2491 = vadd.f32 %v2427, 1.0
      %v2492 = vadd.f32 %v2428, 1.0
      %v2493 = vadd.f32 %v2429, 1.0
      %v2494 = vadd.f32 %v2430, 1.0
      %v2495 = vadd.f32 %v2431, 1.0
      %v2496 = vadd.f32 %v2432, 1.0
      %v2497 = vadd.f32 %v2433, 1.0
      %v2498 = vadd.f32 %v2434, 1.0
      %v2499 = vadd.f32 %v2435, 1.0
      %v2500 = vadd.f32 %v2436, 1.0
      %v2501 = vadd.f32 %v2437, 1.0
      %v2502 = vadd.f32 %v2438, 1.0
      %v2503 = vadd.f32 %v2439, 1.0
      %v2504 = vadd.f32 %v2440, 1.0
      %v2505 = vadd.f32 %v2441, 1.0
      %v2506 = vadd.f32 %v2442, 1.0
      %v2507 = vadd.f32 %v2443, 1.0
      %v2508 = vadd.f32 %v2444, 1.0
      %v2509 = vadd.f32 %v2445, 1.0
      %v2510 = vadd.f32 %v2446, 1.0
      %v2511 = vadd.f32 %v2447, 1.0
      %v2512 = vadd.f32 %v2448, 1.0
      %v2513 = vadd.f32 %v2449, 1.0
      %v2514 = vadd.f32 %v2450, 1.0
      %v2515 = vadd.f32 %v2451, 1.0
      %v2516 = vadd.f32 %v2452, 1.0
      %v2517 = vadd.f32 %v2453, 1.0
      %v2518 = vadd.f32 %v2454, 1.0
      %v2519 = vadd.f32 %v2455, 1.0
      %v2520 = vadd.f32 %v2456, 1.0
      %v2521 = vadd.f32 %v2457, 1.0
      %v2522 = vadd.f32 %v2458, 1.0
      %v2523 = vadd.f32 %v2459, 1.0
      %v2524 = vadd.f32 %v2460, 1.0
      %v2525 = vadd.f32 %v2461, 1.0
      %v2526 = vadd.f32 %v2462, 1.0
      %v2527 = vadd.f32 %v2463, 1.0
      %v2528 = vadd.f32 %v2464, 1.0
      %v2529 = vadd.f32 %v2465, 1.0
      %v2530 = vadd.f32 %v2466, 1.0
      %v2531 = vadd.f32 %v2467, 1.0
      %v2532 = vadd.f32 %v2468, 1.0
      %v2533 = vadd.f32 %v2469, 1.0
      %v2534 = vadd.f32 %v2470, 1.0
      %v2535 = vadd.f32 %v2471, 1.0
      %v2536 = vadd.f32 %v2472, 1.0
      %v2537 = vadd.f32 %v2473, 1.0
      %v2538 = vadd.f32 %v2474, 1.0
      %v2539 = vadd.f32 %v2475, 1.0
      %v2540 = vadd.f32 %v2476, 1.0
      %v2541 = vadd.f32 %v2477, 1.0
      %v2542 = vadd.f32 %v2478, 1.0
      %v2543 = vmul.f32 %v2479, 0.5
      %v2544 = vmul.f32 %v2480, 0.5
      %v2545 = vmul.f32 %v2481, 0.5
      %v2546 = vmul.f32 %v2482, 0.5
      %v2547 = vmul.f32 %v2483, 0.5
      %v2548 = vmul.f32 %v2484, 0.5
      %v2549 = vmul.f32 %v2485, 0.5
      %v2550 = vmul.f32 %v2486, 0.5
      %v2551 = vmul.f32 %v2487, 0.5
      %v2552 = vmul.f32 %v2488, 0.5
      %v2553 = vmul.f32 %v2489, 0.5
      %v2554 = vmul.f32 %v2490, 0.5
      %v2555 = vmul.f32 %v2491, 0.5
      %v2556 = vmul.f32 %v2492, 0.5
      %v2557 = vmul.f32 %v2493, 0.5
      %v2558 = vmul.f32 %v2494, 0.5
      %v2559 = vmul.f32 %v2495, 0.5
      %v2560 = vmul.f32 %v2496, 0.5
      %v2561 = vmul.f32 %v2497, 0.5
      %v2562 = vmul.f32 %v2498, 0.5
      %v2563 = vmul.f32 %v2499, 0.5
      %v2564 = vmul.f32 %v2500, 0.5
      %v2565 = vmul.f32 %v2501, 0.5
      %v2566 = vmul.f32 %v2502, 0.5
      %v2567 = vmul.f32 %v2503, 0.5
      %v2568 = vmul.f32 %v2504, 0.5
      %v2569 = vmul.f32 %v2505, 0.5
      %v2570 = vmul.f32 %v2506, 0.5
      %v2571 = vmul.f32 %v2507, 0.5
      %v2572 = vmul.f32 %v2508, 0.5
      %v2573 = vmul.f32 %v2509, 0.5
      %v2574 = vmul.f32 %v2510, 0.5
      %v2575 = vmul.f32 %v2511, 0.5
      %v2576 = vmul.f32 %v2512, 0.5
      %v2577 = vmul.f32 %v2513, 0.5
      %v2578 = vmul.f32 %v2514, 0.5
      %v2579 = vmul.f32 %v2515, 0.5
      %v2580 = vmul.f32 %v2516, 0.5
      %v2581 = vmul.f32 %v2517, 0.5
      %v2582 = vmul.f32 %v2518, 0.5
      %v2583 = vmul.f32 %v2519, 0.5
      %v2584 = vmul.f32 %v2520, 0.5
      %v2585 = vmul.f32 %v2521, 0.5
      %v2586 = vmul.f32 %v2522, 0.5
      %v2587 = vmul.f32 %v2523, 0.5
      %v2588 = vmul.f32 %v2524, 0.5
      %v2589 = vmul.f32 %v2525, 0.5
      %v2590 = vmul.f32 %v2526, 0.5
      %v2591 = vmul.f32 %v2527, 0.5
      %v2592 = vmul.f32 %v2528, 0.5
      %v2593 = vmul.f32 %v2529, 0.5
      %v2594 = vmul.f32 %v2530, 0.5
      %v2595 = vmul.f32 %v2531, 0.5
      %v2596 = vmul.f32 %v2532, 0.5
      %v2597 = vmul.f32 %v2533, 0.5
      %v2598 = vmul.f32 %v2534, 0.5
      %v2599 = vmul.f32 %v2535, 0.5
      %v2600 = vmul.f32 %v2536, 0.5
      %v2601 = vmul.f32 %v2537, 0.5
      %v2602 = vmul.f32 %v2538, 0.5
      %v2603 = vmul.f32 %v2539, 0.5
      %v2604 = vmul.f32 %v2540, 0.5
      %v2605 = vmul.f32 %v2541, 0.5
      %v2606 = vmul.f32 %v2542, 0.5
      %v2607 = vmul.f32 %v1937, %v2543
      %v2608 = vmul.f32 %v1939, %v2544
      %v2609 = vmul.f32 %v1941, %v2545
      %v2610 = vmul.f32 %v1943, %v2546
      %v2611 = vmul.f32 %v1947, %v2547
      %v2612 = vmul.f32 %v1949, %v2548
      %v2613 = vmul.f32 %v1951, %v2549
      %v2614 = vmul.f32 %v1953, %v2550
      %v2615 = vmul.f32 %v1957, %v2551
      %v2616 = vmul.f32 %v1959, %v2552
      %v2617 = vmul.f32 %v1961, %v2553
      %v2618 = vmul.f32 %v1963, %v2554
      %v2619 = vmul.f32 %v1967, %v2555
      %v2620 = vmul.f32 %v1969, %v2556
      %v2621 = vmul.f32 %v1971, %v2557
      %v2622 = vmul.f32 %v1973, %v2558
      %v2623 = vmul.f32 %v1977, %v2559
      %v2624 = vmul.f32 %v1979, %v2560
      %v2625 = vmul.f32 %v1981, %v2561
      %v2626 = vmul.f32 %v1983, %v2562
      %v2627 = vmul.f32 %v1987, %v2563
      %v2628 = vmul.f32 %v1989, %v2564
      %v2629 = vmul.f32 %v1991, %v2565
      %v2630 = vmul.f32 %v1993, %v2566
      %v2631 = vmul.f32 %v1997, %v2567
      %v2632 = vmul.f32 %v1999, %v2568
      %v2633 = vmul.f32 %v2001, %v2569
      %v2634 = vmul.f32 %v2003, %v2570
      %v2635 = vmul.f32 %v2007, %v2571
      %v2636 = vmul.f32 %v2009, %v2572
      %v2637 = vmul.f32 %v2011, %v2573
      %v2638 = vmul.f32 %v2013, %v2574
      %v2639 = vmul.f32 %v2017, %v2575
      %v2640 = vmul.f32 %v2019, %v2576
      %v2641 = vmul.f32 %v2021, %v2577
      %v2642 = vmul.f32 %v2023, %v2578
      %v2643 = vmul.f32 %v2027, %v2579
      %v2644 = vmul.f32 %v2029, %v2580
      %v2645 = vmul.f32 %v2031, %v2581
      %v2646 = vmul.f32 %v2033, %v2582
      %v2647 = vmul.f32 %v2037, %v2583
      %v2648 = vmul.f32 %v2039, %v2584
      %v2649 = vmul.f32 %v2041, %v2585
      %v2650 = vmul.f32 %v2043, %v2586
      %v2651 = vmul.f32 %v2047, %v2587
      %v2652 = vmul.f32 %v2049, %v2588
      %v2653 = vmul.f32 %v2051, %v2589
      %v2654 = vmul.f32 %v2053, %v2590
      %v2655 = vmul.f32 %v2057, %v2591
      %v2656 = vmul.f32 %v2059, %v2592
      %v2657 = vmul.f32 %v2061, %v2593
      %v2658 = vmul.f32 %v2063, %v2594
      %v2659 = vmul.f32 %v2067, %v2595
      %v2660 = vmul.f32 %v2069, %v2596
      %v2661 = vmul.f32 %v2071, %v2597
      %v2662 = vmul.f32 %v2073, %v2598
      %v2663 = vmul.f32 %v2077, %v2599
      %v2664 = vmul.f32 %v2079, %v2600
      %v2665 = vmul.f32 %v2081, %v2601
      %v2666 = vmul.f32 %v2083, %v2602
      %v2667 = vmul.f32 %v2087, %v2603
      %v2668 = vmul.f32 %v2089, %v2604
      %v2669 = vmul.f32 %v2091, %v2605
      %v2670 = vmul.f32 %v2093, %v2606
      %v2671 = vpack.c.bf16 %v2609, %v2607
      %v2672 = vpack.c.bf16 %v2610, %v2608
      %v2673 = vpack.c.bf16 %v2613, %v2611
      %v2674 = vpack.c.bf16 %v2614, %v2612
      %v2675 = vpack.c.bf16 %v2617, %v2615
      %v2676 = vpack.c.bf16 %v2618, %v2616
      %v2677 = vpack.c.bf16 %v2621, %v2619
      %v2678 = vpack.c.bf16 %v2622, %v2620
      %v2679 = vpack.c.bf16 %v2625, %v2623
      %v2680 = vpack.c.bf16 %v2626, %v2624
      %v2681 = vpack.c.bf16 %v2629, %v2627
      %v2682 = vpack.c.bf16 %v2630, %v2628
      %v2683 = vpack.c.bf16 %v2633, %v2631
      %v2684 = vpack.c.bf16 %v2634, %v2632
      %v2685 = vpack.c.bf16 %v2637, %v2635
      %v2686 = vpack.c.bf16 %v2638, %v2636
      %v2687 = vpack.c.bf16 %v2641, %v2639
      %v2688 = vpack.c.bf16 %v2642, %v2640
      %v2689 = vpack.c.bf16 %v2645, %v2643
      %v2690 = vpack.c.bf16 %v2646, %v2644
      %v2691 = vpack.c.bf16 %v2649, %v2647
      %v2692 = vpack.c.bf16 %v2650, %v2648
      %v2693 = vpack.c.bf16 %v2653, %v2651
      %v2694 = vpack.c.bf16 %v2654, %v2652
      %v2695 = vpack.c.bf16 %v2657, %v2655
      %v2696 = vpack.c.bf16 %v2658, %v2656
      %v2697 = vpack.c.bf16 %v2661, %v2659
      %v2698 = vpack.c.bf16 %v2662, %v2660
      %v2699 = vpack.c.bf16 %v2665, %v2663
      %v2700 = vpack.c.bf16 %v2666, %v2664
      %v2701 = vpack.c.bf16 %v2669, %v2667
      %v2702 = vpack.c.bf16 %v2670, %v2668
      %v2703 = vld [vmem:[%s7] sm:$0xf]
      %v2704 = vld [vmem:[%s7 + $0x4] sm:$0xf]
      %v2705 = vld [vmem:[%s7 + $0x8] sm:$0xf]
      %v2706 = vld [vmem:[%s7 + $0xc] sm:$0xf]
      %v2707 = vld [vmem:[%s7 + $0x10] sm:$0xf]
      %v2708 = vld [vmem:[%s7 + $0x14] sm:$0xf]
      %v2709 = vld [vmem:[%s7 + $0x18] sm:$0xf]
      %v2710 = vld [vmem:[%s7 + $0x1c] sm:$0xf]
      %v2711 = vld [vmem:[%s7 + $0x20] sm:$0xf]
      %v2712 = vld [vmem:[%s7 + $0x24] sm:$0xf]
      %v2713 = vld [vmem:[%s7 + $0x28] sm:$0xf]
      %v2714 = vld [vmem:[%s7 + $0x2c] sm:$0xf]
      %v2715 = vld [vmem:[%s7 + $0x30] sm:$0xf]
      %v2716 = vld [vmem:[%s7 + $0x34] sm:$0xf]
      %v2717 = vld [vmem:[%s7 + $0x38] sm:$0xf]
      %v2718 = vld [vmem:[%s7 + $0x3c] sm:$0xf]
      %v2719 = vld [vmem:[%s7 + $0x40] sm:$0xf]
      %v2720 = vld [vmem:[%s7 + $0x44] sm:$0xf]
      %v2721 = vld [vmem:[%s7 + $0x48] sm:$0xf]
      %v2722 = vld [vmem:[%s7 + $0x4c] sm:$0xf]
      %v2723 = vld [vmem:[%s7 + $0x50] sm:$0xf]
      %v2724 = vld [vmem:[%s7 + $0x54] sm:$0xf]
      %v2725 = vld [vmem:[%s7 + $0x58] sm:$0xf]
      %v2726 = vld [vmem:[%s7 + $0x5c] sm:$0xf]
      %v2727 = vld [vmem:[%s7 + $0x60] sm:$0xf]
      %v2728 = vld [vmem:[%s7 + $0x64] sm:$0xf]
      %v2729 = vld [vmem:[%s7 + $0x68] sm:$0xf]
      %v2730 = vld [vmem:[%s7 + $0x6c] sm:$0xf]
      %v2731 = vld [vmem:[%s7 + $0x70] sm:$0xf]
      %v2732 = vld [vmem:[%s7 + $0x74] sm:$0xf]
      %v2733 = vld [vmem:[%s7 + $0x78] sm:$0xf]
      %v2734 = vld [vmem:[%s7 + $0x7c] sm:$0xf]
      %v2735 = vld [vmem:[%s8] sm:$0x1]
      %v2737 = vlaneseq
      %v2738 = vshrl.u32 %v2737, 7
      %v2739 = vsub.s32 0, %v2738
      %v2740 = vrot.slane %v2735, %v2739
      %v2774 = vunpack.c.l.b16 %v2703
      %v2775 = vunpack.c.l.b16 %v2704
      %v2776 = vunpack.c.l.b16 %v2705
      %v2777 = vunpack.c.l.b16 %v2706
      %v2778 = vunpack.c.l.b16 %v2707
      %v2779 = vunpack.c.l.b16 %v2708
      %v2780 = vunpack.c.l.b16 %v2709
      %v2781 = vunpack.c.l.b16 %v2710
      %v2782 = vunpack.c.l.b16 %v2711
      %v2783 = vunpack.c.l.b16 %v2712
      %v2784 = vunpack.c.l.b16 %v2713
      %v2785 = vunpack.c.l.b16 %v2714
      %v2786 = vunpack.c.l.b16 %v2715
      %v2787 = vunpack.c.l.b16 %v2716
      %v2788 = vunpack.c.l.b16 %v2717
      %v2789 = vunpack.c.l.b16 %v2718
      %v2790 = vunpack.c.l.b16 %v2719
      %v2791 = vunpack.c.l.b16 %v2720
      %v2792 = vunpack.c.l.b16 %v2721
      %v2793 = vunpack.c.l.b16 %v2722
      %v2794 = vunpack.c.l.b16 %v2723
      %v2795 = vunpack.c.l.b16 %v2724
      %v2796 = vunpack.c.l.b16 %v2725
      %v2797 = vunpack.c.l.b16 %v2726
      %v2798 = vunpack.c.l.b16 %v2727
      %v2799 = vunpack.c.l.b16 %v2728
      %v2800 = vunpack.c.l.b16 %v2729
      %v2801 = vunpack.c.l.b16 %v2730
      %v2802 = vunpack.c.l.b16 %v2731
      %v2803 = vunpack.c.l.b16 %v2732
      %v2804 = vunpack.c.l.b16 %v2733
      %v2805 = vunpack.c.l.b16 %v2734
      %v2806 = vpack.c.b16 %v2775, %v2774
      %v2807 = vpack.c.b16 %v2777, %v2776
      %v2808 = vpack.c.b16 %v2779, %v2778
      %v2809 = vpack.c.b16 %v2781, %v2780
      %v2810 = vpack.c.b16 %v2783, %v2782
      %v2811 = vpack.c.b16 %v2785, %v2784
      %v2812 = vpack.c.b16 %v2787, %v2786
      %v2813 = vpack.c.b16 %v2789, %v2788
      %v2814 = vpack.c.b16 %v2791, %v2790
      %v2815 = vpack.c.b16 %v2793, %v2792
      %v2816 = vpack.c.b16 %v2795, %v2794
      %v2817 = vpack.c.b16 %v2797, %v2796
      %v2818 = vpack.c.b16 %v2799, %v2798
      %v2819 = vpack.c.b16 %v2801, %v2800
      %v2820 = vpack.c.b16 %v2803, %v2802
      %v2821 = vpack.c.b16 %v2805, %v2804
      %2838 = vmatprep.subr.bf16.mxu0 0
      %2839 = vmatpush1.bf16.msra.mxu0 %v2806
      %2840 = vmatprep.subr.bf16.mxu0 0
      %2841 = vmatpush1.bf16.msra.mxu0 %v2807
      %2842 = vmatprep.subr.bf16.mxu0 0
      %2843 = vmatpush1.bf16.msra.mxu0 %v2808
      %2844 = vmatprep.subr.bf16.mxu0 0
      %2845 = vmatpush1.bf16.msra.mxu0 %v2809
      %2846 = vmatprep.subr.bf16.mxu0 0
      %2847 = vmatpush1.bf16.msra.mxu0 %v2810
      %2848 = vmatprep.subr.bf16.mxu0 0
      %2849 = vmatpush1.bf16.msra.mxu0 %v2811
      %2850 = vmatprep.subr.bf16.mxu0 0
      %2851 = vmatpush1.bf16.msra.mxu0 %v2812
      %2852 = vmatprep.subr.bf16.mxu0 0
      %2853 = vmatpush1.bf16.msra.mxu0 %v2813
      %2854 = vmatprep.subr.bf16.mxu0 0
      %2855 = vmatpush1.bf16.msra.mxu0 %v2814
      %2856 = vmatprep.subr.bf16.mxu0 0
      %2857 = vmatpush1.bf16.msra.mxu0 %v2815
      %2858 = vmatprep.subr.bf16.mxu0 0
      %2859 = vmatpush1.bf16.msra.mxu0 %v2816
      %2860 = vmatprep.subr.bf16.mxu0 0
      %2861 = vmatpush1.bf16.msra.mxu0 %v2817
      %2862 = vmatprep.subr.bf16.mxu0 0
      %2863 = vmatpush1.bf16.msra.mxu0 %v2818
      %2864 = vmatprep.subr.bf16.mxu0 0
      %2865 = vmatpush1.bf16.msra.mxu0 %v2819
      %2866 = vmatprep.subr.bf16.mxu0 0
      %2867 = vmatpush1.bf16.msra.mxu0 %v2820
      %2868 = vmatprep.subr.bf16.mxu0 0
      %2869 = vmatpush1.bf16.msra.mxu0 %v2821
      %2870 = vmatprep.mubr.bf16.mxu0 %v2672
      %2871 = vmatmul.mubr.bf16.gmra.mrb[0].mxu0 %v2671
      %v2872 = vpop.f32.mrb[0].mxu0
      %v2873 = vadd.f32 %v2740, %v2872
      %v2874 = vpop.f32.mrb[0].mxu0
      %v2875 = vpop.f32.mrb[0].mxu0
      %v2876 = vadd.f32 %v2740, %v2875
      %v2877 = vpop.f32.mrb[0].mxu0
      %2878 = vmatprep.mubr.bf16.mxu0 %v2674
      %2879 = vmatmul.mubr.bf16.gmra.mrb[0].mxu0 %v2673
      %v2880 = vpop.f32.mrb[0].mxu0
      %v2881 = vadd.f32 %v2740, %v2880
      %v2882 = vpop.f32.mrb[0].mxu0
      %v2883 = vpop.f32.mrb[0].mxu0
      %v2884 = vadd.f32 %v2740, %v2883
      %v2885 = vpop.f32.mrb[0].mxu0
      %2886 = vmatprep.mubr.bf16.mxu0 %v2676
      %2887 = vmatmul.mubr.bf16.gmra.mrb[0].mxu0 %v2675
      %v2888 = vpop.f32.mrb[0].mxu0
      %v2889 = vadd.f32 %v2740, %v2888
      %v2890 = vpop.f32.mrb[0].mxu0
      %v2891 = vpop.f32.mrb[0].mxu0
      %v2892 = vadd.f32 %v2740, %v2891
      %v2893 = vpop.f32.mrb[0].mxu0
      %2894 = vmatprep.mubr.bf16.mxu0 %v2678
      %2895 = vmatmul.mubr.bf16.gmra.mrb[0].mxu0 %v2677
      %v2896 = vpop.f32.mrb[0].mxu0
      %v2897 = vadd.f32 %v2740, %v2896
      %v2898 = vpop.f32.mrb[0].mxu0
      %v2899 = vpop.f32.mrb[0].mxu0
      %v2900 = vadd.f32 %v2740, %v2899
      %v2901 = vpop.f32.mrb[0].mxu0
      %2902 = vmatprep.mubr.bf16.mxu0 %v2680
      %2903 = vmatmul.mubr.bf16.gmra.mrb[0].mxu0 %v2679
      %v2904 = vpop.f32.mrb[0].mxu0
      %v2905 = vadd.f32 %v2740, %v2904
      %v2906 = vpop.f32.mrb[0].mxu0
      %v2907 = vpop.f32.mrb[0].mxu0
      %v2908 = vadd.f32 %v2740, %v2907
      %v2909 = vpop.f32.mrb[0].mxu0
      %2910 = vmatprep.mubr.bf16.mxu0 %v2682
      %2911 = vmatmul.mubr.bf16.gmra.mrb[0].mxu0 %v2681
      %v2912 = vpop.f32.mrb[0].mxu0
      %v2913 = vadd.f32 %v2740, %v2912
      %v2914 = vpop.f32.mrb[0].mxu0
      %v2915 = vpop.f32.mrb[0].mxu0
      %v2916 = vadd.f32 %v2740, %v2915
      %v2917 = vpop.f32.mrb[0].mxu0
      %2918 = vmatprep.mubr.bf16.mxu0 %v2684
      %2919 = vmatmul.mubr.bf16.gmra.mrb[0].mxu0 %v2683
      %v2920 = vpop.f32.mrb[0].mxu0
      %v2921 = vadd.f32 %v2740, %v2920
      %v2922 = vpop.f32.mrb[0].mxu0
      %v2923 = vpop.f32.mrb[0].mxu0
      %v2924 = vadd.f32 %v2740, %v2923
      %v2925 = vpop.f32.mrb[0].mxu0
      %2926 = vmatprep.mubr.bf16.mxu0 %v2686
      %2927 = vmatmul.mubr.bf16.gmra.mrb[0].mxu0 %v2685
      %v2928 = vpop.f32.mrb[0].mxu0
      %v2929 = vadd.f32 %v2740, %v2928
      %v2930 = vpop.f32.mrb[0].mxu0
      %v2931 = vpop.f32.mrb[0].mxu0
      %v2932 = vadd.f32 %v2740, %v2931
      %v2933 = vpop.f32.mrb[0].mxu0
      %2934 = vmatprep.mubr.bf16.mxu0 %v2688
      %2935 = vmatmul.mubr.bf16.gmra.mrb[0].mxu0 %v2687
      %v2936 = vpop.f32.mrb[0].mxu0
      %v2937 = vadd.f32 %v2740, %v2936
      %v2938 = vpop.f32.mrb[0].mxu0
      %v2939 = vpop.f32.mrb[0].mxu0
      %v2940 = vadd.f32 %v2740, %v2939
      %v2941 = vpop.f32.mrb[0].mxu0
      %2942 = vmatprep.mubr.bf16.mxu0 %v2690
      %2943 = vmatmul.mubr.bf16.gmra.mrb[0].mxu0 %v2689
      %v2944 = vpop.f32.mrb[0].mxu0
      %v2945 = vadd.f32 %v2740, %v2944
      %v2946 = vpop.f32.mrb[0].mxu0
      %v2947 = vpop.f32.mrb[0].mxu0
      %v2948 = vadd.f32 %v2740, %v2947
      %v2949 = vpop.f32.mrb[0].mxu0
      %2950 = vmatprep.mubr.bf16.mxu0 %v2692
      %2951 = vmatmul.mubr.bf16.gmra.mrb[0].mxu0 %v2691
      %v2952 = vpop.f32.mrb[0].mxu0
      %v2953 = vadd.f32 %v2740, %v2952
      %v2954 = vpop.f32.mrb[0].mxu0
      %v2955 = vpop.f32.mrb[0].mxu0
      %v2956 = vadd.f32 %v2740, %v2955
      %v2957 = vpop.f32.mrb[0].mxu0
      %2958 = vmatprep.mubr.bf16.mxu0 %v2694
      %2959 = vmatmul.mubr.bf16.gmra.mrb[0].mxu0 %v2693
      %v2960 = vpop.f32.mrb[0].mxu0
      %v2961 = vadd.f32 %v2740, %v2960
      %v2962 = vpop.f32.mrb[0].mxu0
      %v2963 = vpop.f32.mrb[0].mxu0
      %v2964 = vadd.f32 %v2740, %v2963
      %v2965 = vpop.f32.mrb[0].mxu0
      %2966 = vmatprep.mubr.bf16.mxu0 %v2696
      %2967 = vmatmul.mubr.bf16.gmra.mrb[0].mxu0 %v2695
      %v2968 = vpop.f32.mrb[0].mxu0
      %v2969 = vadd.f32 %v2740, %v2968
      %v2970 = vpop.f32.mrb[0].mxu0
      %v2971 = vpop.f32.mrb[0].mxu0
      %v2972 = vadd.f32 %v2740, %v2971
      %v2973 = vpop.f32.mrb[0].mxu0
      %2974 = vmatprep.mubr.bf16.mxu0 %v2698
      %2975 = vmatmul.mubr.bf16.gmra.mrb[0].mxu0 %v2697
      %v2976 = vpop.f32.mrb[0].mxu0
      %v2977 = vadd.f32 %v2740, %v2976
      %v2978 = vpop.f32.mrb[0].mxu0
      %v2979 = vpop.f32.mrb[0].mxu0
      %v2980 = vadd.f32 %v2740, %v2979
      %v2981 = vpop.f32.mrb[0].mxu0
      %2982 = vmatprep.mubr.bf16.mxu0 %v2700
      %2983 = vmatmul.mubr.bf16.gmra.mrb[0].mxu0 %v2699
      %v2984 = vpop.f32.mrb[0].mxu0
      %v2985 = vadd.f32 %v2740, %v2984
      %v2986 = vpop.f32.mrb[0].mxu0
      %v2987 = vpop.f32.mrb[0].mxu0
      %v2988 = vadd.f32 %v2740, %v2987
      %v2989 = vpop.f32.mrb[0].mxu0
      %2990 = vmatprep.mubr.bf16.mxu0 %v2702
      %2991 = vmatmul.mubr.bf16.gmra.mrb[0].mxu0 %v2701
      %v2992 = vpop.f32.mrb[0].mxu0
      %v2993 = vadd.f32 %v2740, %v2992
      %v2994 = vpop.f32.mrb[0].mxu0
      %v2995 = vpop.f32.mrb[0].mxu0
      %v2996 = vadd.f32 %v2740, %v2995
      %v2997 = vpop.f32.mrb[0].mxu0
      %2998 = vdwg.mxu0
      %v2999 = vpack.c.bf16 %v2876, %v2873
      %v3000 = vpack.c.bf16 %v2884, %v2881
      %v3001 = vpack.c.bf16 %v2892, %v2889
      %v3002 = vpack.c.bf16 %v2900, %v2897
      %v3003 = vpack.c.bf16 %v2908, %v2905
      %v3004 = vpack.c.bf16 %v2916, %v2913
      %v3005 = vpack.c.bf16 %v2924, %v2921
      %v3006 = vpack.c.bf16 %v2932, %v2929
      %v3007 = vpack.c.bf16 %v2940, %v2937
      %v3008 = vpack.c.bf16 %v2948, %v2945
      %v3009 = vpack.c.bf16 %v2956, %v2953
      %v3010 = vpack.c.bf16 %v2964, %v2961
      %v3011 = vpack.c.bf16 %v2972, %v2969
      %v3012 = vpack.c.bf16 %v2980, %v2977
      %v3013 = vpack.c.bf16 %v2988, %v2985
      %v3014 = vpack.c.bf16 %v2996, %v2993
      %v3015 = vld [vmem:[%s9] sm:$0xff]
      %v3016 = vld [vmem:[%s9 + $0x8] sm:$0xff]
      %v3017 = vld [vmem:[%s9 + $0x10] sm:$0xff]
      %v3018 = vld [vmem:[%s9 + $0x18] sm:$0xff]
      %v3019 = vld [vmem:[%s9 + $0x20] sm:$0xff]
      %v3020 = vld [vmem:[%s9 + $0x28] sm:$0xff]
      %v3021 = vld [vmem:[%s9 + $0x30] sm:$0xff]
      %v3022 = vld [vmem:[%s9 + $0x38] sm:$0xff]
      %v3023 = vld [vmem:[%s9 + $0x40] sm:$0xff]
      %v3024 = vld [vmem:[%s9 + $0x48] sm:$0xff]
      %v3025 = vld [vmem:[%s9 + $0x50] sm:$0xff]
      %v3026 = vld [vmem:[%s9 + $0x58] sm:$0xff]
      %v3027 = vld [vmem:[%s9 + $0x60] sm:$0xff]
      %v3028 = vld [vmem:[%s9 + $0x68] sm:$0xff]
      %v3029 = vld [vmem:[%s9 + $0x70] sm:$0xff]
      %v3030 = vld [vmem:[%s9 + $0x78] sm:$0xff]
      %v3031 = vld [vmem:[%s10] sm:$0x3]
      %v3033 = vlaneseq
      %v3034 = vshrl.u32 %v3033, 7
      %v3035 = vsub.s32 0, %v3034
      %v3036 = vrot.slane %v3031, %v3035
      %v3037 = vlaneseq
      %v3038 = vshrl.u32 %v3037, 7
      %v3039 = vsub.s32 1, %v3038
      %v3040 = vrot.slane %v3031, %v3039
      %v3059 = vunpack.c.l.b16 %v3015
      %v3060 = vunpack.c.h.b16 %v3015
      %v3061 = vunpack.c.l.b16 %v3016
      %v3062 = vunpack.c.h.b16 %v3016
      %v3063 = vunpack.c.l.b16 %v3017
      %v3064 = vunpack.c.h.b16 %v3017
      %v3065 = vunpack.c.l.b16 %v3018
      %v3066 = vunpack.c.h.b16 %v3018
      %v3067 = vunpack.c.l.b16 %v3019
      %v3068 = vunpack.c.h.b16 %v3019
      %v3069 = vunpack.c.l.b16 %v3020
      %v3070 = vunpack.c.h.b16 %v3020
      %v3071 = vunpack.c.l.b16 %v3021
      %v3072 = vunpack.c.h.b16 %v3021
      %v3073 = vunpack.c.l.b16 %v3022
      %v3074 = vunpack.c.h.b16 %v3022
      %v3075 = vunpack.c.l.b16 %v3023
      %v3076 = vunpack.c.h.b16 %v3023
      %v3077 = vunpack.c.l.b16 %v3024
      %v3078 = vunpack.c.h.b16 %v3024
      %v3079 = vunpack.c.l.b16 %v3025
      %v3080 = vunpack.c.h.b16 %v3025
      %v3081 = vunpack.c.l.b16 %v3026
      %v3082 = vunpack.c.h.b16 %v3026
      %v3083 = vunpack.c.l.b16 %v3027
      %v3084 = vunpack.c.h.b16 %v3027
      %v3085 = vunpack.c.l.b16 %v3028
      %v3086 = vunpack.c.h.b16 %v3028
      %v3087 = vunpack.c.l.b16 %v3029
      %v3088 = vunpack.c.h.b16 %v3029
      %v3089 = vunpack.c.l.b16 %v3030
      %v3090 = vunpack.c.h.b16 %v3030
      %v3091 = vpack.c.b16 %v3061, %v3059
      %v3092 = vpack.c.b16 %v3062, %v3060
      %v3093 = vpack.c.b16 %v3065, %v3063
      %v3094 = vpack.c.b16 %v3066, %v3064
      %v3095 = vpack.c.b16 %v3069, %v3067
      %v3096 = vpack.c.b16 %v3070, %v3068
      %v3097 = vpack.c.b16 %v3073, %v3071
      %v3098 = vpack.c.b16 %v3074, %v3072
      %v3099 = vpack.c.b16 %v3077, %v3075
      %v3100 = vpack.c.b16 %v3078, %v3076
      %v3101 = vpack.c.b16 %v3081, %v3079
      %v3102 = vpack.c.b16 %v3082, %v3080
      %v3103 = vpack.c.b16 %v3085, %v3083
      %v3104 = vpack.c.b16 %v3086, %v3084
      %v3105 = vpack.c.b16 %v3089, %v3087
      %v3106 = vpack.c.b16 %v3090, %v3088
      %3123 = vmatprep.subr.bf16.mxu0 %v3092
      %3124 = vmatpush1.bf16.msra.mxu0 %v3091
      %3125 = vmatprep.subr.bf16.mxu0 %v3094
      %3126 = vmatpush1.bf16.msra.mxu0 %v3093
      %3127 = vmatprep.subr.bf16.mxu0 %v3096
      %3128 = vmatpush1.bf16.msra.mxu0 %v3095
      %3129 = vmatprep.subr.bf16.mxu0 %v3098
      %3130 = vmatpush1.bf16.msra.mxu0 %v3097
      %3131 = vmatprep.subr.bf16.mxu0 %v3100
      %3132 = vmatpush1.bf16.msra.mxu0 %v3099
      %3133 = vmatprep.subr.bf16.mxu0 %v3102
      %3134 = vmatpush1.bf16.msra.mxu0 %v3101
      %3135 = vmatprep.subr.bf16.mxu0 %v3104
      %3136 = vmatpush1.bf16.msra.mxu0 %v3103
      %3137 = vmatprep.subr.bf16.mxu0 %v3106
      %3138 = vmatpush1.bf16.msra.mxu0 %v3105
      %3139 = vmatprep.subr.bf16.mxu0 0
      %3140 = vmatpush1.bf16.msra.mxu0 0
      %3141 = vmatprep.subr.bf16.mxu0 0
      %3142 = vmatpush1.bf16.msra.mxu0 0
      %3143 = vmatprep.subr.bf16.mxu0 0
      %3144 = vmatpush1.bf16.msra.mxu0 0
      %3145 = vmatprep.subr.bf16.mxu0 0
      %3146 = vmatpush1.bf16.msra.mxu0 0
      %3147 = vmatprep.subr.bf16.mxu0 0
      %3148 = vmatpush1.bf16.msra.mxu0 0
      %3149 = vmatprep.subr.bf16.mxu0 0
      %3150 = vmatpush1.bf16.msra.mxu0 0
      %3151 = vmatprep.subr.bf16.mxu0 0
      %3152 = vmatpush1.bf16.msra.mxu0 0
      %3153 = vmatprep.subr.bf16.mxu0 0
      %3154 = vmatpush1.bf16.msra.mxu0 0
      %3155 = vmatprep.mubr.bf16.mxu0 0
      %3156 = vmatmul.mubr.bf16.gmra.mrb[0].mxu0 %v2999
      %v3157 = vpop.f32.mrb[0].mxu0
      %v3158 = vadd.f32 %v3036, %v3157
      %v3159 = vpop.f32.mrb[0].mxu0
      %v3160 = vadd.f32 %v3040, %v3159
      %v3161 = vpop.f32.mrb[0].mxu0
      %v3162 = vadd.f32 %v3036, %v3161
      %v3163 = vpop.f32.mrb[0].mxu0
      %v3164 = vadd.f32 %v3040, %v3163
      %3165 = vmatprep.mubr.bf16.mxu0 0
      %3166 = vmatmul.mubr.bf16.gmra.mrb[0].mxu0 %v3000
      %v3167 = vpop.f32.mrb[0].mxu0
      %v3168 = vadd.f32 %v3036, %v3167
      %v3169 = vpop.f32.mrb[0].mxu0
      %v3170 = vadd.f32 %v3040, %v3169
      %v3171 = vpop.f32.mrb[0].mxu0
      %v3172 = vadd.f32 %v3036, %v3171
      %v3173 = vpop.f32.mrb[0].mxu0
      %v3174 = vadd.f32 %v3040, %v3173
      %3175 = vmatprep.mubr.bf16.mxu0 0
      %3176 = vmatmul.mubr.bf16.gmra.mrb[0].mxu0 %v3001
      %v3177 = vpop.f32.mrb[0].mxu0
      %v3178 = vadd.f32 %v3036, %v3177
      %v3179 = vpop.f32.mrb[0].mxu0
      %v3180 = vadd.f32 %v3040, %v3179
      %v3181 = vpop.f32.mrb[0].mxu0
      %v3182 = vadd.f32 %v3036, %v3181
      %v3183 = vpop.f32.mrb[0].mxu0
      %v3184 = vadd.f32 %v3040, %v3183
      %3185 = vmatprep.mubr.bf16.mxu0 0
      %3186 = vmatmul.mubr.bf16.gmra.mrb[0].mxu0 %v3002
      %v3187 = vpop.f32.mrb[0].mxu0
      %v3188 = vadd.f32 %v3036, %v3187
      %v3189 = vpop.f32.mrb[0].mxu0
      %v3190 = vadd.f32 %v3040, %v3189
      %v3191 = vpop.f32.mrb[0].mxu0
      %v3192 = vadd.f32 %v3036, %v3191
      %v3193 = vpop.f32.mrb[0].mxu0
      %v3194 = vadd.f32 %v3040, %v3193
      %3195 = vmatprep.mubr.bf16.mxu0 0
      %3196 = vmatmul.mubr.bf16.gmra.mrb[0].mxu0 %v3003
      %v3197 = vpop.f32.mrb[0].mxu0
      %v3198 = vadd.f32 %v3036, %v3197
      %v3199 = vpop.f32.mrb[0].mxu0
      %v3200 = vadd.f32 %v3040, %v3199
      %v3201 = vpop.f32.mrb[0].mxu0
      %v3202 = vadd.f32 %v3036, %v3201
      %v3203 = vpop.f32.mrb[0].mxu0
      %v3204 = vadd.f32 %v3040, %v3203
      %3205 = vmatprep.mubr.bf16.mxu0 0
      %3206 = vmatmul.mubr.bf16.gmra.mrb[0].mxu0 %v3004
      %v3207 = vpop.f32.mrb[0].mxu0
      %v3208 = vadd.f32 %v3036, %v3207
      %v3209 = vpop.f32.mrb[0].mxu0
      %v3210 = vadd.f32 %v3040, %v3209
      %v3211 = vpop.f32.mrb[0].mxu0
      %v3212 = vadd.f32 %v3036, %v3211
      %v3213 = vpop.f32.mrb[0].mxu0
      %v3214 = vadd.f32 %v3040, %v3213
      %3215 = vmatprep.mubr.bf16.mxu0 0
      %3216 = vmatmul.mubr.bf16.gmra.mrb[0].mxu0 %v3005
      %v3217 = vpop.f32.mrb[0].mxu0
      %v3218 = vadd.f32 %v3036, %v3217
      %v3219 = vpop.f32.mrb[0].mxu0
      %v3220 = vadd.f32 %v3040, %v3219
      %v3221 = vpop.f32.mrb[0].mxu0
      %v3222 = vadd.f32 %v3036, %v3221
      %v3223 = vpop.f32.mrb[0].mxu0
      %v3224 = vadd.f32 %v3040, %v3223
      %3225 = vmatprep.mubr.bf16.mxu0 0
      %3226 = vmatmul.mubr.bf16.gmra.mrb[0].mxu0 %v3006
      %v3227 = vpop.f32.mrb[0].mxu0
      %v3228 = vadd.f32 %v3036, %v3227
      %v3229 = vpop.f32.mrb[0].mxu0
      %v3230 = vadd.f32 %v3040, %v3229
      %v3231 = vpop.f32.mrb[0].mxu0
      %v3232 = vadd.f32 %v3036, %v3231
      %v3233 = vpop.f32.mrb[0].mxu0
      %v3234 = vadd.f32 %v3040, %v3233
      %3235 = vmatprep.mubr.bf16.mxu0 0
      %3236 = vmatmul.mubr.bf16.gmra.mrb[0].mxu0 %v3007
      %v3237 = vpop.f32.mrb[0].mxu0
      %v3238 = vadd.f32 %v3036, %v3237
      %v3239 = vpop.f32.mrb[0].mxu0
      %v3240 = vadd.f32 %v3040, %v3239
      %v3241 = vpop.f32.mrb[0].mxu0
      %v3242 = vadd.f32 %v3036, %v3241
      %v3243 = vpop.f32.mrb[0].mxu0
      %v3244 = vadd.f32 %v3040, %v3243
      %3245 = vmatprep.mubr.bf16.mxu0 0
      %3246 = vmatmul.mubr.bf16.gmra.mrb[0].mxu0 %v3008
      %v3247 = vpop.f32.mrb[0].mxu0
      %v3248 = vadd.f32 %v3036, %v3247
      %v3249 = vpop.f32.mrb[0].mxu0
      %v3250 = vadd.f32 %v3040, %v3249
      %v3251 = vpop.f32.mrb[0].mxu0
      %v3252 = vadd.f32 %v3036, %v3251
      %v3253 = vpop.f32.mrb[0].mxu0
      %v3254 = vadd.f32 %v3040, %v3253
      %3255 = vmatprep.mubr.bf16.mxu0 0
      %3256 = vmatmul.mubr.bf16.gmra.mrb[0].mxu0 %v3009
      %v3257 = vpop.f32.mrb[0].mxu0
      %v3258 = vadd.f32 %v3036, %v3257
      %v3259 = vpop.f32.mrb[0].mxu0
      %v3260 = vadd.f32 %v3040, %v3259
      %v3261 = vpop.f32.mrb[0].mxu0
      %v3262 = vadd.f32 %v3036, %v3261
      %v3263 = vpop.f32.mrb[0].mxu0
      %v3264 = vadd.f32 %v3040, %v3263
      %3265 = vmatprep.mubr.bf16.mxu0 0
      %3266 = vmatmul.mubr.bf16.gmra.mrb[0].mxu0 %v3010
      %v3267 = vpop.f32.mrb[0].mxu0
      %v3268 = vadd.f32 %v3036, %v3267
      %v3269 = vpop.f32.mrb[0].mxu0
      %v3270 = vadd.f32 %v3040, %v3269
      %v3271 = vpop.f32.mrb[0].mxu0
      %v3272 = vadd.f32 %v3036, %v3271
      %v3273 = vpop.f32.mrb[0].mxu0
      %v3274 = vadd.f32 %v3040, %v3273
      %3275 = vmatprep.mubr.bf16.mxu0 0
      %3276 = vmatmul.mubr.bf16.gmra.mrb[0].mxu0 %v3011
      %v3277 = vpop.f32.mrb[0].mxu0
      %v3278 = vadd.f32 %v3036, %v3277
      %v3279 = vpop.f32.mrb[0].mxu0
      %v3280 = vadd.f32 %v3040, %v3279
      %v3281 = vpop.f32.mrb[0].mxu0
      %v3282 = vadd.f32 %v3036, %v3281
      %v3283 = vpop.f32.mrb[0].mxu0
      %v3284 = vadd.f32 %v3040, %v3283
      %3285 = vmatprep.mubr.bf16.mxu0 0
      %3286 = vmatmul.mubr.bf16.gmra.mrb[0].mxu0 %v3012
      %v3287 = vpop.f32.mrb[0].mxu0
      %v3288 = vadd.f32 %v3036, %v3287
      %v3289 = vpop.f32.mrb[0].mxu0
      %v3290 = vadd.f32 %v3040, %v3289
      %v3291 = vpop.f32.mrb[0].mxu0
      %v3292 = vadd.f32 %v3036, %v3291
      %v3293 = vpop.f32.mrb[0].mxu0
      %v3294 = vadd.f32 %v3040, %v3293
      %3295 = vmatprep.mubr.bf16.mxu0 0
      %3296 = vmatmul.mubr.bf16.gmra.mrb[0].mxu0 %v3013
      %v3297 = vpop.f32.mrb[0].mxu0
      %v3298 = vadd.f32 %v3036, %v3297
      %v3299 = vpop.f32.mrb[0].mxu0
      %v3300 = vadd.f32 %v3040, %v3299
      %v3301 = vpop.f32.mrb[0].mxu0
      %v3302 = vadd.f32 %v3036, %v3301
      %v3303 = vpop.f32.mrb[0].mxu0
      %v3304 = vadd.f32 %v3040, %v3303
      %3305 = vmatprep.mubr.bf16.mxu0 0
      %3306 = vmatmul.mubr.bf16.gmra.mrb[0].mxu0 %v3014
      %v3307 = vpop.f32.mrb[0].mxu0
      %v3308 = vadd.f32 %v3036, %v3307
      %v3309 = vpop.f32.mrb[0].mxu0
      %v3310 = vadd.f32 %v3040, %v3309
      %v3311 = vpop.f32.mrb[0].mxu0
      %v3312 = vadd.f32 %v3036, %v3311
      %v3313 = vpop.f32.mrb[0].mxu0
      %v3314 = vadd.f32 %v3040, %v3313
      %3315 = vdwg.mxu0
      %v3316 = vmul.f32 %v3158, %v3158
      %v3317 = vmul.f32 %v3160, %v3160
      %v3318 = vmul.f32 %v3162, %v3162
      %v3319 = vmul.f32 %v3164, %v3164
      %v3320 = vmul.f32 %v3168, %v3168
      %v3321 = vmul.f32 %v3170, %v3170
      %v3322 = vmul.f32 %v3172, %v3172
      %v3323 = vmul.f32 %v3174, %v3174
      %v3324 = vmul.f32 %v3178, %v3178
      %v3325 = vmul.f32 %v3180, %v3180
      %v3326 = vmul.f32 %v3182, %v3182
      %v3327 = vmul.f32 %v3184, %v3184
      %v3328 = vmul.f32 %v3188, %v3188
      %v3329 = vmul.f32 %v3190, %v3190
      %v3330 = vmul.f32 %v3192, %v3192
      %v3331 = vmul.f32 %v3194, %v3194
      %v3332 = vmul.f32 %v3198, %v3198
      %v3333 = vmul.f32 %v3200, %v3200
      %v3334 = vmul.f32 %v3202, %v3202
      %v3335 = vmul.f32 %v3204, %v3204
      %v3336 = vmul.f32 %v3208, %v3208
      %v3337 = vmul.f32 %v3210, %v3210
      %v3338 = vmul.f32 %v3212, %v3212
      %v3339 = vmul.f32 %v3214, %v3214
      %v3340 = vmul.f32 %v3218, %v3218
      %v3341 = vmul.f32 %v3220, %v3220
      %v3342 = vmul.f32 %v3222, %v3222
      %v3343 = vmul.f32 %v3224, %v3224
      %v3344 = vmul.f32 %v3228, %v3228
      %v3345 = vmul.f32 %v3230, %v3230
      %v3346 = vmul.f32 %v3232, %v3232
      %v3347 = vmul.f32 %v3234, %v3234
      %v3348 = vmul.f32 %v3238, %v3238
      %v3349 = vmul.f32 %v3240, %v3240
      %v3350 = vmul.f32 %v3242, %v3242
      %v3351 = vmul.f32 %v3244, %v3244
      %v3352 = vmul.f32 %v3248, %v3248
      %v3353 = vmul.f32 %v3250, %v3250
      %v3354 = vmul.f32 %v3252, %v3252
      %v3355 = vmul.f32 %v3254, %v3254
      %v3356 = vmul.f32 %v3258, %v3258
      %v3357 = vmul.f32 %v3260, %v3260
      %v3358 = vmul.f32 %v3262, %v3262
      %v3359 = vmul.f32 %v3264, %v3264
      %v3360 = vmul.f32 %v3268, %v3268
      %v3361 = vmul.f32 %v3270, %v3270
      %v3362 = vmul.f32 %v3272, %v3272
      %v3363 = vmul.f32 %v3274, %v3274
      %v3364 = vmul.f32 %v3278, %v3278
      %v3365 = vmul.f32 %v3280, %v3280
      %v3366 = vmul.f32 %v3282, %v3282
      %v3367 = vmul.f32 %v3284, %v3284
      %v3368 = vmul.f32 %v3288, %v3288
      %v3369 = vmul.f32 %v3290, %v3290
      %v3370 = vmul.f32 %v3292, %v3292
      %v3371 = vmul.f32 %v3294, %v3294
      %v3372 = vmul.f32 %v3298, %v3298
      %v3373 = vmul.f32 %v3300, %v3300
      %v3374 = vmul.f32 %v3302, %v3302
      %v3375 = vmul.f32 %v3304, %v3304
      %v3376 = vmul.f32 %v3308, %v3308
      %v3377 = vmul.f32 %v3310, %v3310
      %v3378 = vmul.f32 %v3312, %v3312
      %v3379 = vmul.f32 %v3314, %v3314
      %v3380 = vmul.f32 %v3158, %v3316
      %v3381 = vmul.f32 %v3160, %v3317
      %v3382 = vmul.f32 %v3162, %v3318
      %v3383 = vmul.f32 %v3164, %v3319
      %v3384 = vmul.f32 %v3168, %v3320
      %v3385 = vmul.f32 %v3170, %v3321
      %v3386 = vmul.f32 %v3172, %v3322
      %v3387 = vmul.f32 %v3174, %v3323
      %v3388 = vmul.f32 %v3178, %v3324
      %v3389 = vmul.f32 %v3180, %v3325
      %v3390 = vmul.f32 %v3182, %v3326
      %v3391 = vmul.f32 %v3184, %v3327
      %v3392 = vmul.f32 %v3188, %v3328
      %v3393 = vmul.f32 %v3190, %v3329
      %v3394 = vmul.f32 %v3192, %v3330
      %v3395 = vmul.f32 %v3194, %v3331
      %v3396 = vmul.f32 %v3198, %v3332
      %v3397 = vmul.f32 %v3200, %v3333
      %v3398 = vmul.f32 %v3202, %v3334
      %v3399 = vmul.f32 %v3204, %v3335
      %v3400 = vmul.f32 %v3208, %v3336
      %v3401 = vmul.f32 %v3210, %v3337
      %v3402 = vmul.f32 %v3212, %v3338
      %v3403 = vmul.f32 %v3214, %v3339
      %v3404 = vmul.f32 %v3218, %v3340
      %v3405 = vmul.f32 %v3220, %v3341
      %v3406 = vmul.f32 %v3222, %v3342
      %v3407 = vmul.f32 %v3224, %v3343
      %v3408 = vmul.f32 %v3228, %v3344
      %v3409 = vmul.f32 %v3230, %v3345
      %v3410 = vmul.f32 %v3232, %v3346
      %v3411 = vmul.f32 %v3234, %v3347
      %v3412 = vmul.f32 %v3238, %v3348
      %v3413 = vmul.f32 %v3240, %v3349
      %v3414 = vmul.f32 %v3242, %v3350
      %v3415 = vmul.f32 %v3244, %v3351
      %v3416 = vmul.f32 %v3248, %v3352
      %v3417 = vmul.f32 %v3250, %v3353
      %v3418 = vmul.f32 %v3252, %v3354
      %v3419 = vmul.f32 %v3254, %v3355
      %v3420 = vmul.f32 %v3258, %v3356
      %v3421 = vmul.f32 %v3260, %v3357
      %v3422 = vmul.f32 %v3262, %v3358
      %v3423 = vmul.f32 %v3264, %v3359
      %v3424 = vmul.f32 %v3268, %v3360
      %v3425 = vmul.f32 %v3270, %v3361
      %v3426 = vmul.f32 %v3272, %v3362
      %v3427 = vmul.f32 %v3274, %v3363
      %v3428 = vmul.f32 %v3278, %v3364
      %v3429 = vmul.f32 %v3280, %v3365
      %v3430 = vmul.f32 %v3282, %v3366
      %v3431 = vmul.f32 %v3284, %v3367
      %v3432 = vmul.f32 %v3288, %v3368
      %v3433 = vmul.f32 %v3290, %v3369
      %v3434 = vmul.f32 %v3292, %v3370
      %v3435 = vmul.f32 %v3294, %v3371
      %v3436 = vmul.f32 %v3298, %v3372
      %v3437 = vmul.f32 %v3300, %v3373
      %v3438 = vmul.f32 %v3302, %v3374
      %v3439 = vmul.f32 %v3304, %v3375
      %v3440 = vmul.f32 %v3308, %v3376
      %v3441 = vmul.f32 %v3310, %v3377
      %v3442 = vmul.f32 %v3312, %v3378
      %v3443 = vmul.f32 %v3314, %v3379
      %v3444 = vmul.f32 %v3380, 0.044715
      %v3445 = vmul.f32 %v3381, 0.044715
      %v3446 = vmul.f32 %v3382, 0.044715
      %v3447 = vmul.f32 %v3383, 0.044715
      %v3448 = vmul.f32 %v3384, 0.044715
      %v3449 = vmul.f32 %v3385, 0.044715
      %v3450 = vmul.f32 %v3386, 0.044715
      %v3451 = vmul.f32 %v3387, 0.044715
      %v3452 = vmul.f32 %v3388, 0.044715
      %v3453 = vmul.f32 %v3389, 0.044715
      %v3454 = vmul.f32 %v3390, 0.044715
      %v3455 = vmul.f32 %v3391, 0.044715
      %v3456 = vmul.f32 %v3392, 0.044715
      %v3457 = vmul.f32 %v3393, 0.044715
      %v3458 = vmul.f32 %v3394, 0.044715
      %v3459 = vmul.f32 %v3395, 0.044715
      %v3460 = vmul.f32 %v3396, 0.044715
      %v3461 = vmul.f32 %v3397, 0.044715
      %v3462 = vmul.f32 %v3398, 0.044715
      %v3463 = vmul.f32 %v3399, 0.044715
      %v3464 = vmul.f32 %v3400, 0.044715
      %v3465 = vmul.f32 %v3401, 0.044715
      %v3466 = vmul.f32 %v3402, 0.044715
      %v3467 = vmul.f32 %v3403, 0.044715
      %v3468 = vmul.f32 %v3404, 0.044715
      %v3469 = vmul.f32 %v3405, 0.044715
      %v3470 = vmul.f32 %v3406, 0.044715
      %v3471 = vmul.f32 %v3407, 0.044715
      %v3472 = vmul.f32 %v3408, 0.044715
      %v3473 = vmul.f32 %v3409, 0.044715
      %v3474 = vmul.f32 %v3410, 0.044715
      %v3475 = vmul.f32 %v3411, 0.044715
      %v3476 = vmul.f32 %v3412, 0.044715
      %v3477 = vmul.f32 %v3413, 0.044715
      %v3478 = vmul.f32 %v3414, 0.044715
      %v3479 = vmul.f32 %v3415, 0.044715
      %v3480 = vmul.f32 %v3416, 0.044715
      %v3481 = vmul.f32 %v3417, 0.044715
      %v3482 = vmul.f32 %v3418, 0.044715
      %v3483 = vmul.f32 %v3419, 0.044715
      %v3484 = vmul.f32 %v3420, 0.044715
      %v3485 = vmul.f32 %v3421, 0.044715
      %v3486 = vmul.f32 %v3422, 0.044715
      %v3487 = vmul.f32 %v3423, 0.044715
      %v3488 = vmul.f32 %v3424, 0.044715
      %v3489 = vmul.f32 %v3425, 0.044715
      %v3490 = vmul.f32 %v3426, 0.044715
      %v3491 = vmul.f32 %v3427, 0.044715
      %v3492 = vmul.f32 %v3428, 0.044715
      %v3493 = vmul.f32 %v3429, 0.044715
      %v3494 = vmul.f32 %v3430, 0.044715
      %v3495 = vmul.f32 %v3431, 0.044715
      %v3496 = vmul.f32 %v3432, 0.044715
      %v3497 = vmul.f32 %v3433, 0.044715
      %v3498 = vmul.f32 %v3434, 0.044715
      %v3499 = vmul.f32 %v3435, 0.044715
      %v3500 = vmul.f32 %v3436, 0.044715
      %v3501 = vmul.f32 %v3437, 0.044715
      %v3502 = vmul.f32 %v3438, 0.044715
      %v3503 = vmul.f32 %v3439, 0.044715
      %v3504 = vmul.f32 %v3440, 0.044715
      %v3505 = vmul.f32 %v3441, 0.044715
      %v3506 = vmul.f32 %v3442, 0.044715
      %v3507 = vmul.f32 %v3443, 0.044715
      %v3508 = vadd.f32 %v3158, %v3444
      %v3509 = vadd.f32 %v3160, %v3445
      %v3510 = vadd.f32 %v3162, %v3446
      %v3511 = vadd.f32 %v3164, %v3447
      %v3512 = vadd.f32 %v3168, %v3448
      %v3513 = vadd.f32 %v3170, %v3449
      %v3514 = vadd.f32 %v3172, %v3450
      %v3515 = vadd.f32 %v3174, %v3451
      %v3516 = vadd.f32 %v3178, %v3452
      %v3517 = vadd.f32 %v3180, %v3453
      %v3518 = vadd.f32 %v3182, %v3454
      %v3519 = vadd.f32 %v3184, %v3455
      %v3520 = vadd.f32 %v3188, %v3456
      %v3521 = vadd.f32 %v3190, %v3457
      %v3522 = vadd.f32 %v3192, %v3458
      %v3523 = vadd.f32 %v3194, %v3459
      %v3524 = vadd.f32 %v3198, %v3460
      %v3525 = vadd.f32 %v3200, %v3461
      %v3526 = vadd.f32 %v3202, %v3462
      %v3527 = vadd.f32 %v3204, %v3463
      %v3528 = vadd.f32 %v3208, %v3464
      %v3529 = vadd.f32 %v3210, %v3465
      %v3530 = vadd.f32 %v3212, %v3466
      %v3531 = vadd.f32 %v3214, %v3467
      %v3532 = vadd.f32 %v3218, %v3468
      %v3533 = vadd.f32 %v3220, %v3469
      %v3534 = vadd.f32 %v3222, %v3470
      %v3535 = vadd.f32 %v3224, %v3471
      %v3536 = vadd.f32 %v3228, %v3472
      %v3537 = vadd.f32 %v3230, %v3473
      %v3538 = vadd.f32 %v3232, %v3474
      %v3539 = vadd.f32 %v3234, %v3475
      %v3540 = vadd.f32 %v3238, %v3476
      %v3541 = vadd.f32 %v3240, %v3477
      %v3542 = vadd.f32 %v3242, %v3478
      %v3543 = vadd.f32 %v3244, %v3479
      %v3544 = vadd.f32 %v3248, %v3480
      %v3545 = vadd.f32 %v3250, %v3481
      %v3546 = vadd.f32 %v3252, %v3482
      %v3547 = vadd.f32 %v3254, %v3483
      %v3548 = vadd.f32 %v3258, %v3484
      %v3549 = vadd.f32 %v3260, %v3485
      %v3550 = vadd.f32 %v3262, %v3486
      %v3551 = vadd.f32 %v3264, %v3487
      %v3552 = vadd.f32 %v3268, %v3488
      %v3553 = vadd.f32 %v3270, %v3489
      %v3554 = vadd.f32 %v3272, %v3490
      %v3555 = vadd.f32 %v3274, %v3491
      %v3556 = vadd.f32 %v3278, %v3492
      %v3557 = vadd.f32 %v3280, %v3493
      %v3558 = vadd.f32 %v3282, %v3494
      %v3559 = vadd.f32 %v3284, %v3495
      %v3560 = vadd.f32 %v3288, %v3496
      %v3561 = vadd.f32 %v3290, %v3497
      %v3562 = vadd.f32 %v3292, %v3498
      %v3563 = vadd.f32 %v3294, %v3499
      %v3564 = vadd.f32 %v3298, %v3500
      %v3565 = vadd.f32 %v3300, %v3501
      %v3566 = vadd.f32 %v3302, %v3502
      %v3567 = vadd.f32 %v3304, %v3503
      %v3568 = vadd.f32 %v3308, %v3504
      %v3569 = vadd.f32 %v3310, %v3505
      %v3570 = vadd.f32 %v3312, %v3506
      %v3571 = vadd.f32 %v3314, %v3507
      %v3572 = vmul.f32 %v3508, 0.7978846
      %v3573 = vmul.f32 %v3509, 0.7978846
      %v3574 = vmul.f32 %v3510, 0.7978846
      %v3575 = vmul.f32 %v3511, 0.7978846
      %v3576 = vmul.f32 %v3512, 0.7978846
      %v3577 = vmul.f32 %v3513, 0.7978846
      %v3578 = vmul.f32 %v3514, 0.7978846
      %v3579 = vmul.f32 %v3515, 0.7978846
      %v3580 = vmul.f32 %v3516, 0.7978846
      %v3581 = vmul.f32 %v3517, 0.7978846
      %v3582 = vmul.f32 %v3518, 0.7978846
      %v3583 = vmul.f32 %v3519, 0.7978846
      %v3584 = vmul.f32 %v3520, 0.7978846
      %v3585 = vmul.f32 %v3521, 0.7978846
      %v3586 = vmul.f32 %v3522, 0.7978846
      %v3587 = vmul.f32 %v3523, 0.7978846
      %v3588 = vmul.f32 %v3524, 0.7978846
      %v3589 = vmul.f32 %v3525, 0.7978846
      %v3590 = vmul.f32 %v3526, 0.7978846
      %v3591 = vmul.f32 %v3527, 0.7978846
      %v3592 = vmul.f32 %v3528, 0.7978846
      %v3593 = vmul.f32 %v3529, 0.7978846
      %v3594 = vmul.f32 %v3530, 0.7978846
      %v3595 = vmul.f32 %v3531, 0.7978846
      %v3596 = vmul.f32 %v3532, 0.7978846
      %v3597 = vmul.f32 %v3533, 0.7978846
      %v3598 = vmul.f32 %v3534, 0.7978846
      %v3599 = vmul.f32 %v3535, 0.7978846
      %v3600 = vmul.f32 %v3536, 0.7978846
      %v3601 = vmul.f32 %v3537, 0.7978846
      %v3602 = vmul.f32 %v3538, 0.7978846
      %v3603 = vmul.f32 %v3539, 0.7978846
      %v3604 = vmul.f32 %v3540, 0.7978846
      %v3605 = vmul.f32 %v3541, 0.7978846
      %v3606 = vmul.f32 %v3542, 0.7978846
      %v3607 = vmul.f32 %v3543, 0.7978846
      %v3608 = vmul.f32 %v3544, 0.7978846
      %v3609 = vmul.f32 %v3545, 0.7978846
      %v3610 = vmul.f32 %v3546, 0.7978846
      %v3611 = vmul.f32 %v3547, 0.7978846
      %v3612 = vmul.f32 %v3548, 0.7978846
      %v3613 = vmul.f32 %v3549, 0.7978846
      %v3614 = vmul.f32 %v3550, 0.7978846
      %v3615 = vmul.f32 %v3551, 0.7978846
      %v3616 = vmul.f32 %v3552, 0.7978846
      %v3617 = vmul.f32 %v3553, 0.7978846
      %v3618 = vmul.f32 %v3554, 0.7978846
      %v3619 = vmul.f32 %v3555, 0.7978846
      %v3620 = vmul.f32 %v3556, 0.7978846
      %v3621 = vmul.f32 %v3557, 0.7978846
      %v3622 = vmul.f32 %v3558, 0.7978846
      %v3623 = vmul.f32 %v3559, 0.7978846
      %v3624 = vmul.f32 %v3560, 0.7978846
      %v3625 = vmul.f32 %v3561, 0.7978846
      %v3626 = vmul.f32 %v3562, 0.7978846
      %v3627 = vmul.f32 %v3563, 0.7978846
      %v3628 = vmul.f32 %v3564, 0.7978846
      %v3629 = vmul.f32 %v3565, 0.7978846
      %v3630 = vmul.f32 %v3566, 0.7978846
      %v3631 = vmul.f32 %v3567, 0.7978846
      %v3632 = vmul.f32 %v3568, 0.7978846
      %v3633 = vmul.f32 %v3569, 0.7978846
      %v3634 = vmul.f32 %v3570, 0.7978846
      %v3635 = vmul.f32 %v3571, 0.7978846
      %v3636 = vtanh.pop %v3572
      %v3637 = vtanh.pop %v3573
      %v3638 = vtanh.pop %v3574
      %v3639 = vtanh.pop %v3575
      %v3640 = vtanh.pop %v3576
      %v3641 = vtanh.pop %v3577
      %v3642 = vtanh.pop %v3578
      %v3643 = vtanh.pop %v3579
      %v3644 = vtanh.pop %v3580
      %v3645 = vtanh.pop %v3581
      %v3646 = vtanh.pop %v3582
      %v3647 = vtanh.pop %v3583
      %v3648 = vtanh.pop %v3584
      %v3649 = vtanh.pop %v3585
      %v3650 = vtanh.pop %v3586
      %v3651 = vtanh.pop %v3587
      %v3652 = vtanh.pop %v3588
      %v3653 = vtanh.pop %v3589
      %v3654 = vtanh.pop %v3590
      %v3655 = vtanh.pop %v3591
      %v3656 = vtanh.pop %v3592
      %v3657 = vtanh.pop %v3593
      %v3658 = vtanh.pop %v3594
      %v3659 = vtanh.pop %v3595
      %v3660 = vtanh.pop %v3596
      %v3661 = vtanh.pop %v3597
      %v3662 = vtanh.pop %v3598
      %v3663 = vtanh.pop %v3599
      %v3664 = vtanh.pop %v3600
      %v3665 = vtanh.pop %v3601
      %v3666 = vtanh.pop %v3602
      %v3667 = vtanh.pop %v3603
      %v3668 = vtanh.pop %v3604
      %v3669 = vtanh.pop %v3605
      %v3670 = vtanh.pop %v3606
      %v3671 = vtanh.pop %v3607
      %v3672 = vtanh.pop %v3608
      %v3673 = vtanh.pop %v3609
      %v3674 = vtanh.pop %v3610
      %v3675 = vtanh.pop %v3611
      %v3676 = vtanh.pop %v3612
      %v3677 = vtanh.pop %v3613
      %v3678 = vtanh.pop %v3614
      %v3679 = vtanh.pop %v3615
      %v3680 = vtanh.pop %v3616
      %v3681 = vtanh.pop %v3617
      %v3682 = vtanh.pop %v3618
      %v3683 = vtanh.pop %v3619
      %v3684 = vtanh.pop %v3620
      %v3685 = vtanh.pop %v3621
      %v3686 = vtanh.pop %v3622
      %v3687 = vtanh.pop %v3623
      %v3688 = vtanh.pop %v3624
      %v3689 = vtanh.pop %v3625
      %v3690 = vtanh.pop %v3626
      %v3691 = vtanh.pop %v3627
      %v3692 = vtanh.pop %v3628
      %v3693 = vtanh.pop %v3629
      %v3694 = vtanh.pop %v3630
      %v3695 = vtanh.pop %v3631
      %v3696 = vtanh.pop %v3632
      %v3697 = vtanh.pop %v3633
      %v3698 = vtanh.pop %v3634
      %v3699 = vtanh.pop %v3635
      %v3700 = vadd.f32 %v3636, 1.0
      %v3701 = vadd.f32 %v3637, 1.0
      %v3702 = vadd.f32 %v3638, 1.0
      %v3703 = vadd.f32 %v3639, 1.0
      %v3704 = vadd.f32 %v3640, 1.0
      %v3705 = vadd.f32 %v3641, 1.0
      %v3706 = vadd.f32 %v3642, 1.0
      %v3707 = vadd.f32 %v3643, 1.0
      %v3708 = vadd.f32 %v3644, 1.0
      %v3709 = vadd.f32 %v3645, 1.0
      %v3710 = vadd.f32 %v3646, 1.0
      %v3711 = vadd.f32 %v3647, 1.0
      %v3712 = vadd.f32 %v3648, 1.0
      %v3713 = vadd.f32 %v3649, 1.0
      %v3714 = vadd.f32 %v3650, 1.0
      %v3715 = vadd.f32 %v3651, 1.0
      %v3716 = vadd.f32 %v3652, 1.0
      %v3717 = vadd.f32 %v3653, 1.0
      %v3718 = vadd.f32 %v3654, 1.0
      %v3719 = vadd.f32 %v3655, 1.0
      %v3720 = vadd.f32 %v3656, 1.0
      %v3721 = vadd.f32 %v3657, 1.0
      %v3722 = vadd.f32 %v3658, 1.0
      %v3723 = vadd.f32 %v3659, 1.0
      %v3724 = vadd.f32 %v3660, 1.0
      %v3725 = vadd.f32 %v3661, 1.0
      %v3726 = vadd.f32 %v3662, 1.0
      %v3727 = vadd.f32 %v3663, 1.0
      %v3728 = vadd.f32 %v3664, 1.0
      %v3729 = vadd.f32 %v3665, 1.0
      %v3730 = vadd.f32 %v3666, 1.0
      %v3731 = vadd.f32 %v3667, 1.0
      %v3732 = vadd.f32 %v3668, 1.0
      %v3733 = vadd.f32 %v3669, 1.0
      %v3734 = vadd.f32 %v3670, 1.0
      %v3735 = vadd.f32 %v3671, 1.0
      %v3736 = vadd.f32 %v3672, 1.0
      %v3737 = vadd.f32 %v3673, 1.0
      %v3738 = vadd.f32 %v3674, 1.0
      %v3739 = vadd.f32 %v3675, 1.0
      %v3740 = vadd.f32 %v3676, 1.0
      %v3741 = vadd.f32 %v3677, 1.0
      %v3742 = vadd.f32 %v3678, 1.0
      %v3743 = vadd.f32 %v3679, 1.0
      %v3744 = vadd.f32 %v3680, 1.0
      %v3745 = vadd.f32 %v3681, 1.0
      %v3746 = vadd.f32 %v3682, 1.0
      %v3747 = vadd.f32 %v3683, 1.0
      %v3748 = vadd.f32 %v3684, 1.0
      %v3749 = vadd.f32 %v3685, 1.0
      %v3750 = vadd.f32 %v3686, 1.0
      %v3751 = vadd.f32 %v3687, 1.0
      %v3752 = vadd.f32 %v3688, 1.0
      %v3753 = vadd.f32 %v3689, 1.0
      %v3754 = vadd.f32 %v3690, 1.0
      %v3755 = vadd.f32 %v3691, 1.0
      %v3756 = vadd.f32 %v3692, 1.0
      %v3757 = vadd.f32 %v3693, 1.0
      %v3758 = vadd.f32 %v3694, 1.0
      %v3759 = vadd.f32 %v3695, 1.0
      %v3760 = vadd.f32 %v3696, 1.0
      %v3761 = vadd.f32 %v3697, 1.0
      %v3762 = vadd.f32 %v3698, 1.0
      %v3763 = vadd.f32 %v3699, 1.0
      %v3764 = vmul.f32 %v3700, 0.5
      %v3765 = vmul.f32 %v3701, 0.5
      %v3766 = vmul.f32 %v3702, 0.5
      %v3767 = vmul.f32 %v3703, 0.5
      %v3768 = vmul.f32 %v3704, 0.5
      %v3769 = vmul.f32 %v3705, 0.5
      %v3770 = vmul.f32 %v3706, 0.5
      %v3771 = vmul.f32 %v3707, 0.5
      %v3772 = vmul.f32 %v3708, 0.5
      %v3773 = vmul.f32 %v3709, 0.5
      %v3774 = vmul.f32 %v3710, 0.5
      %v3775 = vmul.f32 %v3711, 0.5
      %v3776 = vmul.f32 %v3712, 0.5
      %v3777 = vmul.f32 %v3713, 0.5
      %v3778 = vmul.f32 %v3714, 0.5
      %v3779 = vmul.f32 %v3715, 0.5
      %v3780 = vmul.f32 %v3716, 0.5
      %v3781 = vmul.f32 %v3717, 0.5
      %v3782 = vmul.f32 %v3718, 0.5
      %v3783 = vmul.f32 %v3719, 0.5
      %v3784 = vmul.f32 %v3720, 0.5
      %v3785 = vmul.f32 %v3721, 0.5
      %v3786 = vmul.f32 %v3722, 0.5
      %v3787 = vmul.f32 %v3723, 0.5
      %v3788 = vmul.f32 %v3724, 0.5
      %v3789 = vmul.f32 %v3725, 0.5
      %v3790 = vmul.f32 %v3726, 0.5
      %v3791 = vmul.f32 %v3727, 0.5
      %v3792 = vmul.f32 %v3728, 0.5
      %v3793 = vmul.f32 %v3729, 0.5
      %v3794 = vmul.f32 %v3730, 0.5
      %v3795 = vmul.f32 %v3731, 0.5
      %v3796 = vmul.f32 %v3732, 0.5
      %v3797 = vmul.f32 %v3733, 0.5
      %v3798 = vmul.f32 %v3734, 0.5
      %v3799 = vmul.f32 %v3735, 0.5
      %v3800 = vmul.f32 %v3736, 0.5
      %v3801 = vmul.f32 %v3737, 0.5
      %v3802 = vmul.f32 %v3738, 0.5
      %v3803 = vmul.f32 %v3739, 0.5
      %v3804 = vmul.f32 %v3740, 0.5
      %v3805 = vmul.f32 %v3741, 0.5
      %v3806 = vmul.f32 %v3742, 0.5
      %v3807 = vmul.f32 %v3743, 0.5
      %v3808 = vmul.f32 %v3744, 0.5
      %v3809 = vmul.f32 %v3745, 0.5
      %v3810 = vmul.f32 %v3746, 0.5
      %v3811 = vmul.f32 %v3747, 0.5
      %v3812 = vmul.f32 %v3748, 0.5
      %v3813 = vmul.f32 %v3749, 0.5
      %v3814 = vmul.f32 %v3750, 0.5
      %v3815 = vmul.f32 %v3751, 0.5
      %v3816 = vmul.f32 %v3752, 0.5
      %v3817 = vmul.f32 %v3753, 0.5
      %v3818 = vmul.f32 %v3754, 0.5
      %v3819 = vmul.f32 %v3755, 0.5
      %v3820 = vmul.f32 %v3756, 0.5
      %v3821 = vmul.f32 %v3757, 0.5
      %v3822 = vmul.f32 %v3758, 0.5
      %v3823 = vmul.f32 %v3759, 0.5
      %v3824 = vmul.f32 %v3760, 0.5
      %v3825 = vmul.f32 %v3761, 0.5
      %v3826 = vmul.f32 %v3762, 0.5
      %v3827 = vmul.f32 %v3763, 0.5
      %v3828 = vmul.f32 %v3158, %v3764
      %v3829 = vmul.f32 %v3160, %v3765
      %v3830 = vmul.f32 %v3162, %v3766
      %v3831 = vmul.f32 %v3164, %v3767
      %v3832 = vmul.f32 %v3168, %v3768
      %v3833 = vmul.f32 %v3170, %v3769
      %v3834 = vmul.f32 %v3172, %v3770
      %v3835 = vmul.f32 %v3174, %v3771
      %v3836 = vmul.f32 %v3178, %v3772
      %v3837 = vmul.f32 %v3180, %v3773
      %v3838 = vmul.f32 %v3182, %v3774
      %v3839 = vmul.f32 %v3184, %v3775
      %v3840 = vmul.f32 %v3188, %v3776
      %v3841 = vmul.f32 %v3190, %v3777
      %v3842 = vmul.f32 %v3192, %v3778
      %v3843 = vmul.f32 %v3194, %v3779
      %v3844 = vmul.f32 %v3198, %v3780
      %v3845 = vmul.f32 %v3200, %v3781
      %v3846 = vmul.f32 %v3202, %v3782
      %v3847 = vmul.f32 %v3204, %v3783
      %v3848 = vmul.f32 %v3208, %v3784
      %v3849 = vmul.f32 %v3210, %v3785
      %v3850 = vmul.f32 %v3212, %v3786
      %v3851 = vmul.f32 %v3214, %v3787
      %v3852 = vmul.f32 %v3218, %v3788
      %v3853 = vmul.f32 %v3220, %v3789
      %v3854 = vmul.f32 %v3222, %v3790
      %v3855 = vmul.f32 %v3224, %v3791
      %v3856 = vmul.f32 %v3228, %v3792
      %v3857 = vmul.f32 %v3230, %v3793
      %v3858 = vmul.f32 %v3232, %v3794
      %v3859 = vmul.f32 %v3234, %v3795
      %v3860 = vmul.f32 %v3238, %v3796
      %v3861 = vmul.f32 %v3240, %v3797
      %v3862 = vmul.f32 %v3242, %v3798
      %v3863 = vmul.f32 %v3244, %v3799
      %v3864 = vmul.f32 %v3248, %v3800
      %v3865 = vmul.f32 %v3250, %v3801
      %v3866 = vmul.f32 %v3252, %v3802
      %v3867 = vmul.f32 %v3254, %v3803
      %v3868 = vmul.f32 %v3258, %v3804
      %v3869 = vmul.f32 %v3260, %v3805
      %v3870 = vmul.f32 %v3262, %v3806
      %v3871 = vmul.f32 %v3264, %v3807
      %v3872 = vmul.f32 %v3268, %v3808
      %v3873 = vmul.f32 %v3270, %v3809
      %v3874 = vmul.f32 %v3272, %v3810
      %v3875 = vmul.f32 %v3274, %v3811
      %v3876 = vmul.f32 %v3278, %v3812
      %v3877 = vmul.f32 %v3280, %v3813
      %v3878 = vmul.f32 %v3282, %v3814
      %v3879 = vmul.f32 %v3284, %v3815
      %v3880 = vmul.f32 %v3288, %v3816
      %v3881 = vmul.f32 %v3290, %v3817
      %v3882 = vmul.f32 %v3292, %v3818
      %v3883 = vmul.f32 %v3294, %v3819
      %v3884 = vmul.f32 %v3298, %v3820
      %v3885 = vmul.f32 %v3300, %v3821
      %v3886 = vmul.f32 %v3302, %v3822
      %v3887 = vmul.f32 %v3304, %v3823
      %v3888 = vmul.f32 %v3308, %v3824
      %v3889 = vmul.f32 %v3310, %v3825
      %v3890 = vmul.f32 %v3312, %v3826
      %v3891 = vmul.f32 %v3314, %v3827
      %v3892 = vpack.c.bf16 %v3830, %v3828
      %v3893 = vpack.c.bf16 %v3831, %v3829
      %v3894 = vpack.c.bf16 %v3834, %v3832
      %v3895 = vpack.c.bf16 %v3835, %v3833
      %v3896 = vpack.c.bf16 %v3838, %v3836
      %v3897 = vpack.c.bf16 %v3839, %v3837
      %v3898 = vpack.c.bf16 %v3842, %v3840
      %v3899 = vpack.c.bf16 %v3843, %v3841
      %v3900 = vpack.c.bf16 %v3846, %v3844
      %v3901 = vpack.c.bf16 %v3847, %v3845
      %v3902 = vpack.c.bf16 %v3850, %v3848
      %v3903 = vpack.c.bf16 %v3851, %v3849
      %v3904 = vpack.c.bf16 %v3854, %v3852
      %v3905 = vpack.c.bf16 %v3855, %v3853
      %v3906 = vpack.c.bf16 %v3858, %v3856
      %v3907 = vpack.c.bf16 %v3859, %v3857
      %v3908 = vpack.c.bf16 %v3862, %v3860
      %v3909 = vpack.c.bf16 %v3863, %v3861
      %v3910 = vpack.c.bf16 %v3866, %v3864
      %v3911 = vpack.c.bf16 %v3867, %v3865
      %v3912 = vpack.c.bf16 %v3870, %v3868
      %v3913 = vpack.c.bf16 %v3871, %v3869
      %v3914 = vpack.c.bf16 %v3874, %v3872
      %v3915 = vpack.c.bf16 %v3875, %v3873
      %v3916 = vpack.c.bf16 %v3878, %v3876
      %v3917 = vpack.c.bf16 %v3879, %v3877
      %v3918 = vpack.c.bf16 %v3882, %v3880
      %v3919 = vpack.c.bf16 %v3883, %v3881
      %v3920 = vpack.c.bf16 %v3886, %v3884
      %v3921 = vpack.c.bf16 %v3887, %v3885
      %v3922 = vpack.c.bf16 %v3890, %v3888
      %v3923 = vpack.c.bf16 %v3891, %v3889
      %v3924 = vld [vmem:[%s11] sm:$0xf]
      %v3925 = vld [vmem:[%s11 + $0x4] sm:$0xf]
      %v3926 = vld [vmem:[%s11 + $0x8] sm:$0xf]
      %v3927 = vld [vmem:[%s11 + $0xc] sm:$0xf]
      %v3928 = vld [vmem:[%s11 + $0x10] sm:$0xf]
      %v3929 = vld [vmem:[%s11 + $0x14] sm:$0xf]
      %v3930 = vld [vmem:[%s11 + $0x18] sm:$0xf]
      %v3931 = vld [vmem:[%s11 + $0x1c] sm:$0xf]
      %v3932 = vld [vmem:[%s11 + $0x20] sm:$0xf]
      %v3933 = vld [vmem:[%s11 + $0x24] sm:$0xf]
      %v3934 = vld [vmem:[%s11 + $0x28] sm:$0xf]
      %v3935 = vld [vmem:[%s11 + $0x2c] sm:$0xf]
      %v3936 = vld [vmem:[%s11 + $0x30] sm:$0xf]
      %v3937 = vld [vmem:[%s11 + $0x34] sm:$0xf]
      %v3938 = vld [vmem:[%s11 + $0x38] sm:$0xf]
      %v3939 = vld [vmem:[%s11 + $0x3c] sm:$0xf]
      %v3940 = vld [vmem:[%s11 + $0x40] sm:$0xf]
      %v3941 = vld [vmem:[%s11 + $0x44] sm:$0xf]
      %v3942 = vld [vmem:[%s11 + $0x48] sm:$0xf]
      %v3943 = vld [vmem:[%s11 + $0x4c] sm:$0xf]
      %v3944 = vld [vmem:[%s11 + $0x50] sm:$0xf]
      %v3945 = vld [vmem:[%s11 + $0x54] sm:$0xf]
      %v3946 = vld [vmem:[%s11 + $0x58] sm:$0xf]
      %v3947 = vld [vmem:[%s11 + $0x5c] sm:$0xf]
      %v3948 = vld [vmem:[%s11 + $0x60] sm:$0xf]
      %v3949 = vld [vmem:[%s11 + $0x64] sm:$0xf]
      %v3950 = vld [vmem:[%s11 + $0x68] sm:$0xf]
      %v3951 = vld [vmem:[%s11 + $0x6c] sm:$0xf]
      %v3952 = vld [vmem:[%s11 + $0x70] sm:$0xf]
      %v3953 = vld [vmem:[%s11 + $0x74] sm:$0xf]
      %v3954 = vld [vmem:[%s11 + $0x78] sm:$0xf]
      %v3955 = vld [vmem:[%s11 + $0x7c] sm:$0xf]
      %v3956 = vld [vmem:[%s12] sm:$0x1]
      %v3958 = vlaneseq
      %v3959 = vshrl.u32 %v3958, 7
      %v3960 = vsub.s32 0, %v3959
      %v3961 = vrot.slane %v3956, %v3960
      %v3995 = vunpack.c.l.b16 %v3924
      %v3996 = vunpack.c.l.b16 %v3925
      %v3997 = vunpack.c.l.b16 %v3926
      %v3998 = vunpack.c.l.b16 %v3927
      %v3999 = vunpack.c.l.b16 %v3928
      %v4000 = vunpack.c.l.b16 %v3929
      %v4001 = vunpack.c.l.b16 %v3930
      %v4002 = vunpack.c.l.b16 %v3931
      %v4003 = vunpack.c.l.b16 %v3932
      %v4004 = vunpack.c.l.b16 %v3933
      %v4005 = vunpack.c.l.b16 %v3934
      %v4006 = vunpack.c.l.b16 %v3935
      %v4007 = vunpack.c.l.b16 %v3936
      %v4008 = vunpack.c.l.b16 %v3937
      %v4009 = vunpack.c.l.b16 %v3938
      %v4010 = vunpack.c.l.b16 %v3939
      %v4011 = vunpack.c.l.b16 %v3940
      %v4012 = vunpack.c.l.b16 %v3941
      %v4013 = vunpack.c.l.b16 %v3942
      %v4014 = vunpack.c.l.b16 %v3943
      %v4015 = vunpack.c.l.b16 %v3944
      %v4016 = vunpack.c.l.b16 %v3945
      %v4017 = vunpack.c.l.b16 %v3946
      %v4018 = vunpack.c.l.b16 %v3947
      %v4019 = vunpack.c.l.b16 %v3948
      %v4020 = vunpack.c.l.b16 %v3949
      %v4021 = vunpack.c.l.b16 %v3950
      %v4022 = vunpack.c.l.b16 %v3951
      %v4023 = vunpack.c.l.b16 %v3952
      %v4024 = vunpack.c.l.b16 %v3953
      %v4025 = vunpack.c.l.b16 %v3954
      %v4026 = vunpack.c.l.b16 %v3955
      %v4027 = vpack.c.b16 %v3996, %v3995
      %v4028 = vpack.c.b16 %v3998, %v3997
      %v4029 = vpack.c.b16 %v4000, %v3999
      %v4030 = vpack.c.b16 %v4002, %v4001
      %v4031 = vpack.c.b16 %v4004, %v4003
      %v4032 = vpack.c.b16 %v4006, %v4005
      %v4033 = vpack.c.b16 %v4008, %v4007
      %v4034 = vpack.c.b16 %v4010, %v4009
      %v4035 = vpack.c.b16 %v4012, %v4011
      %v4036 = vpack.c.b16 %v4014, %v4013
      %v4037 = vpack.c.b16 %v4016, %v4015
      %v4038 = vpack.c.b16 %v4018, %v4017
      %v4039 = vpack.c.b16 %v4020, %v4019
      %v4040 = vpack.c.b16 %v4022, %v4021
      %v4041 = vpack.c.b16 %v4024, %v4023
      %v4042 = vpack.c.b16 %v4026, %v4025
      %4059 = vmatprep.subr.bf16.mxu0 0
      %4060 = vmatpush1.bf16.msra.mxu0 %v4027
      %4061 = vmatprep.subr.bf16.mxu0 0
      %4062 = vmatpush1.bf16.msra.mxu0 %v4028
      %4063 = vmatprep.subr.bf16.mxu0 0
      %4064 = vmatpush1.bf16.msra.mxu0 %v4029
      %4065 = vmatprep.subr.bf16.mxu0 0
      %4066 = vmatpush1.bf16.msra.mxu0 %v4030
      %4067 = vmatprep.subr.bf16.mxu0 0
      %4068 = vmatpush1.bf16.msra.mxu0 %v4031
      %4069 = vmatprep.subr.bf16.mxu0 0
      %4070 = vmatpush1.bf16.msra.mxu0 %v4032
      %4071 = vmatprep.subr.bf16.mxu0 0
      %4072 = vmatpush1.bf16.msra.mxu0 %v4033
      %4073 = vmatprep.subr.bf16.mxu0 0
      %4074 = vmatpush1.bf16.msra.mxu0 %v4034
      %4075 = vmatprep.subr.bf16.mxu0 0
      %4076 = vmatpush1.bf16.msra.mxu0 %v4035
      %4077 = vmatprep.subr.bf16.mxu0 0
      %4078 = vmatpush1.bf16.msra.mxu0 %v4036
      %4079 = vmatprep.subr.bf16.mxu0 0
      %4080 = vmatpush1.bf16.msra.mxu0 %v4037
      %4081 = vmatprep.subr.bf16.mxu0 0
      %4082 = vmatpush1.bf16.msra.mxu0 %v4038
      %4083 = vmatprep.subr.bf16.mxu0 0
      %4084 = vmatpush1.bf16.msra.mxu0 %v4039
      %4085 = vmatprep.subr.bf16.mxu0 0
      %4086 = vmatpush1.bf16.msra.mxu0 %v4040
      %4087 = vmatprep.subr.bf16.mxu0 0
      %4088 = vmatpush1.bf16.msra.mxu0 %v4041
      %4089 = vmatprep.subr.bf16.mxu0 0
      %4090 = vmatpush1.bf16.msra.mxu0 %v4042
      %4091 = vmatprep.mubr.bf16.mxu0 %v3893
      %4092 = vmatmul.mubr.bf16.gmra.mrb[0].mxu0 %v3892
      %v4093 = vpop.f32.mrb[0].mxu0
      %v4094 = vadd.f32 %v3961, %v4093
      %v4095 = vpop.f32.mrb[0].mxu0
      %v4096 = vpop.f32.mrb[0].mxu0
      %v4097 = vadd.f32 %v3961, %v4096
      %v4098 = vpop.f32.mrb[0].mxu0
      %4099 = vmatprep.mubr.bf16.mxu0 %v3895
      %4100 = vmatmul.mubr.bf16.gmra.mrb[0].mxu0 %v3894
      %v4101 = vpop.f32.mrb[0].mxu0
      %v4102 = vadd.f32 %v3961, %v4101
      %v4103 = vpop.f32.mrb[0].mxu0
      %v4104 = vpop.f32.mrb[0].mxu0
      %v4105 = vadd.f32 %v3961, %v4104
      %v4106 = vpop.f32.mrb[0].mxu0
      %4107 = vmatprep.mubr.bf16.mxu0 %v3897
      %4108 = vmatmul.mubr.bf16.gmra.mrb[0].mxu0 %v3896
      %v4109 = vpop.f32.mrb[0].mxu0
      %v4110 = vadd.f32 %v3961, %v4109
      %v4111 = vpop.f32.mrb[0].mxu0
      %v4112 = vpop.f32.mrb[0].mxu0
      %v4113 = vadd.f32 %v3961, %v4112
      %v4114 = vpop.f32.mrb[0].mxu0
      %4115 = vmatprep.mubr.bf16.mxu0 %v3899
      %4116 = vmatmul.mubr.bf16.gmra.mrb[0].mxu0 %v3898
      %v4117 = vpop.f32.mrb[0].mxu0
      %v4118 = vadd.f32 %v3961, %v4117
      %v4119 = vpop.f32.mrb[0].mxu0
      %v4120 = vpop.f32.mrb[0].mxu0
      %v4121 = vadd.f32 %v3961, %v4120
      %v4122 = vpop.f32.mrb[0].mxu0
      %4123 = vmatprep.mubr.bf16.mxu0 %v3901
      %4124 = vmatmul.mubr.bf16.gmra.mrb[0].mxu0 %v3900
      %v4125 = vpop.f32.mrb[0].mxu0
      %v4126 = vadd.f32 %v3961, %v4125
      %v4127 = vpop.f32.mrb[0].mxu0
      %v4128 = vpop.f32.mrb[0].mxu0
      %v4129 = vadd.f32 %v3961, %v4128
      %v4130 = vpop.f32.mrb[0].mxu0
      %4131 = vmatprep.mubr.bf16.mxu0 %v3903
      %4132 = vmatmul.mubr.bf16.gmra.mrb[0].mxu0 %v3902
      %v4133 = vpop.f32.mrb[0].mxu0
      %v4134 = vadd.f32 %v3961, %v4133
      %v4135 = vpop.f32.mrb[0].mxu0
      %v4136 = vpop.f32.mrb[0].mxu0
      %v4137 = vadd.f32 %v3961, %v4136
      %v4138 = vpop.f32.mrb[0].mxu0
      %4139 = vmatprep.mubr.bf16.mxu0 %v3905
      %4140 = vmatmul.mubr.bf16.gmra.mrb[0].mxu0 %v3904
      %v4141 = vpop.f32.mrb[0].mxu0
      %v4142 = vadd.f32 %v3961, %v4141
      %v4143 = vpop.f32.mrb[0].mxu0
      %v4144 = vpop.f32.mrb[0].mxu0
      %v4145 = vadd.f32 %v3961, %v4144
      %v4146 = vpop.f32.mrb[0].mxu0
      %4147 = vmatprep.mubr.bf16.mxu0 %v3907
      %4148 = vmatmul.mubr.bf16.gmra.mrb[0].mxu0 %v3906
      %v4149 = vpop.f32.mrb[0].mxu0
      %v4150 = vadd.f32 %v3961, %v4149
      %v4151 = vpop.f32.mrb[0].mxu0
      %v4152 = vpop.f32.mrb[0].mxu0
      %v4153 = vadd.f32 %v3961, %v4152
      %v4154 = vpop.f32.mrb[0].mxu0
      %4155 = vmatprep.mubr.bf16.mxu0 %v3909
      %4156 = vmatmul.mubr.bf16.gmra.mrb[0].mxu0 %v3908
      %v4157 = vpop.f32.mrb[0].mxu0
      %v4158 = vadd.f32 %v3961, %v4157
      %v4159 = vpop.f32.mrb[0].mxu0
      %v4160 = vpop.f32.mrb[0].mxu0
      %v4161 = vadd.f32 %v3961, %v4160
      %v4162 = vpop.f32.mrb[0].mxu0
      %4163 = vmatprep.mubr.bf16.mxu0 %v3911
      %4164 = vmatmul.mubr.bf16.gmra.mrb[0].mxu0 %v3910
      %v4165 = vpop.f32.mrb[0].mxu0
      %v4166 = vadd.f32 %v3961, %v4165
      %v4167 = vpop.f32.mrb[0].mxu0
      %v4168 = vpop.f32.mrb[0].mxu0
      %v4169 = vadd.f32 %v3961, %v4168
      %v4170 = vpop.f32.mrb[0].mxu0
      %4171 = vmatprep.mubr.bf16.mxu0 %v3913
      %4172 = vmatmul.mubr.bf16.gmra.mrb[0].mxu0 %v3912
      %v4173 = vpop.f32.mrb[0].mxu0
      %v4174 = vadd.f32 %v3961, %v4173
      %v4175 = vpop.f32.mrb[0].mxu0
      %v4176 = vpop.f32.mrb[0].mxu0
      %v4177 = vadd.f32 %v3961, %v4176
      %v4178 = vpop.f32.mrb[0].mxu0
      %4179 = vmatprep.mubr.bf16.mxu0 %v3915
      %4180 = vmatmul.mubr.bf16.gmra.mrb[0].mxu0 %v3914
      %v4181 = vpop.f32.mrb[0].mxu0
      %v4182 = vadd.f32 %v3961, %v4181
      %v4183 = vpop.f32.mrb[0].mxu0
      %v4184 = vpop.f32.mrb[0].mxu0
      %v4185 = vadd.f32 %v3961, %v4184
      %v4186 = vpop.f32.mrb[0].mxu0
      %4187 = vmatprep.mubr.bf16.mxu0 %v3917
      %4188 = vmatmul.mubr.bf16.gmra.mrb[0].mxu0 %v3916
      %v4189 = vpop.f32.mrb[0].mxu0
      %v4190 = vadd.f32 %v3961, %v4189
      %v4191 = vpop.f32.mrb[0].mxu0
      %v4192 = vpop.f32.mrb[0].mxu0
      %v4193 = vadd.f32 %v3961, %v4192
      %v4194 = vpop.f32.mrb[0].mxu0
      %4195 = vmatprep.mubr.bf16.mxu0 %v3919
      %4196 = vmatmul.mubr.bf16.gmra.mrb[0].mxu0 %v3918
      %v4197 = vpop.f32.mrb[0].mxu0
      %v4198 = vadd.f32 %v3961, %v4197
      %v4199 = vpop.f32.mrb[0].mxu0
      %v4200 = vpop.f32.mrb[0].mxu0
      %v4201 = vadd.f32 %v3961, %v4200
      %v4202 = vpop.f32.mrb[0].mxu0
      %4203 = vmatprep.mubr.bf16.mxu0 %v3921
      %4204 = vmatmul.mubr.bf16.gmra.mrb[0].mxu0 %v3920
      %v4205 = vpop.f32.mrb[0].mxu0
      %v4206 = vadd.f32 %v3961, %v4205
      %v4207 = vpop.f32.mrb[0].mxu0
      %v4208 = vpop.f32.mrb[0].mxu0
      %v4209 = vadd.f32 %v3961, %v4208
      %v4210 = vpop.f32.mrb[0].mxu0
      %4211 = vmatprep.mubr.bf16.mxu0 %v3923
      %4212 = vmatmul.mubr.bf16.gmra.mrb[0].mxu0 %v3922
      %v4213 = vpop.f32.mrb[0].mxu0
      %v4214 = vadd.f32 %v3961, %v4213
      %v4215 = vpop.f32.mrb[0].mxu0
      %v4216 = vpop.f32.mrb[0].mxu0
      %v4217 = vadd.f32 %v3961, %v4216
      %v4218 = vpop.f32.mrb[0].mxu0
      %4219 = vdwg.mxu0
      %v4220 = vpack.c.bf16 %v4097, %v4094
      %v4221 = vpack.c.bf16 %v4105, %v4102
      %v4222 = vpack.c.bf16 %v4113, %v4110
      %v4223 = vpack.c.bf16 %v4121, %v4118
      %v4224 = vpack.c.bf16 %v4129, %v4126
      %v4225 = vpack.c.bf16 %v4137, %v4134
      %v4226 = vpack.c.bf16 %v4145, %v4142
      %v4227 = vpack.c.bf16 %v4153, %v4150
      %v4228 = vpack.c.bf16 %v4161, %v4158
      %v4229 = vpack.c.bf16 %v4169, %v4166
      %v4230 = vpack.c.bf16 %v4177, %v4174
      %v4231 = vpack.c.bf16 %v4185, %v4182
      %v4232 = vpack.c.bf16 %v4193, %v4190
      %v4233 = vpack.c.bf16 %v4201, %v4198
      %v4234 = vpack.c.bf16 %v4209, %v4206
      %v4235 = vpack.c.bf16 %v4217, %v4214
      %v4252 = vunpack.c.l.b16 %v4220
      %v4253 = vunpack.c.h.b16 %v4220
      %v4254 = vunpack.c.l.b16 %v4221
      %v4255 = vunpack.c.h.b16 %v4221
      %v4256 = vunpack.c.l.b16 %v4222
      %v4257 = vunpack.c.h.b16 %v4222
      %v4258 = vunpack.c.l.b16 %v4223
      %v4259 = vunpack.c.h.b16 %v4223
      %v4260 = vunpack.c.l.b16 %v4224
      %v4261 = vunpack.c.h.b16 %v4224
      %v4262 = vunpack.c.l.b16 %v4225
      %v4263 = vunpack.c.h.b16 %v4225
      %v4264 = vunpack.c.l.b16 %v4226
      %v4265 = vunpack.c.h.b16 %v4226
      %v4266 = vunpack.c.l.b16 %v4227
      %v4267 = vunpack.c.h.b16 %v4227
      %v4268 = vunpack.c.l.b16 %v4228
      %v4269 = vunpack.c.h.b16 %v4228
      %v4270 = vunpack.c.l.b16 %v4229
      %v4271 = vunpack.c.h.b16 %v4229
      %v4272 = vunpack.c.l.b16 %v4230
      %v4273 = vunpack.c.h.b16 %v4230
      %v4274 = vunpack.c.l.b16 %v4231
      %v4275 = vunpack.c.h.b16 %v4231
      %v4276 = vunpack.c.l.b16 %v4232
      %v4277 = vunpack.c.h.b16 %v4232
      %v4278 = vunpack.c.l.b16 %v4233
      %v4279 = vunpack.c.h.b16 %v4233
      %v4280 = vunpack.c.l.b16 %v4234
      %v4281 = vunpack.c.h.b16 %v4234
      %v4282 = vunpack.c.l.b16 %v4235
      %v4283 = vunpack.c.h.b16 %v4235
      %v4284 = vpack.c.b16 %v4252, %v4252
      %v4285 = vpack.c.b16 %v4253, %v4253
      %v4286 = vpack.c.b16 %v4254, %v4254
      %v4287 = vpack.c.b16 %v4255, %v4255
      %v4288 = vpack.c.b16 %v4256, %v4256
      %v4289 = vpack.c.b16 %v4257, %v4257
      %v4290 = vpack.c.b16 %v4258, %v4258
      %v4291 = vpack.c.b16 %v4259, %v4259
      %v4292 = vpack.c.b16 %v4260, %v4260
      %v4293 = vpack.c.b16 %v4261, %v4261
      %v4294 = vpack.c.b16 %v4262, %v4262
      %v4295 = vpack.c.b16 %v4263, %v4263
      %v4296 = vpack.c.b16 %v4264, %v4264
      %v4297 = vpack.c.b16 %v4265, %v4265
      %v4298 = vpack.c.b16 %v4266, %v4266
      %v4299 = vpack.c.b16 %v4267, %v4267
      %v4300 = vpack.c.b16 %v4268, %v4268
      %v4301 = vpack.c.b16 %v4269, %v4269
      %v4302 = vpack.c.b16 %v4270, %v4270
      %v4303 = vpack.c.b16 %v4271, %v4271
      %v4304 = vpack.c.b16 %v4272, %v4272
      %v4305 = vpack.c.b16 %v4273, %v4273
      %v4306 = vpack.c.b16 %v4274, %v4274
      %v4307 = vpack.c.b16 %v4275, %v4275
      %v4308 = vpack.c.b16 %v4276, %v4276
      %v4309 = vpack.c.b16 %v4277, %v4277
      %v4310 = vpack.c.b16 %v4278, %v4278
      %v4311 = vpack.c.b16 %v4279, %v4279
      %v4312 = vpack.c.b16 %v4280, %v4280
      %v4313 = vpack.c.b16 %v4281, %v4281
      %v4314 = vpack.c.b16 %v4282, %v4282
      %v4315 = vpack.c.b16 %v4283, %v4283
      %4348 = vst [vmem:[%s442] sm:$0xf] %v4284
      %4349 = vst [vmem:[%s442 + $0x4] sm:$0xf] %v4285
      %4350 = vst [vmem:[%s442 + $0x8] sm:$0xf] %v4286
      %4351 = vst [vmem:[%s442 + $0xc] sm:$0xf] %v4287
      %4352 = vst [vmem:[%s442 + $0x10] sm:$0xf] %v4288
      %4353 = vst [vmem:[%s442 + $0x14] sm:$0xf] %v4289
      %4354 = vst [vmem:[%s442 + $0x18] sm:$0xf] %v4290
      %4355 = vst [vmem:[%s442 + $0x1c] sm:$0xf] %v4291
      %4356 = vst [vmem:[%s442 + $0x20] sm:$0xf] %v4292
      %4357 = vst [vmem:[%s442 + $0x24] sm:$0xf] %v4293
      %4358 = vst [vmem:[%s442 + $0x28] sm:$0xf] %v4294
      %4359 = vst [vmem:[%s442 + $0x2c] sm:$0xf] %v4295
      %4360 = vst [vmem:[%s442 + $0x30] sm:$0xf] %v4296
      %4361 = vst [vmem:[%s442 + $0x34] sm:$0xf] %v4297
      %4362 = vst [vmem:[%s442 + $0x38] sm:$0xf] %v4298
      %4363 = vst [vmem:[%s442 + $0x3c] sm:$0xf] %v4299
      %4364 = vst [vmem:[%s442 + $0x40] sm:$0xf] %v4300
      %4365 = vst [vmem:[%s442 + $0x44] sm:$0xf] %v4301
      %4366 = vst [vmem:[%s442 + $0x48] sm:$0xf] %v4302
      %4367 = vst [vmem:[%s442 + $0x4c] sm:$0xf] %v4303
      %4368 = vst [vmem:[%s442 + $0x50] sm:$0xf] %v4304
      %4369 = vst [vmem:[%s442 + $0x54] sm:$0xf] %v4305
      %4370 = vst [vmem:[%s442 + $0x58] sm:$0xf] %v4306
      %4371 = vst [vmem:[%s442 + $0x5c] sm:$0xf] %v4307
      %4372 = vst [vmem:[%s442 + $0x60] sm:$0xf] %v4308
      %4373 = vst [vmem:[%s442 + $0x64] sm:$0xf] %v4309
      %4374 = vst [vmem:[%s442 + $0x68] sm:$0xf] %v4310
      %4375 = vst [vmem:[%s442 + $0x6c] sm:$0xf] %v4311
      %4376 = vst [vmem:[%s442 + $0x70] sm:$0xf] %v4312
      %4377 = vst [vmem:[%s442 + $0x74] sm:$0xf] %v4313
      %4378 = vst [vmem:[%s442 + $0x78] sm:$0xf] %v4314
      %4379 = vst [vmem:[%s442 + $0x7c] sm:$0xf] %v4315
      %s4380 = smul.u32 32, %s24
      %p4381 = scmp.lt.s32.totalorder %s4380, 63
      %s4382 = scalar_select %p4381, %s4380, 63
      %s4383 = smul.addr %s4382, 4
      %s4384 = scalar_lea.vmem %s13, %s4383
      // Predicated region
      $region73: #{trainer_model_forward.2} parent=71 // pred_check
        %p4385 = pneg %p320
      $region74: #{trainer_model_forward.2} parent=71 // pred_check_branch
        %4387 = sbr.rel (%p4385) target = $region76
      $region75: #{trainer_model_forward.2} parent=71 // pred_region
        %s4388 = smul.u32 32, %s24
      $region76: #{trainer_model_forward.2} parent=71 // pred_fallthru
        _
    $region72: #{trainer_model_forward.2} parent=5 // pred_fallthru
      _
    %p4389 = scmp.le.s32.totalorder 2, %s19
    // Predicated region
    $region77: #{trainer_model_forward.2} parent=5 // pred_check
      %p4390 = pneg %p4389
    $region78: #{trainer_model_forward.2} parent=5 // pred_check_branch
      %4392 = sbr.rel (%p4390) target = $region80
    $region79: #{trainer_model_forward.2} parent=5 // pred_region
      %s4393 = ssub.s32 %s19, 2
      // Predicated region
      $region81: #{trainer_model_forward.2} parent=79 // pred_check
        %p4394 = pneg %p326
      $region82: #{trainer_model_forward.2} parent=79 // pred_check_branch
        %4396 = sbr.rel (%p4394) target = $region84
      $region83: #{trainer_model_forward.2} parent=79 // pred_region
        %s4397 = smul.u32 32, %s25
        %p4398 = scmp.lt.s32.totalorder %s4397, 63
        %s4399 = scalar_select %p4398, %s4397, 63
        %s4400 = smul.addr %s4399, 4
        %s4401 = scalar_lea.vmem %s13, %s4400
      $region84: #{trainer_model_forward.2} parent=79 // pred_fallthru
        _
    $region80: #{trainer_model_forward.2} parent=5 // pred_fallthru
      _
  $region6: #{trainer_model_forward.2} parent=0 // loop_footer
    %s23 = sadd.s32 1, %s19
  $region7: #{trainer_model_forward.2} parent=0 // loop_footer_branch
    %18 = sbr.rel target = $region3
  $region8: #{trainer_model_forward.2} parent=0 // loop_exit
    _

</llo_original>
